<compile_context>
chip_gen: v7x
topology: tpu7x:2x2x1
jax: 0.10.0
libtpu: 0.0.40
codegen_flags: <defaults>
</compile_context>

<pallas_src>
import functools

import jax
import jax.numpy as jnp
import numpy as np
from jax.experimental import pallas as pl
from jax.experimental.pallas import tpu as pltpu


def _attn_kernel(x_ref, pw_ref, ph_ref, uw_ref, w1_ref, b1_ref, w2_ref, b2_ref,
                 o_ref, *, stride):
    M, H, W = x_ref.shape            # M = block_n * C  (batch folded into rows)
    wp = pw_ref.shape[1]
    hp = ph_ref.shape[1]

    xf = x_ref[...].astype(jnp.float32)                       # (M, H, W)

    # ---- local average pool (count_include_pad=False), separable: W then H ----
    a = jnp.dot(xf.reshape(M * H, W), pw_ref[...],
                preferred_element_type=jnp.float32)            # (M*H, wp)  MXU
    a = a.reshape(M, H, wp)
    ph = ph_ref[...]                                           # (H, hp), 1/count_h
    cols = []
    for q in range(hp):                                        # hp is small & static
        cols.append(jnp.sum(a * ph[:, q:q + 1], axis=1))       # (M, wp) sublane reduce
    pooled = jnp.concatenate(cols, axis=-1)                    # (M, hp*wp), q-major lanes

    # ---- squeeze-excite MLP (1x1 convs), block-diagonal over the folded batch ----
    hid = jnp.dot(w1_ref[...], pooled,
                  preferred_element_type=jnp.float32) + b1_ref[...]   # (B*hidden, P)
    hid = jnp.maximum(hid, 0.0)
    gate = jnp.dot(w2_ref[...], hid,
                   preferred_element_type=jnp.float32) + b2_ref[...]  # (M, P)
    gate = jax.nn.sigmoid(gate)

    # ---- nearest upsample (+ implicit crop) and gating, one row block per q ----
    uw = uw_ref[...]                                            # (wp, W) one-hot
    for q in range(hp):
        h0 = q * stride
        h1 = min(H, (q + 1) * stride)                           # crop on last block
        gw = jnp.dot(gate[:, q * wp:(q + 1) * wp], uw,
                     preferred_element_type=jnp.float32)        # (M, W)  MXU
        o_ref[:, h0:h1, :] = (xf[:, h0:h1, :] * gw[:, None, :]).astype(o_ref.dtype)


def _make_separable_factors(H, W, stride):
    """Per-axis factors of AvgPool2d(2s-1, stride=s, padding=s-1,
    count_include_pad=False) and of the cropped nearest x{s} upsample.
    The clipped window is a rectangle, so count = count_h * count_w and the
    2-D average factorizes exactly into the two 1-D weighted sums."""
    pad = stride - 1
    ksize = 2 * stride - 1

    def pool_factor(n):
        n_out = (n + 2 * pad - ksize) // stride + 1             # == ceil(n / stride)
        f = np.zeros((n, n_out), dtype=np.float32)
        for p in range(n_out):
            lo = max(0, p * stride - pad)
            hi = min(n, p * stride - pad + ksize)
            f[lo:hi, p] = 1.0 / float(hi - lo)
        return f, n_out

    Pw, wp = pool_factor(W)
    Ph, hp = pool_factor(H)
    Uw = np.zeros((wp, W), dtype=np.float32)                    # nearest upsample along W
    for w in range(W):
        Uw[w // stride, w] = 1.0
    return Pw, Ph, Uw, hp, wp


def attention_block(x, w1, b1, w2, b2, *, stride=16, block_n=None):
    """x: (N, C, H, W); w1: (C//r, C, 1, 1); b1: (C//r,); w2: (C, C//r, 1, 1); b2: (C,)."""
    N, C, H, W = x.shape
    hidden = w1.shape[0]
    if block_n is None:
        block_n = min(N, 8)
    assert N % block_n == 0, "block_n must divide the batch size"
    B = block_n
    Mrows = B * C

    Pw_np, Ph_np, Uw_np, hp, wp = _make_separable_factors(H, W, stride)
    Pw = jnp.asarray(Pw_np)
    Ph = jnp.asarray(Ph_np)
    Uw = jnp.asarray(Uw_np)

    # SE-MLP weights, expanded block-diagonally over the folded batch so the
    # in-kernel MLP is two plain 2D matmuls on (B*C)-row tensors.
    w1m = w1.reshape(hidden, C)
    w2m = w2.reshape(C, hidden)
    eye_b = jnp.eye(B, dtype=w1m.dtype)
    w1bd = jnp.kron(eye_b, w1m)                                 # (B*hidden, B*C)
    w2bd = jnp.kron(eye_b, w2m)                                 # (B*C, B*hidden)
    b1t = jnp.tile(b1.reshape(hidden, 1), (B, 1))               # (B*hidden, 1)
    b2t = jnp.tile(b2.reshape(C, 1), (B, 1))                    # (B*C, 1)

    # Leading-dim merge only -> no HBM relayout (unlike flattening H*W).
    x3 = x.reshape(N * C, H, W)

    resident = dict(pipeline_mode=pl.Buffered(1))               # fetched once, kept resident
    out3 = pl.pallas_call(
        functools.partial(_attn_kernel, stride=stride),
        out_shape=jax.ShapeDtypeStruct((N * C, H, W), x.dtype),
        grid=(N // B,),
        in_specs=[
            pl.BlockSpec((Mrows, H, W), lambda i: (i, 0, 0)),                    # x block
            pl.BlockSpec((W, wp), lambda i: (0, 0), **resident),                 # Pw
            pl.BlockSpec((H, hp), lambda i: (0, 0), **resident),                 # Ph
            pl.BlockSpec((wp, W), lambda i: (0, 0), **resident),                 # Uw
            pl.BlockSpec((B * hidden, B * C), lambda i: (0, 0), **resident),     # W1 (blk-diag)
            pl.BlockSpec((B * hidden, 1), lambda i: (0, 0), **resident),         # b1
            pl.BlockSpec((B * C, B * hidden), lambda i: (0, 0), **resident),     # W2 (blk-diag)
            pl.BlockSpec((B * C, 1), lambda i: (0, 0), **resident),              # b2
        ],
        out_specs=pl.BlockSpec((Mrows, H, W), lambda i: (i, 0, 0)),
        compiler_params=pltpu.CompilerParams(
            dimension_semantics=("parallel",),
            vmem_limit_bytes=32 * 1024 * 1024,
        ),
    )(x3, Pw, Ph, Uw, w1bd, b1t, w2bd, b2t)
    return out3.reshape(N, C, H, W)


def ref_attention_block(x, w1, b1, w2, b2, *, stride=16):
    """Pure-JAX reference matching the PyTorch module."""
    pad = stride - 1
    ksize = 2 * stride - 1
    pads = [(0, 0), (0, 0), (pad, pad), (pad, pad)]
    dims = (1, 1, ksize, ksize)
    strides = (1, 1, stride, stride)
    sums = jax.lax.reduce_window(x, 0.0, jax.lax.add, dims, strides, pads)
    cnts = jax.lax.reduce_window(jnp.ones_like(x), 0.0, jax.lax.add, dims, strides, pads)
    pooled = sums / cnts                                        # count_include_pad=False
    w1m = w1.reshape(w1.shape[0], w1.shape[1])
    w2m = w2.reshape(w2.shape[0], w2.shape[1])
    h = jnp.einsum('nchw,oc->nohw', pooled, w1m) + b1[None, :, None, None]
    h = jnp.maximum(h, 0.0)
    g = jax.nn.sigmoid(jnp.einsum('nchw,oc->nohw', h, w2m) + b2[None, :, None, None])
    up = jnp.repeat(jnp.repeat(g, stride, axis=2), stride, axis=3)
    up = up[:, :, :x.shape[2], :x.shape[3]]
    return up * x


if __name__ == "__main__":
    n_feats, reduction, stride = 8, 4, 16
    hidden = n_feats // reduction
    N, H, W = 4, 40, 128                      # H=40 -> exercises the crop path

    key = jax.random.PRNGKey(0)
    kx, k1, k2, k3, k4 = jax.random.split(key, 5)
    x = jax.random.normal(kx, (N, n_feats, H, W), dtype=jnp.float32)
    w1 = 0.2 * jax.random.normal(k1, (hidden, n_feats, 1, 1), dtype=jnp.float32)
    b1 = 0.1 * jax.random.normal(k2, (hidden,), dtype=jnp.float32)
    w2 = 0.2 * jax.random.normal(k3, (n_feats, hidden, 1, 1), dtype=jnp.float32)
    b2 = 0.1 * jax.random.normal(k4, (n_feats,), dtype=jnp.float32)

    out = attention_block(x, w1, b1, w2, b2, stride=stride, block_n=2)
    out = jax.block_until_ready(out)

    ref = ref_attention_block(x, w1, b1, w2, b2, stride=stride)
    np.testing.assert_allclose(np.asarray(out), np.asarray(ref), rtol=1e-5, atol=1e-5)
    print("KERNEL_OK")
</pallas_src>

<mosaic_0001>
module attributes {stable_mosaic.version = 11 : i64} {
  func.func @_attn_kernel(%arg0: i32, %arg1: memref<16x40x128xf32, #tpu.memory_space<vmem>>, %arg2: memref<128x8xf32, #tpu.memory_space<vmem>>, %arg3: memref<40x3xf32, #tpu.memory_space<vmem>>, %arg4: memref<8x128xf32, #tpu.memory_space<vmem>>, %arg5: memref<4x16xf32, #tpu.memory_space<vmem>>, %arg6: memref<4x1xf32, #tpu.memory_space<vmem>>, %arg7: memref<16x4xf32, #tpu.memory_space<vmem>>, %arg8: memref<16x1xf32, #tpu.memory_space<vmem>>, %arg9: memref<16x40x128xf32, #tpu.memory_space<vmem>>) attributes {dimension_semantics = [#tpu.dimension_semantics<parallel>], iteration_bounds = array<i64: 2>, scalar_prefetch = 0 : i64, scratch_operands = 0 : i64, tpu.core_type = #tpu.core_type<tc>, window_params = [{transform_indices = @transform_0, window_bounds = array<i64: 16, 40, 128>}, {pipeline_mode = #tpu.pipeline_mode<synchronous>, transform_indices = @transform_1, window_bounds = array<i64: 128, 8>}, {pipeline_mode = #tpu.pipeline_mode<synchronous>, transform_indices = @transform_2, window_bounds = array<i64: 40, 3>}, {pipeline_mode = #tpu.pipeline_mode<synchronous>, transform_indices = @transform_3, window_bounds = array<i64: 8, 128>}, {pipeline_mode = #tpu.pipeline_mode<synchronous>, transform_indices = @transform_4, window_bounds = array<i64: 4, 16>}, {pipeline_mode = #tpu.pipeline_mode<synchronous>, transform_indices = @transform_5, window_bounds = array<i64: 4, 1>}, {pipeline_mode = #tpu.pipeline_mode<synchronous>, transform_indices = @transform_6, window_bounds = array<i64: 16, 4>}, {pipeline_mode = #tpu.pipeline_mode<synchronous>, transform_indices = @transform_7, window_bounds = array<i64: 16, 1>}, {transform_indices = @transform_8, window_bounds = array<i64: 16, 40, 128>}]} {
    %c0 = arith.constant 0 : index
    %c0_0 = arith.constant 0 : index
    %c0_1 = arith.constant 0 : index
    %0 = vector.load %arg1[%c0, %c0_0, %c0_1] : memref<16x40x128xf32, #tpu.memory_space<vmem>>, vector<16x40x128xf32>
    %1 = vector.shape_cast %0 : vector<16x40x128xf32> to vector<640x128xf32>
    %c0_2 = arith.constant 0 : index
    %c0_3 = arith.constant 0 : index
    %2 = vector.load %arg2[%c0_2, %c0_3] : memref<128x8xf32, #tpu.memory_space<vmem>>, vector<128x8xf32>
    %cst = arith.constant dense<0.000000e+00> : vector<640x8xf32>
    %3 = tpu.matmul %1, %2, %cst {dimension_numbers = #tpu.dot_dimension_numbers<[1], [0], [0], [1], [0, 0, 1, 1], [], []>} : vector<640x128xf32>, vector<128x8xf32>, vector<640x8xf32> -> vector<640x8xf32>
    %4 = vector.shape_cast %3 : vector<640x8xf32> to vector<16x40x8xf32>
    %c0_4 = arith.constant 0 : index
    %c0_5 = arith.constant 0 : index
    %5 = vector.load %arg3[%c0_4, %c0_5] : memref<40x3xf32, #tpu.memory_space<vmem>>, vector<40x3xf32>
    %6 = vector.extract_strided_slice %5 {offsets = [0, 0], sizes = [40, 1], strides = [1, 1]} : vector<40x3xf32> to vector<40x1xf32>
    %7 = vector.shape_cast %6 : vector<40x1xf32> to vector<1x40x1xf32>
    %8 = vector.broadcast %7 : vector<1x40x1xf32> to vector<16x40x8xf32>
    %9 = arith.mulf %4, %8 : vector<16x40x8xf32>
    %cst_6 = arith.constant dense<0.000000e+00> : vector<16x8xf32>
    %10 = vector.multi_reduction <add>, %9, %cst_6 [1] : vector<16x40x8xf32> to vector<16x8xf32>
    %11 = vector.extract_strided_slice %5 {offsets = [0, 1], sizes = [40, 1], strides = [1, 1]} : vector<40x3xf32> to vector<40x1xf32>
    %12 = vector.shape_cast %11 : vector<40x1xf32> to vector<1x40x1xf32>
    %13 = vector.broadcast %12 : vector<1x40x1xf32> to vector<16x40x8xf32>
    %14 = arith.mulf %4, %13 : vector<16x40x8xf32>
    %cst_7 = arith.constant dense<0.000000e+00> : vector<16x8xf32>
    %15 = vector.multi_reduction <add>, %14, %cst_7 [1] : vector<16x40x8xf32> to vector<16x8xf32>
    %16 = vector.extract_strided_slice %5 {offsets = [0, 2], sizes = [40, 1], strides = [1, 1]} : vector<40x3xf32> to vector<40x1xf32>
    %17 = vector.shape_cast %16 : vector<40x1xf32> to vector<1x40x1xf32>
    %18 = vector.broadcast %17 : vector<1x40x1xf32> to vector<16x40x8xf32>
    %19 = arith.mulf %4, %18 : vector<16x40x8xf32>
    %cst_8 = arith.constant dense<0.000000e+00> : vector<16x8xf32>
    %20 = vector.multi_reduction <add>, %19, %cst_8 [1] : vector<16x40x8xf32> to vector<16x8xf32>
    %21 = tpu.concatenate %10, %15, %20 in 1 : vector<16x8xf32>, vector<16x8xf32>, vector<16x8xf32> -> vector<16x24xf32>
    %c0_9 = arith.constant 0 : index
    %c0_10 = arith.constant 0 : index
    %22 = vector.load %arg5[%c0_9, %c0_10] : memref<4x16xf32, #tpu.memory_space<vmem>>, vector<4x16xf32>
    %cst_11 = arith.constant dense<0.000000e+00> : vector<4x24xf32>
    %23 = tpu.matmul %22, %21, %cst_11 {dimension_numbers = #tpu.dot_dimension_numbers<[1], [0], [0], [1], [0, 0, 1, 1], [], []>} : vector<4x16xf32>, vector<16x24xf32>, vector<4x24xf32> -> vector<4x24xf32>
    %c0_12 = arith.constant 0 : index
    %c0_13 = arith.constant 0 : index
    %24 = vector.load %arg6[%c0_12, %c0_13] : memref<4x1xf32, #tpu.memory_space<vmem>>, vector<4x1xf32>
    %25 = vector.broadcast %24 : vector<4x1xf32> to vector<4x24xf32>
    %26 = arith.addf %23, %25 : vector<4x24xf32>
    %cst_14 = arith.constant 0.000000e+00 : f32
    %27 = vector.broadcast %cst_14 : f32 to vector<4x24xf32>
    %28 = arith.maximumf %26, %27 : vector<4x24xf32>
    %c0_15 = arith.constant 0 : index
    %c0_16 = arith.constant 0 : index
    %29 = vector.load %arg7[%c0_15, %c0_16] : memref<16x4xf32, #tpu.memory_space<vmem>>, vector<16x4xf32>
    %cst_17 = arith.constant dense<0.000000e+00> : vector<16x24xf32>
    %30 = tpu.matmul %29, %28, %cst_17 {dimension_numbers = #tpu.dot_dimension_numbers<[1], [0], [0], [1], [0, 0, 1, 1], [], []>} : vector<16x4xf32>, vector<4x24xf32>, vector<16x24xf32> -> vector<16x24xf32>
    %c0_18 = arith.constant 0 : index
    %c0_19 = arith.constant 0 : index
    %31 = vector.load %arg8[%c0_18, %c0_19] : memref<16x1xf32, #tpu.memory_space<vmem>>, vector<16x1xf32>
    %32 = vector.broadcast %31 : vector<16x1xf32> to vector<16x24xf32>
    %33 = arith.addf %30, %32 : vector<16x24xf32>
    %34 = arith.negf %33 : vector<16x24xf32>
    %35 = math.exp %34 : vector<16x24xf32>
    %cst_20 = arith.constant 1.000000e+00 : f32
    %36 = vector.broadcast %cst_20 : f32 to vector<16x24xf32>
    %37 = arith.addf %36, %35 : vector<16x24xf32>
    %38 = arith.divf %36, %37 : vector<16x24xf32>
    %c0_21 = arith.constant 0 : index
    %c0_22 = arith.constant 0 : index
    %39 = vector.load %arg4[%c0_21, %c0_22] : memref<8x128xf32, #tpu.memory_space<vmem>>, vector<8x128xf32>
    %40 = vector.extract_strided_slice %38 {offsets = [0, 0], sizes = [16, 8], strides = [1, 1]} : vector<16x24xf32> to vector<16x8xf32>
    %cst_23 = arith.constant dense<0.000000e+00> : vector<16x128xf32>
    %41 = tpu.matmul %40, %39, %cst_23 {dimension_numbers = #tpu.dot_dimension_numbers<[1], [0], [0], [1], [0, 0, 1, 1], [], []>} : vector<16x8xf32>, vector<8x128xf32>, vector<16x128xf32> -> vector<16x128xf32>
    %42 = vector.extract_strided_slice %0 {offsets = [0, 0, 0], sizes = [16, 16, 128], strides = [1, 1, 1]} : vector<16x40x128xf32> to vector<16x16x128xf32>
    %43 = vector.shape_cast %41 : vector<16x128xf32> to vector<16x1x128xf32>
    %44 = vector.broadcast %43 : vector<16x1x128xf32> to vector<16x16x128xf32>
    %45 = arith.mulf %42, %44 : vector<16x16x128xf32>
    %c0_24 = arith.constant 0 : index
    %c0_25 = arith.constant 0 : index
    %c0_26 = arith.constant 0 : index
    %46 = vector.load %arg9[%c0_24, %c0_25, %c0_26] : memref<16x40x128xf32, #tpu.memory_space<vmem>>, vector<16x16x128xf32>
    tpu.vector_store %arg9[%c0_24, %c0_25, %c0_26], %45 {strides = array<i32>} : memref<16x40x128xf32, #tpu.memory_space<vmem>>, vector<16x16x128xf32>,
    %47 = vector.extract_strided_slice %38 {offsets = [0, 8], sizes = [16, 8], strides = [1, 1]} : vector<16x24xf32> to vector<16x8xf32>
    %cst_27 = arith.constant dense<0.000000e+00> : vector<16x128xf32>
    %48 = tpu.matmul %47, %39, %cst_27 {dimension_numbers = #tpu.dot_dimension_numbers<[1], [0], [0], [1], [0, 0, 1, 1], [], []>} : vector<16x8xf32>, vector<8x128xf32>, vector<16x128xf32> -> vector<16x128xf32>
    %49 = vector.extract_strided_slice %0 {offsets = [0, 16, 0], sizes = [16, 16, 128], strides = [1, 1, 1]} : vector<16x40x128xf32> to vector<16x16x128xf32>
    %50 = vector.shape_cast %48 : vector<16x128xf32> to vector<16x1x128xf32>
    %51 = vector.broadcast %50 : vector<16x1x128xf32> to vector<16x16x128xf32>
    %52 = arith.mulf %49, %51 : vector<16x16x128xf32>
    %c0_28 = arith.constant 0 : index
    %c16 = arith.constant 16 : index
    %c0_29 = arith.constant 0 : index
    %53 = vector.load %arg9[%c0_28, %c16, %c0_29] : memref<16x40x128xf32, #tpu.memory_space<vmem>>, vector<16x16x128xf32>
    tpu.vector_store %arg9[%c0_28, %c16, %c0_29], %52 {strides = array<i32>} : memref<16x40x128xf32, #tpu.memory_space<vmem>>, vector<16x16x128xf32>,
    %54 = vector.extract_strided_slice %38 {offsets = [0, 16], sizes = [16, 8], strides = [1, 1]} : vector<16x24xf32> to vector<16x8xf32>
    %cst_30 = arith.constant dense<0.000000e+00> : vector<16x128xf32>
    %55 = tpu.matmul %54, %39, %cst_30 {dimension_numbers = #tpu.dot_dimension_numbers<[1], [0], [0], [1], [0, 0, 1, 1], [], []>} : vector<16x8xf32>, vector<8x128xf32>, vector<16x128xf32> -> vector<16x128xf32>
    %56 = vector.extract_strided_slice %0 {offsets = [0, 32, 0], sizes = [16, 8, 128], strides = [1, 1, 1]} : vector<16x40x128xf32> to vector<16x8x128xf32>
    %57 = vector.shape_cast %55 : vector<16x128xf32> to vector<16x1x128xf32>
    %58 = vector.broadcast %57 : vector<16x1x128xf32> to vector<16x8x128xf32>
    %59 = arith.mulf %56, %58 : vector<16x8x128xf32>
    %c0_31 = arith.constant 0 : index
    %c32 = arith.constant 32 : index
    %c0_32 = arith.constant 0 : index
    %60 = vector.load %arg9[%c0_31, %c32, %c0_32] : memref<16x40x128xf32, #tpu.memory_space<vmem>>, vector<16x8x128xf32>
    tpu.vector_store %arg9[%c0_31, %c32, %c0_32], %59 {strides = array<i32>} : memref<16x40x128xf32, #tpu.memory_space<vmem>>, vector<16x8x128xf32>,
    return
  }
  func.func @transform_0(%arg0: i32) -> (i32, i32, i32) {
    %c0_i32 = arith.constant 0 : i32
    %c0_i32_0 = arith.constant 0 : i32
    %c0_i32_1 = arith.constant 0 : i32
    return %arg0, %c0_i32, %c0_i32_0 : i32, i32, i32
  }
  func.func @transform_1(%arg0: i32) -> (i32, i32) {
    %c0_i32 = arith.constant 0 : i32
    %c0_i32_0 = arith.constant 0 : i32
    %c0_i32_1 = arith.constant 0 : i32
    return %c0_i32, %c0_i32_0 : i32, i32
  }
  func.func @transform_2(%arg0: i32) -> (i32, i32) {
    %c0_i32 = arith.constant 0 : i32
    %c0_i32_0 = arith.constant 0 : i32
    %c0_i32_1 = arith.constant 0 : i32
    return %c0_i32, %c0_i32_0 : i32, i32
  }
  func.func @transform_3(%arg0: i32) -> (i32, i32) {
    %c0_i32 = arith.constant 0 : i32
    %c0_i32_0 = arith.constant 0 : i32
    %c0_i32_1 = arith.constant 0 : i32
    return %c0_i32, %c0_i32_0 : i32, i32
  }
  func.func @transform_4(%arg0: i32) -> (i32, i32) {
    %c0_i32 = arith.constant 0 : i32
    %c0_i32_0 = arith.constant 0 : i32
    %c0_i32_1 = arith.constant 0 : i32
    return %c0_i32, %c0_i32_0 : i32, i32
  }
  func.func @transform_5(%arg0: i32) -> (i32, i32) {
    %c0_i32 = arith.constant 0 : i32
    %c0_i32_0 = arith.constant 0 : i32
    %c0_i32_1 = arith.constant 0 : i32
    return %c0_i32, %c0_i32_0 : i32, i32
  }
  func.func @transform_6(%arg0: i32) -> (i32, i32) {
    %c0_i32 = arith.constant 0 : i32
    %c0_i32_0 = arith.constant 0 : i32
    %c0_i32_1 = arith.constant 0 : i32
    return %c0_i32, %c0_i32_0 : i32, i32
  }
  func.func @transform_7(%arg0: i32) -> (i32, i32) {
    %c0_i32 = arith.constant 0 : i32
    %c0_i32_0 = arith.constant 0 : i32
    %c0_i32_1 = arith.constant 0 : i32
    return %c0_i32, %c0_i32_0 : i32, i32
  }
  func.func @transform_8(%arg0: i32) -> (i32, i32, i32) {
    %c0_i32 = arith.constant 0 : i32
    %c0_i32_0 = arith.constant 0 : i32
    %c0_i32_1 = arith.constant 0 : i32
    return %arg0, %c0_i32, %c0_i32_0 : i32, i32, i32
  }
}

</mosaic_0001>

<llo_original>
// kernel: tpu_custom_call.1
$region0: #{tpu_custom_call.1}
  #allocation0 [shape = 'u32[]', space=smem, size = 0x4, offset = 0x4, fixed_abs, tag = 'smem constant byte address 0x4 - core index']
  #allocation1 [shape = 'u32[144,128]{1,0:T(1,128)}', space=vmem, size = 0x12000, scoped, tag = 'internal scratch']
  %s0 = inlined_call_operand.hbm [shape: f32[32,40,128], index: 0, kind: input, shape index: {}]
  %s1 = inlined_call_operand.vmem [shape: f32[128,8], index: 1, kind: input, shape index: {}]
  %s2 = inlined_call_operand.vmem [shape: f32[40,3], index: 2, kind: input, shape index: {}]
  %s3 = inlined_call_operand.vmem [shape: f32[8,128], index: 3, kind: input, shape index: {}]
  %s4 = inlined_call_operand.vmem [shape: f32[4,16], index: 4, kind: input, shape index: {}]
  %s5 = inlined_call_operand.vmem [shape: f32[4,1], index: 5, kind: input, shape index: {}]
  %s6 = inlined_call_operand.vmem [shape: f32[16,4], index: 6, kind: input, shape index: {}]
  %s7 = inlined_call_operand.vmem [shape: f32[16,1], index: 7, kind: input, shape index: {}]
  %s8 = inlined_call_operand.hbm [shape: f32[32,40,128], index: 8, kind: output, shape index: {}]
  %s9 = sld [smem:[#allocation0]]
  $region69: #{tpu_custom_call.1} parent=0
    _
  %s11 = ssub.s32 1, %s9
  %s12 = scalar_select 0, %s11, %s9
  $region1: #{tpu_custom_call.1} parent=0
    #allocation2 [shape = 'u8[655360]{0}', space=vmem, size = 0xa0000, scoped, tag = 'input window, operand 0']
    #allocation3 [shape = 's32[2]{0}', space=sflag, size = 0x8, scoped, tag = 'scoped memory for tpu_custom_call.1']
    #allocation4 [shape = 's32[2]{0}', space=sflag, size = 0x8, scoped, tag = 'scoped memory for tpu_custom_call.1']
    #allocation5 [shape = 'u8[655360]{0}', space=vmem, size = 0xa0000, scoped, tag = 'output window, operand 0']
    %13 = vsyncpa [#allocation3], 0
    %s14 = scalar_lea.sflag [#allocation3], 1
    %15 = vsyncpa %s14, 0
    %16 = vsyncpa [#allocation4], 0
    %s17 = scalar_lea.sflag [#allocation4], 1
    %18 = vsyncpa %s17, 0
    loop: start=0, step=1, limit=4
    $region2: #{tpu_custom_call.1} parent=1 // loop_pre_header
      _
    $region3: #{tpu_custom_call.1} parent=1 // loop_header
      %s20 = sphi 0, %s24
      %p21 = scmp.ge.s32.totalorder %s20, 4
      %s30 = sphi 0, %s32
      %s33 = sphi 0, %s30
      %s34 = sphi 0, %s33
      %s50 = sphi 0, %s34
      %s54 = sphi 0, %s54
      %s56 = sphi 0, %s54
      %s57 = sphi 0, %s56
      %s71 = sphi 0, %s57
      %s75 = sphi 0, %s75
      %s77 = sphi 0, %s75
      %s78 = sphi 0, %s77
      %s92 = sphi 0, %s78
      %s96 = sphi 0, %s96
      %s98 = sphi 0, %s96
      %s99 = sphi 0, %s98
      %s113 = sphi 0, %s99
      %s117 = sphi 0, %s117
      %s119 = sphi 0, %s117
      %s120 = sphi 0, %s119
      %s134 = sphi 0, %s120
      %s138 = sphi 0, %s138
      %s140 = sphi 0, %s138
      %s141 = sphi 0, %s140
      %s155 = sphi 0, %s141
      %s159 = sphi 0, %s159
      %s161 = sphi 0, %s159
      %s162 = sphi 0, %s161
      %s176 = sphi 0, %s162
      %s180 = sphi 0, %s180
      %s182 = sphi 0, %s180
      %s183 = sphi 0, %s182
      %s197 = sphi 0, %s183
      %s203 = sphi 0, %s205
      %s206 = sphi 0, %s203
      %s207 = sphi 0, %s206
      %s223 = sphi 0, %s207
    $region4: #{tpu_custom_call.1} parent=1 // loop_header_branch
      %23 = sbr.rel (%p21) target = $region8
    $region5: #{tpu_custom_call.1} parent=1 // loop_body
      %s25 = ssub.s32 %s20, 1
      %s26 = ssub.s32 %s20, 2
      %s27 = sadd.s32 %s20, 1
      %s28 = ssub.s32 %s20, %s27
      %p29 = scmp.eq.s32.totalorder %s28, 0
      %s31 = sadd.s32 %s30, 1
      %s32 = scalar_select %p29, %s30, %s31
      %p35 = pneg %p29
      %p36 = scmp.eq.s32.totalorder %s20, 1
      %p37 = por %p35, %p36
      %p38 = scmp.ne.s32.totalorder %s30, %s33
      %p39 = scmp.eq.s32.totalorder %s20, 0
      %p40 = por %p38, %p39
      %p41 = scmp.ne.s32.totalorder %s30, %s33
      %p42 = scmp.eq.s32.totalorder %s25, 1
      %p43 = por %p41, %p42
      %p44 = scmp.ne.s32.totalorder %s33, %s34
      %p45 = scmp.eq.s32.totalorder %s25, 0
      %p46 = por %p44, %p45
      %p47 = scmp.ne.s32.totalorder %s33, %s34
      %p48 = scmp.eq.s32.totalorder %s26, 1
      %p49 = por %p47, %p48
      %p51 = scmp.ne.s32.totalorder %s34, %s50
      %p52 = scmp.eq.s32.totalorder %s26, 0
      %p53 = por %p51, %p52
      %s55 = sadd.s32 %s54, 1
      %p58 = scmp.eq.s32.totalorder %s20, 1
      %p59 = scmp.ne.s32.totalorder %s54, %s56
      %p60 = scmp.eq.s32.totalorder %s20, 0
      %p61 = por %p59, %p60
      %p62 = scmp.ne.s32.totalorder %s54, %s56
      %p63 = scmp.eq.s32.totalorder %s25, 1
      %p64 = por %p62, %p63
      %p65 = scmp.ne.s32.totalorder %s56, %s57
      %p66 = scmp.eq.s32.totalorder %s25, 0
      %p67 = por %p65, %p66
      %p68 = scmp.ne.s32.totalorder %s56, %s57
      %p69 = scmp.eq.s32.totalorder %s26, 1
      %p70 = por %p68, %p69
      %p72 = scmp.ne.s32.totalorder %s57, %s71
      %p73 = scmp.eq.s32.totalorder %s26, 0
      %p74 = por %p72, %p73
      %s76 = sadd.s32 %s75, 1
      %p79 = scmp.eq.s32.totalorder %s20, 1
      %p80 = scmp.ne.s32.totalorder %s75, %s77
      %p81 = scmp.eq.s32.totalorder %s20, 0
      %p82 = por %p80, %p81
      %p83 = scmp.ne.s32.totalorder %s75, %s77
      %p84 = scmp.eq.s32.totalorder %s25, 1
      %p85 = por %p83, %p84
      %p86 = scmp.ne.s32.totalorder %s77, %s78
      %p87 = scmp.eq.s32.totalorder %s25, 0
      %p88 = por %p86, %p87
      %p89 = scmp.ne.s32.totalorder %s77, %s78
      %p90 = scmp.eq.s32.totalorder %s26, 1
      %p91 = por %p89, %p90
      %p93 = scmp.ne.s32.totalorder %s78, %s92
      %p94 = scmp.eq.s32.totalorder %s26, 0
      %p95 = por %p93, %p94
      %s97 = sadd.s32 %s96, 1
      %p100 = scmp.eq.s32.totalorder %s20, 1
      %p101 = scmp.ne.s32.totalorder %s96, %s98
      %p102 = scmp.eq.s32.totalorder %s20, 0
      %p103 = por %p101, %p102
      %p104 = scmp.ne.s32.totalorder %s96, %s98
      %p105 = scmp.eq.s32.totalorder %s25, 1
      %p106 = por %p104, %p105
      %p107 = scmp.ne.s32.totalorder %s98, %s99
      %p108 = scmp.eq.s32.totalorder %s25, 0
      %p109 = por %p107, %p108
      %p110 = scmp.ne.s32.totalorder %s98, %s99
      %p111 = scmp.eq.s32.totalorder %s26, 1
      %p112 = por %p110, %p111
      %p114 = scmp.ne.s32.totalorder %s99, %s113
      %p115 = scmp.eq.s32.totalorder %s26, 0
      %p116 = por %p114, %p115
      %s118 = sadd.s32 %s117, 1
      %p121 = scmp.eq.s32.totalorder %s20, 1
      %p122 = scmp.ne.s32.totalorder %s117, %s119
      %p123 = scmp.eq.s32.totalorder %s20, 0
      %p124 = por %p122, %p123
      %p125 = scmp.ne.s32.totalorder %s117, %s119
      %p126 = scmp.eq.s32.totalorder %s25, 1
      %p127 = por %p125, %p126
      %p128 = scmp.ne.s32.totalorder %s119, %s120
      %p129 = scmp.eq.s32.totalorder %s25, 0
      %p130 = por %p128, %p129
      %p131 = scmp.ne.s32.totalorder %s119, %s120
      %p132 = scmp.eq.s32.totalorder %s26, 1
      %p133 = por %p131, %p132
      %p135 = scmp.ne.s32.totalorder %s120, %s134
      %p136 = scmp.eq.s32.totalorder %s26, 0
      %p137 = por %p135, %p136
      %s139 = sadd.s32 %s138, 1
      %p142 = scmp.eq.s32.totalorder %s20, 1
      %p143 = scmp.ne.s32.totalorder %s138, %s140
      %p144 = scmp.eq.s32.totalorder %s20, 0
      %p145 = por %p143, %p144
      %p146 = scmp.ne.s32.totalorder %s138, %s140
      %p147 = scmp.eq.s32.totalorder %s25, 1
      %p148 = por %p146, %p147
      %p149 = scmp.ne.s32.totalorder %s140, %s141
      %p150 = scmp.eq.s32.totalorder %s25, 0
      %p151 = por %p149, %p150
      %p152 = scmp.ne.s32.totalorder %s140, %s141
      %p153 = scmp.eq.s32.totalorder %s26, 1
      %p154 = por %p152, %p153
      %p156 = scmp.ne.s32.totalorder %s141, %s155
      %p157 = scmp.eq.s32.totalorder %s26, 0
      %p158 = por %p156, %p157
      %s160 = sadd.s32 %s159, 1
      %p163 = scmp.eq.s32.totalorder %s20, 1
      %p164 = scmp.ne.s32.totalorder %s159, %s161
      %p165 = scmp.eq.s32.totalorder %s20, 0
      %p166 = por %p164, %p165
      %p167 = scmp.ne.s32.totalorder %s159, %s161
      %p168 = scmp.eq.s32.totalorder %s25, 1
      %p169 = por %p167, %p168
      %p170 = scmp.ne.s32.totalorder %s161, %s162
      %p171 = scmp.eq.s32.totalorder %s25, 0
      %p172 = por %p170, %p171
      %p173 = scmp.ne.s32.totalorder %s161, %s162
      %p174 = scmp.eq.s32.totalorder %s26, 1
      %p175 = por %p173, %p174
      %p177 = scmp.ne.s32.totalorder %s162, %s176
      %p178 = scmp.eq.s32.totalorder %s26, 0
      %p179 = por %p177, %p178
      %s181 = sadd.s32 %s180, 1
      %p184 = scmp.eq.s32.totalorder %s20, 1
      %p185 = scmp.ne.s32.totalorder %s180, %s182
      %p186 = scmp.eq.s32.totalorder %s20, 0
      %p187 = por %p185, %p186
      %p188 = scmp.ne.s32.totalorder %s180, %s182
      %p189 = scmp.eq.s32.totalorder %s25, 1
      %p190 = por %p188, %p189
      %p191 = scmp.ne.s32.totalorder %s182, %s183
      %p192 = scmp.eq.s32.totalorder %s25, 0
      %p193 = por %p191, %p192
      %p194 = scmp.ne.s32.totalorder %s182, %s183
      %p195 = scmp.eq.s32.totalorder %s26, 1
      %p196 = por %p194, %p195
      %p198 = scmp.ne.s32.totalorder %s183, %s197
      %p199 = scmp.eq.s32.totalorder %s26, 0
      %p200 = por %p198, %p199
      %s201 = ssub.s32 %s20, %s27
      %p202 = scmp.eq.s32.totalorder %s201, 0
      %s204 = sadd.s32 %s203, 1
      %s205 = scalar_select %p202, %s203, %s204
      %p208 = pneg %p202
      %p209 = scmp.eq.s32.totalorder %s20, 1
      %p210 = por %p208, %p209
      %p211 = scmp.ne.s32.totalorder %s203, %s206
      %p212 = scmp.eq.s32.totalorder %s20, 0
      %p213 = por %p211, %p212
      %p214 = scmp.ne.s32.totalorder %s203, %s206
      %p215 = scmp.eq.s32.totalorder %s25, 1
      %p216 = por %p214, %p215
      %p217 = scmp.ne.s32.totalorder %s206, %s207
      %p218 = scmp.eq.s32.totalorder %s25, 0
      %p219 = por %p217, %p218
      %p220 = scmp.ne.s32.totalorder %s206, %s207
      %p221 = scmp.eq.s32.totalorder %s26, 1
      %p222 = por %p220, %p221
      %p224 = scmp.ne.s32.totalorder %s207, %s223
      %p225 = scmp.eq.s32.totalorder %s26, 0
      %p226 = por %p224, %p225
      %p227 = scmp.le.s32.totalorder 1, %s20
      %p228 = scmp.lt.s32.totalorder %s20, 3
      %p229 = pnand %p227, %p228
      %p230 = pneg %p229
      // Predicated region
      $region9: #{tpu_custom_call.1} parent=5 // pred_check
        _
      $region10: #{tpu_custom_call.1} parent=5 // pred_check_branch
        %232 = sbr.rel (%p229) target = $region12
      $region11: #{tpu_custom_call.1} parent=5 // pred_region
        %s233 = ssub.s32 %s20, 1
        // Predicated region
        $region13: #{tpu_custom_call.1} parent=11 // pred_check
          %p234 = pneg %p67
        $region14: #{tpu_custom_call.1} parent=11 // pred_check_branch
          %236 = sbr.rel (%p234) target = $region16
        $region15: #{tpu_custom_call.1} parent=11 // pred_region
          _
        $region16: #{tpu_custom_call.1} parent=11 // pred_fallthru
          _
        // Predicated region
        $region17: #{tpu_custom_call.1} parent=11 // pred_check
          %p237 = pneg %p88
        $region18: #{tpu_custom_call.1} parent=11 // pred_check_branch
          %239 = sbr.rel (%p237) target = $region20
        $region19: #{tpu_custom_call.1} parent=11 // pred_region
          _
        $region20: #{tpu_custom_call.1} parent=11 // pred_fallthru
          _
        // Predicated region
        $region21: #{tpu_custom_call.1} parent=11 // pred_check
          %p240 = pneg %p109
        $region22: #{tpu_custom_call.1} parent=11 // pred_check_branch
          %242 = sbr.rel (%p240) target = $region24
        $region23: #{tpu_custom_call.1} parent=11 // pred_region
          _
        $region24: #{tpu_custom_call.1} parent=11 // pred_fallthru
          _
        // Predicated region
        $region25: #{tpu_custom_call.1} parent=11 // pred_check
          %p243 = pneg %p130
        $region26: #{tpu_custom_call.1} parent=11 // pred_check_branch
          %245 = sbr.rel (%p243) target = $region28
        $region27: #{tpu_custom_call.1} parent=11 // pred_region
          _
        $region28: #{tpu_custom_call.1} parent=11 // pred_fallthru
          _
        // Predicated region
        $region29: #{tpu_custom_call.1} parent=11 // pred_check
          %p246 = pneg %p151
        $region30: #{tpu_custom_call.1} parent=11 // pred_check_branch
          %248 = sbr.rel (%p246) target = $region32
        $region31: #{tpu_custom_call.1} parent=11 // pred_region
          _
        $region32: #{tpu_custom_call.1} parent=11 // pred_fallthru
          _
        // Predicated region
        $region33: #{tpu_custom_call.1} parent=11 // pred_check
          %p249 = pneg %p172
        $region34: #{tpu_custom_call.1} parent=11 // pred_check_branch
          %251 = sbr.rel (%p249) target = $region36
        $region35: #{tpu_custom_call.1} parent=11 // pred_region
          _
        $region36: #{tpu_custom_call.1} parent=11 // pred_fallthru
          _
        // Predicated region
        $region37: #{tpu_custom_call.1} parent=11 // pred_check
          %p252 = pneg %p193
        $region38: #{tpu_custom_call.1} parent=11 // pred_check_branch
          %254 = sbr.rel (%p252) target = $region40
        $region39: #{tpu_custom_call.1} parent=11 // pred_region
          _
        $region40: #{tpu_custom_call.1} parent=11 // pred_fallthru
          _
      $region12: #{tpu_custom_call.1} parent=5 // pred_fallthru
        _
      %p255 = scmp.lt.s32.totalorder %s20, 2
      // Predicated region
      $region41: #{tpu_custom_call.1} parent=5 // pred_check
        %p256 = pneg %p255
      $region42: #{tpu_custom_call.1} parent=5 // pred_check_branch
        %258 = sbr.rel (%p256) target = $region44
      $region43: #{tpu_custom_call.1} parent=5 // pred_region
        // Predicated region
        $region45: #{tpu_custom_call.1} parent=43 // pred_check
          %p259 = pneg %p40
        $region46: #{tpu_custom_call.1} parent=43 // pred_check_branch
          %261 = sbr.rel (%p259) target = $region48
        $region47: #{tpu_custom_call.1} parent=43 // pred_region
          %s262 = sand.u32 %s30, 1
          %s263 = scalar_lea.sflag [#allocation3], %s262
          %s264 = sand.u32 %s30, 1
          %s265 = smul.addr %s264, 640
          %s266 = scalar_lea.vmem [#allocation2], %s265
          %s267 = smul.u32 16, %s20
          %s269 = ssub.s32 10240, 10240
          %270 = vsyncadd %s263, %s269
          %s271 = smul.addr %s267, 5
          %s272 = smul.addr %s271, 128
          %s273 = scalar_lea.hbm %s0, %s272
          %s274 = sshll.u32 %s266, 4
          %s275 = int_to_ptr.vmem [resolvable:$true] %s274
          %280 = dma.hbm_to_vmem [thread:$0]  %s273, 10240, %s275, %s263, 128, 128, 8
        $region48: #{tpu_custom_call.1} parent=43 // pred_fallthru
          _
      $region44: #{tpu_custom_call.1} parent=5 // pred_fallthru
        _
      %p281 = scmp.le.s32.totalorder 1, %s20
      %p282 = scmp.lt.s32.totalorder %s20, 3
      %p283 = pnand %p281, %p282
      %p284 = pneg %p283
      // Predicated region
      $region49: #{tpu_custom_call.1} parent=5 // pred_check
        _
      $region50: #{tpu_custom_call.1} parent=5 // pred_check_branch
        %286 = sbr.rel (%p283) target = $region52
      $region51: #{tpu_custom_call.1} parent=5 // pred_region
        %s287 = ssub.s32 %s20, 1
        %s288 = sand.u32 %s33, 1
        %s289 = scalar_lea.sflag [#allocation3], %s288
        %s290 = sand.u32 %s33, 1
        %s291 = smul.addr %s290, 640
        %s292 = scalar_lea.vmem [#allocation2], %s291
        // Predicated region
        $region53: #{tpu_custom_call.1} parent=51 // pred_check
          %p293 = pneg %p46
        $region54: #{tpu_custom_call.1} parent=51 // pred_check_branch
          %295 = sbr.rel (%p293) target = $region56
        $region55: #{tpu_custom_call.1} parent=51 // pred_region
          %296 = dma.done %s289, 10240
        $region56: #{tpu_custom_call.1} parent=51 // pred_fallthru
          _
        %s297 = sand.u32 %s33, 1
        %s298 = scalar_lea.sflag [#allocation3], %s297
        %s299 = sand.u32 %s33, 1
        %s300 = smul.addr %s299, 640
        %s301 = scalar_lea.vmem [#allocation2], %s300
        %p302 = pneg %p46
        %p303 = pneg %p43
        %p304 = pneg %p67
        %p305 = pneg %p64
        %p306 = pneg %p88
        %p307 = pneg %p85
        %p308 = pneg %p109
        %p309 = pneg %p106
        %p310 = pneg %p130
        %p311 = pneg %p127
        %p312 = pneg %p151
        %p313 = pneg %p148
        %p314 = pneg %p172
        %p315 = pneg %p169
        %p316 = pneg %p193
        %p317 = pneg %p190
        %p318 = pneg %p219
        %p319 = pneg %p216
        %s320 = sand.u32 %s206, 1
        %s321 = scalar_lea.sflag [#allocation4], %s320
        %s322 = sand.u32 %s206, 1
        %s323 = smul.addr %s322, 640
        %s324 = scalar_lea.vmem [#allocation5], %s323
        %s325 = smul.u32 16, %s25
        %s326 = smul.u32 16, %s25
        %v327 = vld [vmem:[%s292] sm:$0xff]
        %v328 = vld [vmem:[%s292 + $0x8] sm:$0xff]
        %v329 = vld [vmem:[%s292 + $0x10] sm:$0xff]
        %v330 = vld [vmem:[%s292 + $0x18] sm:$0xff]
        %v331 = vld [vmem:[%s292 + $0x20] sm:$0xff]
        %v332 = vld [vmem:[%s292 + $0x28] sm:$0xff]
        %v333 = vld [vmem:[%s292 + $0x30] sm:$0xff]
        %v334 = vld [vmem:[%s292 + $0x38] sm:$0xff]
        %v335 = vld [vmem:[%s292 + $0x40] sm:$0xff]
        %v336 = vld [vmem:[%s292 + $0x48] sm:$0xff]
        %v337 = vld [vmem:[%s292 + $0x50] sm:$0xff]
        %v338 = vld [vmem:[%s292 + $0x58] sm:$0xff]
        %v339 = vld [vmem:[%s292 + $0x60] sm:$0xff]
        %v340 = vld [vmem:[%s292 + $0x68] sm:$0xff]
        %v341 = vld [vmem:[%s292 + $0x70] sm:$0xff]
        %v342 = vld [vmem:[%s292 + $0x78] sm:$0xff]
        %v343 = vld [vmem:[%s292 + $0x80] sm:$0xff]
        %v344 = vld [vmem:[%s292 + $0x88] sm:$0xff]
        %v345 = vld [vmem:[%s292 + $0x90] sm:$0xff]
        %v346 = vld [vmem:[%s292 + $0x98] sm:$0xff]
        %v347 = vld [vmem:[%s292 + $0xa0] sm:$0xff]
        %v348 = vld [vmem:[%s292 + $0xa8] sm:$0xff]
        %v349 = vld [vmem:[%s292 + $0xb0] sm:$0xff]
        %v350 = vld [vmem:[%s292 + $0xb8] sm:$0xff]
        %v351 = vld [vmem:[%s292 + $0xc0] sm:$0xff]
        %v352 = vld [vmem:[%s292 + $0xc8] sm:$0xff]
        %v353 = vld [vmem:[%s292 + $0xd0] sm:$0xff]
        %v354 = vld [vmem:[%s292 + $0xd8] sm:$0xff]
        %v355 = vld [vmem:[%s292 + $0xe0] sm:$0xff]
        %v356 = vld [vmem:[%s292 + $0xe8] sm:$0xff]
        %v357 = vld [vmem:[%s292 + $0xf0] sm:$0xff]
        %v358 = vld [vmem:[%s292 + $0xf8] sm:$0xff]
        %v359 = vld [vmem:[%s292 + $0x100] sm:$0xff]
        %v360 = vld [vmem:[%s292 + $0x108] sm:$0xff]
        %v361 = vld [vmem:[%s292 + $0x110] sm:$0xff]
        %v362 = vld [vmem:[%s292 + $0x118] sm:$0xff]
        %v363 = vld [vmem:[%s292 + $0x120] sm:$0xff]
        %v364 = vld [vmem:[%s292 + $0x128] sm:$0xff]
        %v365 = vld [vmem:[%s292 + $0x130] sm:$0xff]
        %v366 = vld [vmem:[%s292 + $0x138] sm:$0xff]
        %v367 = vld [vmem:[%s292 + $0x140] sm:$0xff]
        %v368 = vld [vmem:[%s292 + $0x148] sm:$0xff]
        %v369 = vld [vmem:[%s292 + $0x150] sm:$0xff]
        %v370 = vld [vmem:[%s292 + $0x158] sm:$0xff]
        %v371 = vld [vmem:[%s292 + $0x160] sm:$0xff]
        %v372 = vld [vmem:[%s292 + $0x168] sm:$0xff]
        %v373 = vld [vmem:[%s292 + $0x170] sm:$0xff]
        %v374 = vld [vmem:[%s292 + $0x178] sm:$0xff]
        %v375 = vld [vmem:[%s292 + $0x180] sm:$0xff]
        %v376 = vld [vmem:[%s292 + $0x188] sm:$0xff]
        %v377 = vld [vmem:[%s292 + $0x190] sm:$0xff]
        %v378 = vld [vmem:[%s292 + $0x198] sm:$0xff]
        %v379 = vld [vmem:[%s292 + $0x1a0] sm:$0xff]
        %v380 = vld [vmem:[%s292 + $0x1a8] sm:$0xff]
        %v381 = vld [vmem:[%s292 + $0x1b0] sm:$0xff]
        %v382 = vld [vmem:[%s292 + $0x1b8] sm:$0xff]
        %v383 = vld [vmem:[%s292 + $0x1c0] sm:$0xff]
        %v384 = vld [vmem:[%s292 + $0x1c8] sm:$0xff]
        %v385 = vld [vmem:[%s292 + $0x1d0] sm:$0xff]
        %v386 = vld [vmem:[%s292 + $0x1d8] sm:$0xff]
        %v387 = vld [vmem:[%s292 + $0x1e0] sm:$0xff]
        %v388 = vld [vmem:[%s292 + $0x1e8] sm:$0xff]
        %v389 = vld [vmem:[%s292 + $0x1f0] sm:$0xff]
        %v390 = vld [vmem:[%s292 + $0x1f8] sm:$0xff]
        %v391 = vld [vmem:[%s292 + $0x200] sm:$0xff]
        %v392 = vld [vmem:[%s292 + $0x208] sm:$0xff]
        %v393 = vld [vmem:[%s292 + $0x210] sm:$0xff]
        %v394 = vld [vmem:[%s292 + $0x218] sm:$0xff]
        %v395 = vld [vmem:[%s292 + $0x220] sm:$0xff]
        %v396 = vld [vmem:[%s292 + $0x228] sm:$0xff]
        %v397 = vld [vmem:[%s292 + $0x230] sm:$0xff]
        %v398 = vld [vmem:[%s292 + $0x238] sm:$0xff]
        %v399 = vld [vmem:[%s292 + $0x240] sm:$0xff]
        %v400 = vld [vmem:[%s292 + $0x248] sm:$0xff]
        %v401 = vld [vmem:[%s292 + $0x250] sm:$0xff]
        %v402 = vld [vmem:[%s292 + $0x258] sm:$0xff]
        %v403 = vld [vmem:[%s292 + $0x260] sm:$0xff]
        %v404 = vld [vmem:[%s292 + $0x268] sm:$0xff]
        %v405 = vld [vmem:[%s292 + $0x270] sm:$0xff]
        %v406 = vld [vmem:[%s292 + $0x278] sm:$0xff]
        %v407 = vld [vmem:[%s1] sm:$0xff]
        %v408 = vld [vmem:[%s1 + $0x8] sm:$0xff]
        %v409 = vld [vmem:[%s1 + $0x10] sm:$0xff]
        %v410 = vld [vmem:[%s1 + $0x18] sm:$0xff]
        %v411 = vld [vmem:[%s1 + $0x20] sm:$0xff]
        %v412 = vld [vmem:[%s1 + $0x28] sm:$0xff]
        %v413 = vld [vmem:[%s1 + $0x30] sm:$0xff]
        %v414 = vld [vmem:[%s1 + $0x38] sm:$0xff]
        %v415 = vld [vmem:[%s1 + $0x40] sm:$0xff]
        %v416 = vld [vmem:[%s1 + $0x48] sm:$0xff]
        %v417 = vld [vmem:[%s1 + $0x50] sm:$0xff]
        %v418 = vld [vmem:[%s1 + $0x58] sm:$0xff]
        %v419 = vld [vmem:[%s1 + $0x60] sm:$0xff]
        %v420 = vld [vmem:[%s1 + $0x68] sm:$0xff]
        %v421 = vld [vmem:[%s1 + $0x70] sm:$0xff]
        %v422 = vld [vmem:[%s1 + $0x78] sm:$0xff]
        %423 = vmatprep.subr.mxu0 0.0
        %424 = vmatpush1.msra.mxu0 %v407
        %425 = vmatprep.subr.mxu0 0.0
        %426 = vmatpush1.msra.mxu0 %v408
        %427 = vmatprep.subr.mxu0 0.0
        %428 = vmatpush1.msra.mxu0 %v409
        %429 = vmatprep.subr.mxu0 0.0
        %430 = vmatpush1.msra.mxu0 %v410
        %431 = vmatprep.subr.mxu0 0.0
        %432 = vmatpush1.msra.mxu0 %v411
        %433 = vmatprep.subr.mxu0 0.0
        %434 = vmatpush1.msra.mxu0 %v412
        %435 = vmatprep.subr.mxu0 0.0
        %436 = vmatpush1.msra.mxu0 %v413
        %437 = vmatprep.subr.mxu0 0.0
        %438 = vmatpush1.msra.mxu0 %v414
        %439 = vmatprep.subr.mxu0 0.0
        %440 = vmatpush1.msra.mxu0 %v415
        %441 = vmatprep.subr.mxu0 0.0
        %442 = vmatpush1.msra.mxu0 %v416
        %443 = vmatprep.subr.mxu0 0.0
        %444 = vmatpush1.msra.mxu0 %v417
        %445 = vmatprep.subr.mxu0 0.0
        %446 = vmatpush1.msra.mxu0 %v418
        %447 = vmatprep.subr.mxu0 0.0
        %448 = vmatpush1.msra.mxu0 %v419
        %449 = vmatprep.subr.mxu0 0.0
        %450 = vmatpush1.msra.mxu0 %v420
        %451 = vmatprep.subr.mxu0 0.0
        %452 = vmatpush1.msra.mxu0 %v421
        %453 = vmatprep.subr.mxu0 0.0
        %454 = vmatpush1.msra.mxu0 %v422
        %455 = vmatprep.subr.mxu0 0.0
        %456 = vmatpush1.msra.mxu0 0.0
        %457 = vmatprep.subr.mxu0 0.0
        %458 = vmatpush1.msra.mxu0 0.0
        %459 = vmatprep.subr.mxu0 0.0
        %460 = vmatpush1.msra.mxu0 0.0
        %461 = vmatprep.subr.mxu0 0.0
        %462 = vmatpush1.msra.mxu0 0.0
        %463 = vmatprep.subr.mxu0 0.0
        %464 = vmatpush1.msra.mxu0 0.0
        %465 = vmatprep.subr.mxu0 0.0
        %466 = vmatpush1.msra.mxu0 0.0
        %467 = vmatprep.subr.mxu0 0.0
        %468 = vmatpush1.msra.mxu0 0.0
        %469 = vmatprep.subr.mxu0 0.0
        %470 = vmatpush1.msra.mxu0 0.0
        %471 = vmatprep.subr.mxu0 0.0
        %472 = vmatpush1.msra.mxu0 0.0
        %473 = vmatprep.subr.mxu0 0.0
        %474 = vmatpush1.msra.mxu0 0.0
        %475 = vmatprep.subr.mxu0 0.0
        %476 = vmatpush1.msra.mxu0 0.0
        %477 = vmatprep.subr.mxu0 0.0
        %478 = vmatpush1.msra.mxu0 0.0
        %479 = vmatprep.subr.mxu0 0.0
        %480 = vmatpush1.msra.mxu0 0.0
        %481 = vmatprep.subr.mxu0 0.0
        %482 = vmatpush1.msra.mxu0 0.0
        %483 = vmatprep.subr.mxu0 0.0
        %484 = vmatpush1.msra.mxu0 0.0
        %485 = vmatprep.subr.mxu0 0.0
        %486 = vmatpush1.msra.mxu0 0.0
        %487 = vmatprep.mubr.f32.mxu0 0.0
        %488 = vmatmul.mubr.f32.gmra.mrb[0].mxu0 %v327
        %v489 = vpop.f32.mrb[0].mxu0
        %v490 = vadd.f32 0.0, %v489
        %v491 = vpop.f32.mrb[0].mxu0
        %492 = vmatprep.mubr.f32.mxu0 0.0
        %493 = vmatmul.mubr.f32.gmra.mrb[0].mxu0 %v328
        %v494 = vpop.f32.mrb[0].mxu0
        %v495 = vadd.f32 0.0, %v494
        %v496 = vpop.f32.mrb[0].mxu0
        %497 = vmatprep.mubr.f32.mxu0 0.0
        %498 = vmatmul.mubr.f32.gmra.mrb[0].mxu0 %v329
        %v499 = vpop.f32.mrb[0].mxu0
        %v500 = vadd.f32 0.0, %v499
        %v501 = vpop.f32.mrb[0].mxu0
        %502 = vmatprep.mubr.f32.mxu0 0.0
        %503 = vmatmul.mubr.f32.gmra.mrb[0].mxu0 %v330
        %v504 = vpop.f32.mrb[0].mxu0
        %v505 = vadd.f32 0.0, %v504
        %v506 = vpop.f32.mrb[0].mxu0
        %507 = vmatprep.mubr.f32.mxu0 0.0
        %508 = vmatmul.mubr.f32.gmra.mrb[0].mxu0 %v331
        %v509 = vpop.f32.mrb[0].mxu0
        %v510 = vadd.f32 0.0, %v509
        %v511 = vpop.f32.mrb[0].mxu0
        %512 = vmatprep.mubr.f32.mxu0 0.0
        %513 = vmatmul.mubr.f32.gmra.mrb[0].mxu0 %v332
        %v514 = vpop.f32.mrb[0].mxu0
        %v515 = vadd.f32 0.0, %v514
        %v516 = vpop.f32.mrb[0].mxu0
        %517 = vmatprep.mubr.f32.mxu0 0.0
        %518 = vmatmul.mubr.f32.gmra.mrb[0].mxu0 %v333
        %v519 = vpop.f32.mrb[0].mxu0
        %v520 = vadd.f32 0.0, %v519
        %v521 = vpop.f32.mrb[0].mxu0
        %522 = vmatprep.mubr.f32.mxu0 0.0
        %523 = vmatmul.mubr.f32.gmra.mrb[0].mxu0 %v334
        %v524 = vpop.f32.mrb[0].mxu0
        %v525 = vadd.f32 0.0, %v524
        %v526 = vpop.f32.mrb[0].mxu0
        %527 = vmatprep.mubr.f32.mxu0 0.0
        %528 = vmatmul.mubr.f32.gmra.mrb[0].mxu0 %v335
        %v529 = vpop.f32.mrb[0].mxu0
        %v530 = vadd.f32 0.0, %v529
        %v531 = vpop.f32.mrb[0].mxu0
        %532 = vmatprep.mubr.f32.mxu0 0.0
        %533 = vmatmul.mubr.f32.gmra.mrb[0].mxu0 %v336
        %v534 = vpop.f32.mrb[0].mxu0
        %v535 = vadd.f32 0.0, %v534
        %v536 = vpop.f32.mrb[0].mxu0
        %537 = vmatprep.mubr.f32.mxu0 0.0
        %538 = vmatmul.mubr.f32.gmra.mrb[0].mxu0 %v337
        %v539 = vpop.f32.mrb[0].mxu0
        %v540 = vadd.f32 0.0, %v539
        %v541 = vpop.f32.mrb[0].mxu0
        %542 = vmatprep.mubr.f32.mxu0 0.0
        %543 = vmatmul.mubr.f32.gmra.mrb[0].mxu0 %v338
        %v544 = vpop.f32.mrb[0].mxu0
        %v545 = vadd.f32 0.0, %v544
        %v546 = vpop.f32.mrb[0].mxu0
        %547 = vmatprep.mubr.f32.mxu0 0.0
        %548 = vmatmul.mubr.f32.gmra.mrb[0].mxu0 %v339
        %v549 = vpop.f32.mrb[0].mxu0
        %v550 = vadd.f32 0.0, %v549
        %v551 = vpop.f32.mrb[0].mxu0
        %552 = vmatprep.mubr.f32.mxu0 0.0
        %553 = vmatmul.mubr.f32.gmra.mrb[0].mxu0 %v340
        %v554 = vpop.f32.mrb[0].mxu0
        %v555 = vadd.f32 0.0, %v554
        %v556 = vpop.f32.mrb[0].mxu0
        %557 = vmatprep.mubr.f32.mxu0 0.0
        %558 = vmatmul.mubr.f32.gmra.mrb[0].mxu0 %v341
        %v559 = vpop.f32.mrb[0].mxu0
        %v560 = vadd.f32 0.0, %v559
        %v561 = vpop.f32.mrb[0].mxu0
        %562 = vmatprep.mubr.f32.mxu0 0.0
        %563 = vmatmul.mubr.f32.gmra.mrb[0].mxu0 %v342
        %v564 = vpop.f32.mrb[0].mxu0
        %v565 = vadd.f32 0.0, %v564
        %v566 = vpop.f32.mrb[0].mxu0
        %567 = vmatprep.mubr.f32.mxu0 0.0
        %568 = vmatmul.mubr.f32.gmra.mrb[0].mxu0 %v343
        %v569 = vpop.f32.mrb[0].mxu0
        %v570 = vadd.f32 0.0, %v569
        %v571 = vpop.f32.mrb[0].mxu0
        %572 = vmatprep.mubr.f32.mxu0 0.0
        %573 = vmatmul.mubr.f32.gmra.mrb[0].mxu0 %v344
        %v574 = vpop.f32.mrb[0].mxu0
        %v575 = vadd.f32 0.0, %v574
        %v576 = vpop.f32.mrb[0].mxu0
        %577 = vmatprep.mubr.f32.mxu0 0.0
        %578 = vmatmul.mubr.f32.gmra.mrb[0].mxu0 %v345
        %v579 = vpop.f32.mrb[0].mxu0
        %v580 = vadd.f32 0.0, %v579
        %v581 = vpop.f32.mrb[0].mxu0
        %582 = vmatprep.mubr.f32.mxu0 0.0
        %583 = vmatmul.mubr.f32.gmra.mrb[0].mxu0 %v346
        %v584 = vpop.f32.mrb[0].mxu0
        %v585 = vadd.f32 0.0, %v584
        %v586 = vpop.f32.mrb[0].mxu0
        %587 = vmatprep.mubr.f32.mxu0 0.0
        %588 = vmatmul.mubr.f32.gmra.mrb[0].mxu0 %v347
        %v589 = vpop.f32.mrb[0].mxu0
        %v590 = vadd.f32 0.0, %v589
        %v591 = vpop.f32.mrb[0].mxu0
        %592 = vmatprep.mubr.f32.mxu0 0.0
        %593 = vmatmul.mubr.f32.gmra.mrb[0].mxu0 %v348
        %v594 = vpop.f32.mrb[0].mxu0
        %v595 = vadd.f32 0.0, %v594
        %v596 = vpop.f32.mrb[0].mxu0
        %597 = vmatprep.mubr.f32.mxu0 0.0
        %598 = vmatmul.mubr.f32.gmra.mrb[0].mxu0 %v349
        %v599 = vpop.f32.mrb[0].mxu0
        %v600 = vadd.f32 0.0, %v599
        %v601 = vpop.f32.mrb[0].mxu0
        %602 = vmatprep.mubr.f32.mxu0 0.0
        %603 = vmatmul.mubr.f32.gmra.mrb[0].mxu0 %v350
        %v604 = vpop.f32.mrb[0].mxu0
        %v605 = vadd.f32 0.0, %v604
        %v606 = vpop.f32.mrb[0].mxu0
        %607 = vmatprep.mubr.f32.mxu0 0.0
        %608 = vmatmul.mubr.f32.gmra.mrb[0].mxu0 %v351
        %v609 = vpop.f32.mrb[0].mxu0
        %v610 = vadd.f32 0.0, %v609
        %v611 = vpop.f32.mrb[0].mxu0
        %612 = vmatprep.mubr.f32.mxu0 0.0
        %613 = vmatmul.mubr.f32.gmra.mrb[0].mxu0 %v352
        %v614 = vpop.f32.mrb[0].mxu0
        %v615 = vadd.f32 0.0, %v614
        %v616 = vpop.f32.mrb[0].mxu0
        %617 = vmatprep.mubr.f32.mxu0 0.0
        %618 = vmatmul.mubr.f32.gmra.mrb[0].mxu0 %v353
        %v619 = vpop.f32.mrb[0].mxu0
        %v620 = vadd.f32 0.0, %v619
        %v621 = vpop.f32.mrb[0].mxu0
        %622 = vmatprep.mubr.f32.mxu0 0.0
        %623 = vmatmul.mubr.f32.gmra.mrb[0].mxu0 %v354
        %v624 = vpop.f32.mrb[0].mxu0
        %v625 = vadd.f32 0.0, %v624
        %v626 = vpop.f32.mrb[0].mxu0
        %627 = vmatprep.mubr.f32.mxu0 0.0
        %628 = vmatmul.mubr.f32.gmra.mrb[0].mxu0 %v355
        %v629 = vpop.f32.mrb[0].mxu0
        %v630 = vadd.f32 0.0, %v629
        %v631 = vpop.f32.mrb[0].mxu0
        %632 = vmatprep.mubr.f32.mxu0 0.0
        %633 = vmatmul.mubr.f32.gmra.mrb[0].mxu0 %v356
        %v634 = vpop.f32.mrb[0].mxu0
        %v635 = vadd.f32 0.0, %v634
        %v636 = vpop.f32.mrb[0].mxu0
        %637 = vmatprep.mubr.f32.mxu0 0.0
        %638 = vmatmul.mubr.f32.gmra.mrb[0].mxu0 %v357
        %v639 = vpop.f32.mrb[0].mxu0
        %v640 = vadd.f32 0.0, %v639
        %v641 = vpop.f32.mrb[0].mxu0
        %642 = vmatprep.mubr.f32.mxu0 0.0
        %643 = vmatmul.mubr.f32.gmra.mrb[0].mxu0 %v358
        %v644 = vpop.f32.mrb[0].mxu0
        %v645 = vadd.f32 0.0, %v644
        %v646 = vpop.f32.mrb[0].mxu0
        %647 = vmatprep.mubr.f32.mxu0 0.0
        %648 = vmatmul.mubr.f32.gmra.mrb[0].mxu0 %v359
        %v649 = vpop.f32.mrb[0].mxu0
        %v650 = vadd.f32 0.0, %v649
        %v651 = vpop.f32.mrb[0].mxu0
        %652 = vmatprep.mubr.f32.mxu0 0.0
        %653 = vmatmul.mubr.f32.gmra.mrb[0].mxu0 %v360
        %v654 = vpop.f32.mrb[0].mxu0
        %v655 = vadd.f32 0.0, %v654
        %v656 = vpop.f32.mrb[0].mxu0
        %657 = vmatprep.mubr.f32.mxu0 0.0
        %658 = vmatmul.mubr.f32.gmra.mrb[0].mxu0 %v361
        %v659 = vpop.f32.mrb[0].mxu0
        %v660 = vadd.f32 0.0, %v659
        %v661 = vpop.f32.mrb[0].mxu0
        %662 = vmatprep.mubr.f32.mxu0 0.0
        %663 = vmatmul.mubr.f32.gmra.mrb[0].mxu0 %v362
        %v664 = vpop.f32.mrb[0].mxu0
        %v665 = vadd.f32 0.0, %v664
        %v666 = vpop.f32.mrb[0].mxu0
        %667 = vmatprep.mubr.f32.mxu0 0.0
        %668 = vmatmul.mubr.f32.gmra.mrb[0].mxu0 %v363
        %v669 = vpop.f32.mrb[0].mxu0
        %v670 = vadd.f32 0.0, %v669
        %v671 = vpop.f32.mrb[0].mxu0
        %672 = vmatprep.mubr.f32.mxu0 0.0
        %673 = vmatmul.mubr.f32.gmra.mrb[0].mxu0 %v364
        %v674 = vpop.f32.mrb[0].mxu0
        %v675 = vadd.f32 0.0, %v674
        %v676 = vpop.f32.mrb[0].mxu0
        %677 = vmatprep.mubr.f32.mxu0 0.0
        %678 = vmatmul.mubr.f32.gmra.mrb[0].mxu0 %v365
        %v679 = vpop.f32.mrb[0].mxu0
        %v680 = vadd.f32 0.0, %v679
        %v681 = vpop.f32.mrb[0].mxu0
        %682 = vmatprep.mubr.f32.mxu0 0.0
        %683 = vmatmul.mubr.f32.gmra.mrb[0].mxu0 %v366
        %v684 = vpop.f32.mrb[0].mxu0
        %v685 = vadd.f32 0.0, %v684
        %v686 = vpop.f32.mrb[0].mxu0
        %687 = vmatprep.mubr.f32.mxu0 0.0
        %688 = vmatmul.mubr.f32.gmra.mrb[0].mxu0 %v367
        %v689 = vpop.f32.mrb[0].mxu0
        %v690 = vadd.f32 0.0, %v689
        %v691 = vpop.f32.mrb[0].mxu0
        %692 = vmatprep.mubr.f32.mxu0 0.0
        %693 = vmatmul.mubr.f32.gmra.mrb[0].mxu0 %v368
        %v694 = vpop.f32.mrb[0].mxu0
        %v695 = vadd.f32 0.0, %v694
        %v696 = vpop.f32.mrb[0].mxu0
        %697 = vmatprep.mubr.f32.mxu0 0.0
        %698 = vmatmul.mubr.f32.gmra.mrb[0].mxu0 %v369
        %v699 = vpop.f32.mrb[0].mxu0
        %v700 = vadd.f32 0.0, %v699
        %v701 = vpop.f32.mrb[0].mxu0
        %702 = vmatprep.mubr.f32.mxu0 0.0
        %703 = vmatmul.mubr.f32.gmra.mrb[0].mxu0 %v370
        %v704 = vpop.f32.mrb[0].mxu0
        %v705 = vadd.f32 0.0, %v704
        %v706 = vpop.f32.mrb[0].mxu0
        %707 = vmatprep.mubr.f32.mxu0 0.0
        %708 = vmatmul.mubr.f32.gmra.mrb[0].mxu0 %v371
        %v709 = vpop.f32.mrb[0].mxu0
        %v710 = vadd.f32 0.0, %v709
        %v711 = vpop.f32.mrb[0].mxu0
        %712 = vmatprep.mubr.f32.mxu0 0.0
        %713 = vmatmul.mubr.f32.gmra.mrb[0].mxu0 %v372
        %v714 = vpop.f32.mrb[0].mxu0
        %v715 = vadd.f32 0.0, %v714
        %v716 = vpop.f32.mrb[0].mxu0
        %717 = vmatprep.mubr.f32.mxu0 0.0
        %718 = vmatmul.mubr.f32.gmra.mrb[0].mxu0 %v373
        %v719 = vpop.f32.mrb[0].mxu0
        %v720 = vadd.f32 0.0, %v719
        %v721 = vpop.f32.mrb[0].mxu0
        %722 = vmatprep.mubr.f32.mxu0 0.0
        %723 = vmatmul.mubr.f32.gmra.mrb[0].mxu0 %v374
        %v724 = vpop.f32.mrb[0].mxu0
        %v725 = vadd.f32 0.0, %v724
        %v726 = vpop.f32.mrb[0].mxu0
        %727 = vmatprep.mubr.f32.mxu0 0.0
        %728 = vmatmul.mubr.f32.gmra.mrb[0].mxu0 %v375
        %v729 = vpop.f32.mrb[0].mxu0
        %v730 = vadd.f32 0.0, %v729
        %v731 = vpop.f32.mrb[0].mxu0
        %732 = vmatprep.mubr.f32.mxu0 0.0
        %733 = vmatmul.mubr.f32.gmra.mrb[0].mxu0 %v376
        %v734 = vpop.f32.mrb[0].mxu0
        %v735 = vadd.f32 0.0, %v734
        %v736 = vpop.f32.mrb[0].mxu0
        %737 = vmatprep.mubr.f32.mxu0 0.0
        %738 = vmatmul.mubr.f32.gmra.mrb[0].mxu0 %v377
        %v739 = vpop.f32.mrb[0].mxu0
        %v740 = vadd.f32 0.0, %v739
        %v741 = vpop.f32.mrb[0].mxu0
        %742 = vmatprep.mubr.f32.mxu0 0.0
        %743 = vmatmul.mubr.f32.gmra.mrb[0].mxu0 %v378
        %v744 = vpop.f32.mrb[0].mxu0
        %v745 = vadd.f32 0.0, %v744
        %v746 = vpop.f32.mrb[0].mxu0
        %747 = vmatprep.mubr.f32.mxu0 0.0
        %748 = vmatmul.mubr.f32.gmra.mrb[0].mxu0 %v379
        %v749 = vpop.f32.mrb[0].mxu0
        %v750 = vadd.f32 0.0, %v749
        %v751 = vpop.f32.mrb[0].mxu0
        %752 = vmatprep.mubr.f32.mxu0 0.0
        %753 = vmatmul.mubr.f32.gmra.mrb[0].mxu0 %v380
        %v754 = vpop.f32.mrb[0].mxu0
        %v755 = vadd.f32 0.0, %v754
        %v756 = vpop.f32.mrb[0].mxu0
        %757 = vmatprep.mubr.f32.mxu0 0.0
        %758 = vmatmul.mubr.f32.gmra.mrb[0].mxu0 %v381
        %v759 = vpop.f32.mrb[0].mxu0
        %v760 = vadd.f32 0.0, %v759
        %v761 = vpop.f32.mrb[0].mxu0
        %762 = vmatprep.mubr.f32.mxu0 0.0
        %763 = vmatmul.mubr.f32.gmra.mrb[0].mxu0 %v382
        %v764 = vpop.f32.mrb[0].mxu0
        %v765 = vadd.f32 0.0, %v764
        %v766 = vpop.f32.mrb[0].mxu0
        %767 = vmatprep.mubr.f32.mxu0 0.0
        %768 = vmatmul.mubr.f32.gmra.mrb[0].mxu0 %v383
        %v769 = vpop.f32.mrb[0].mxu0
        %v770 = vadd.f32 0.0, %v769
        %v771 = vpop.f32.mrb[0].mxu0
        %772 = vmatprep.mubr.f32.mxu0 0.0
        %773 = vmatmul.mubr.f32.gmra.mrb[0].mxu0 %v384
        %v774 = vpop.f32.mrb[0].mxu0
        %v775 = vadd.f32 0.0, %v774
        %v776 = vpop.f32.mrb[0].mxu0
        %777 = vmatprep.mubr.f32.mxu0 0.0
        %778 = vmatmul.mubr.f32.gmra.mrb[0].mxu0 %v385
        %v779 = vpop.f32.mrb[0].mxu0
        %v780 = vadd.f32 0.0, %v779
        %v781 = vpop.f32.mrb[0].mxu0
        %782 = vmatprep.mubr.f32.mxu0 0.0
        %783 = vmatmul.mubr.f32.gmra.mrb[0].mxu0 %v386
        %v784 = vpop.f32.mrb[0].mxu0
        %v785 = vadd.f32 0.0, %v784
        %v786 = vpop.f32.mrb[0].mxu0
        %787 = vmatprep.mubr.f32.mxu0 0.0
        %788 = vmatmul.mubr.f32.gmra.mrb[0].mxu0 %v387
        %v789 = vpop.f32.mrb[0].mxu0
        %v790 = vadd.f32 0.0, %v789
        %v791 = vpop.f32.mrb[0].mxu0
        %792 = vmatprep.mubr.f32.mxu0 0.0
        %793 = vmatmul.mubr.f32.gmra.mrb[0].mxu0 %v388
        %v794 = vpop.f32.mrb[0].mxu0
        %v795 = vadd.f32 0.0, %v794
        %v796 = vpop.f32.mrb[0].mxu0
        %797 = vmatprep.mubr.f32.mxu0 0.0
        %798 = vmatmul.mubr.f32.gmra.mrb[0].mxu0 %v389
        %v799 = vpop.f32.mrb[0].mxu0
        %v800 = vadd.f32 0.0, %v799
        %v801 = vpop.f32.mrb[0].mxu0
        %802 = vmatprep.mubr.f32.mxu0 0.0
        %803 = vmatmul.mubr.f32.gmra.mrb[0].mxu0 %v390
        %v804 = vpop.f32.mrb[0].mxu0
        %v805 = vadd.f32 0.0, %v804
        %v806 = vpop.f32.mrb[0].mxu0
        %807 = vmatprep.mubr.f32.mxu0 0.0
        %808 = vmatmul.mubr.f32.gmra.mrb[0].mxu0 %v391
        %v809 = vpop.f32.mrb[0].mxu0
        %v810 = vadd.f32 0.0, %v809
        %v811 = vpop.f32.mrb[0].mxu0
        %812 = vmatprep.mubr.f32.mxu0 0.0
        %813 = vmatmul.mubr.f32.gmra.mrb[0].mxu0 %v392
        %v814 = vpop.f32.mrb[0].mxu0
        %v815 = vadd.f32 0.0, %v814
        %v816 = vpop.f32.mrb[0].mxu0
        %817 = vmatprep.mubr.f32.mxu0 0.0
        %818 = vmatmul.mubr.f32.gmra.mrb[0].mxu0 %v393
        %v819 = vpop.f32.mrb[0].mxu0
        %v820 = vadd.f32 0.0, %v819
        %v821 = vpop.f32.mrb[0].mxu0
        %822 = vmatprep.mubr.f32.mxu0 0.0
        %823 = vmatmul.mubr.f32.gmra.mrb[0].mxu0 %v394
        %v824 = vpop.f32.mrb[0].mxu0
        %v825 = vadd.f32 0.0, %v824
        %v826 = vpop.f32.mrb[0].mxu0
        %827 = vmatprep.mubr.f32.mxu0 0.0
        %828 = vmatmul.mubr.f32.gmra.mrb[0].mxu0 %v395
        %v829 = vpop.f32.mrb[0].mxu0
        %v830 = vadd.f32 0.0, %v829
        %v831 = vpop.f32.mrb[0].mxu0
        %832 = vmatprep.mubr.f32.mxu0 0.0
        %833 = vmatmul.mubr.f32.gmra.mrb[0].mxu0 %v396
        %v834 = vpop.f32.mrb[0].mxu0
        %v835 = vadd.f32 0.0, %v834
        %v836 = vpop.f32.mrb[0].mxu0
        %837 = vmatprep.mubr.f32.mxu0 0.0
        %838 = vmatmul.mubr.f32.gmra.mrb[0].mxu0 %v397
        %v839 = vpop.f32.mrb[0].mxu0
        %v840 = vadd.f32 0.0, %v839
        %v841 = vpop.f32.mrb[0].mxu0
        %842 = vmatprep.mubr.f32.mxu0 0.0
        %843 = vmatmul.mubr.f32.gmra.mrb[0].mxu0 %v398
        %v844 = vpop.f32.mrb[0].mxu0
        %v845 = vadd.f32 0.0, %v844
        %v846 = vpop.f32.mrb[0].mxu0
        %847 = vmatprep.mubr.f32.mxu0 0.0
        %848 = vmatmul.mubr.f32.gmra.mrb[0].mxu0 %v399
        %v849 = vpop.f32.mrb[0].mxu0
        %v850 = vadd.f32 0.0, %v849
        %v851 = vpop.f32.mrb[0].mxu0
        %852 = vmatprep.mubr.f32.mxu0 0.0
        %853 = vmatmul.mubr.f32.gmra.mrb[0].mxu0 %v400
        %v854 = vpop.f32.mrb[0].mxu0
        %v855 = vadd.f32 0.0, %v854
        %v856 = vpop.f32.mrb[0].mxu0
        %857 = vmatprep.mubr.f32.mxu0 0.0
        %858 = vmatmul.mubr.f32.gmra.mrb[0].mxu0 %v401
        %v859 = vpop.f32.mrb[0].mxu0
        %v860 = vadd.f32 0.0, %v859
        %v861 = vpop.f32.mrb[0].mxu0
        %862 = vmatprep.mubr.f32.mxu0 0.0
        %863 = vmatmul.mubr.f32.gmra.mrb[0].mxu0 %v402
        %v864 = vpop.f32.mrb[0].mxu0
        %v865 = vadd.f32 0.0, %v864
        %v866 = vpop.f32.mrb[0].mxu0
        %867 = vmatprep.mubr.f32.mxu0 0.0
        %868 = vmatmul.mubr.f32.gmra.mrb[0].mxu0 %v403
        %v869 = vpop.f32.mrb[0].mxu0
        %v870 = vadd.f32 0.0, %v869
        %v871 = vpop.f32.mrb[0].mxu0
        %872 = vmatprep.mubr.f32.mxu0 0.0
        %873 = vmatmul.mubr.f32.gmra.mrb[0].mxu0 %v404
        %v874 = vpop.f32.mrb[0].mxu0
        %v875 = vadd.f32 0.0, %v874
        %v876 = vpop.f32.mrb[0].mxu0
        %877 = vmatprep.mubr.f32.mxu0 0.0
        %878 = vmatmul.mubr.f32.gmra.mrb[0].mxu0 %v405
        %v879 = vpop.f32.mrb[0].mxu0
        %v880 = vadd.f32 0.0, %v879
        %v881 = vpop.f32.mrb[0].mxu0
        %882 = vmatprep.mubr.f32.mxu0 0.0
        %883 = vmatmul.mubr.f32.gmra.mrb[0].mxu0 %v406
        %v884 = vpop.f32.mrb[0].mxu0
        %v885 = vadd.f32 0.0, %v884
        %v886 = vpop.f32.mrb[0].mxu0
        %887 = vdwg.mxu0
        %v888 = vld [vmem:[%s2] sm:$0xff]
        %v889 = vld [vmem:[%s2 + $0x8] sm:$0xff]
        %v890 = vld [vmem:[%s2 + $0x10] sm:$0xff]
        %v891 = vld [vmem:[%s2 + $0x18] sm:$0xff]
        %v892 = vld [vmem:[%s2 + $0x20] sm:$0xff]
        %894 = vset.pattern.permute.xlu0 0
        %895 = vperm.xlu0 %894, %v888
        %v896 = vpop.permute.xlu0 %895
        %899 = vset.pattern.permute.xlu0 0
        %900 = vperm.xlu0 %899, %v889
        %v901 = vpop.permute.xlu0 %900
        %904 = vset.pattern.permute.xlu0 0
        %905 = vperm.xlu0 %904, %v890
        %v906 = vpop.permute.xlu0 %905
        %909 = vset.pattern.permute.xlu0 0
        %910 = vperm.xlu0 %909, %v891
        %v911 = vpop.permute.xlu0 %910
        %914 = vset.pattern.permute.xlu0 0
        %915 = vperm.xlu0 %914, %v892
        %v916 = vpop.permute.xlu0 %915
        %v918 = vmul.f32 %v490, %v896
        %v919 = vmul.f32 %v495, %v901
        %v920 = vmul.f32 %v500, %v906
        %v921 = vmul.f32 %v505, %v911
        %v922 = vmul.f32 %v510, %v916
        %v923 = vmul.f32 %v515, %v896
        %v924 = vmul.f32 %v520, %v901
        %v925 = vmul.f32 %v525, %v906
        %v926 = vmul.f32 %v530, %v911
        %v927 = vmul.f32 %v535, %v916
        %v928 = vmul.f32 %v540, %v896
        %v929 = vmul.f32 %v545, %v901
        %v930 = vmul.f32 %v550, %v906
        %v931 = vmul.f32 %v555, %v911
        %v932 = vmul.f32 %v560, %v916
        %v933 = vmul.f32 %v565, %v896
        %v934 = vmul.f32 %v570, %v901
        %v935 = vmul.f32 %v575, %v906
        %v936 = vmul.f32 %v580, %v911
        %v937 = vmul.f32 %v585, %v916
        %v938 = vmul.f32 %v590, %v896
        %v939 = vmul.f32 %v595, %v901
        %v940 = vmul.f32 %v600, %v906
        %v941 = vmul.f32 %v605, %v911
        %v942 = vmul.f32 %v610, %v916
        %v943 = vmul.f32 %v615, %v896
        %v944 = vmul.f32 %v620, %v901
        %v945 = vmul.f32 %v625, %v906
        %v946 = vmul.f32 %v630, %v911
        %v947 = vmul.f32 %v635, %v916
        %v948 = vmul.f32 %v640, %v896
        %v949 = vmul.f32 %v645, %v901
        %v950 = vmul.f32 %v650, %v906
        %v951 = vmul.f32 %v655, %v911
        %v952 = vmul.f32 %v660, %v916
        %v953 = vmul.f32 %v665, %v896
        %v954 = vmul.f32 %v670, %v901
        %v955 = vmul.f32 %v675, %v906
        %v956 = vmul.f32 %v680, %v911
        %v957 = vmul.f32 %v685, %v916
        %v958 = vmul.f32 %v690, %v896
        %v959 = vmul.f32 %v695, %v901
        %v960 = vmul.f32 %v700, %v906
        %v961 = vmul.f32 %v705, %v911
        %v962 = vmul.f32 %v710, %v916
        %v963 = vmul.f32 %v715, %v896
        %v964 = vmul.f32 %v720, %v901
        %v965 = vmul.f32 %v725, %v906
        %v966 = vmul.f32 %v730, %v911
        %v967 = vmul.f32 %v735, %v916
        %v968 = vmul.f32 %v740, %v896
        %v969 = vmul.f32 %v745, %v901
        %v970 = vmul.f32 %v750, %v906
        %v971 = vmul.f32 %v755, %v911
        %v972 = vmul.f32 %v760, %v916
        %v973 = vmul.f32 %v765, %v896
        %v974 = vmul.f32 %v770, %v901
        %v975 = vmul.f32 %v775, %v906
        %v976 = vmul.f32 %v780, %v911
        %v977 = vmul.f32 %v785, %v916
        %v978 = vmul.f32 %v790, %v896
        %v979 = vmul.f32 %v795, %v901
        %v980 = vmul.f32 %v800, %v906
        %v981 = vmul.f32 %v805, %v911
        %v982 = vmul.f32 %v810, %v916
        %v983 = vmul.f32 %v815, %v896
        %v984 = vmul.f32 %v820, %v901
        %v985 = vmul.f32 %v825, %v906
        %v986 = vmul.f32 %v830, %v911
        %v987 = vmul.f32 %v835, %v916
        %v988 = vmul.f32 %v840, %v896
        %v989 = vmul.f32 %v845, %v901
        %v990 = vmul.f32 %v850, %v906
        %v991 = vmul.f32 %v855, %v911
        %v992 = vmul.f32 %v860, %v916
        %v993 = vmul.f32 %v865, %v896
        %v994 = vmul.f32 %v870, %v901
        %v995 = vmul.f32 %v875, %v906
        %v996 = vmul.f32 %v880, %v911
        %v997 = vmul.f32 %v885, %v916
        %vm998 = vcmask 64512
        %v999 = vsel %vm998, %v918, 0.0
        %v1000 = vsel %vm998, %v919, 0.0
        %v1001 = vadd.f32 %v999, %v1000
        %v1002 = vsel %vm998, %v920, 0.0
        %v1003 = vadd.f32 %v1001, %v1002
        %v1004 = vsel %vm998, %v921, 0.0
        %v1005 = vadd.f32 %v1003, %v1004
        %v1006 = vsel %vm998, %v922, 0.0
        %v1007 = vadd.f32 %v1005, %v1006
        %v1008 = vrot.slane %v1007, 4
        %v1009 = vadd.f32 %v1007, %v1008
        %v1010 = vrot.slane %v1009, 2
        %v1011 = vadd.f32 %v1009, %v1010
        %v1012 = vrot.slane %v1011, 1
        %v1013 = vadd.f32 %v1011, %v1012
        %v1014 = vsel %vm998, %v923, 0.0
        %v1015 = vsel %vm998, %v924, 0.0
        %v1016 = vadd.f32 %v1014, %v1015
        %v1017 = vsel %vm998, %v925, 0.0
        %v1018 = vadd.f32 %v1016, %v1017
        %v1019 = vsel %vm998, %v926, 0.0
        %v1020 = vadd.f32 %v1018, %v1019
        %v1021 = vsel %vm998, %v927, 0.0
        %v1022 = vadd.f32 %v1020, %v1021
        %v1023 = vrot.slane %v1022, 4
        %v1024 = vadd.f32 %v1022, %v1023
        %v1025 = vrot.slane %v1024, 2
        %v1026 = vadd.f32 %v1024, %v1025
        %v1027 = vrot.slane %v1026, 1
        %v1028 = vadd.f32 %v1026, %v1027
        %v1029 = vsel %vm998, %v928, 0.0
        %v1030 = vsel %vm998, %v929, 0.0
        %v1031 = vadd.f32 %v1029, %v1030
        %v1032 = vsel %vm998, %v930, 0.0
        %v1033 = vadd.f32 %v1031, %v1032
        %v1034 = vsel %vm998, %v931, 0.0
        %v1035 = vadd.f32 %v1033, %v1034
        %v1036 = vsel %vm998, %v932, 0.0
        %v1037 = vadd.f32 %v1035, %v1036
        %v1038 = vrot.slane %v1037, 4
        %v1039 = vadd.f32 %v1037, %v1038
        %v1040 = vrot.slane %v1039, 2
        %v1041 = vadd.f32 %v1039, %v1040
        %v1042 = vrot.slane %v1041, 1
        %v1043 = vadd.f32 %v1041, %v1042
        %v1044 = vsel %vm998, %v933, 0.0
        %v1045 = vsel %vm998, %v934, 0.0
        %v1046 = vadd.f32 %v1044, %v1045
        %v1047 = vsel %vm998, %v935, 0.0
        %v1048 = vadd.f32 %v1046, %v1047
        %v1049 = vsel %vm998, %v936, 0.0
        %v1050 = vadd.f32 %v1048, %v1049
        %v1051 = vsel %vm998, %v937, 0.0
        %v1052 = vadd.f32 %v1050, %v1051
        %v1053 = vrot.slane %v1052, 4
        %v1054 = vadd.f32 %v1052, %v1053
        %v1055 = vrot.slane %v1054, 2
        %v1056 = vadd.f32 %v1054, %v1055
        %v1057 = vrot.slane %v1056, 1
        %v1058 = vadd.f32 %v1056, %v1057
        %v1059 = vsel %vm998, %v938, 0.0
        %v1060 = vsel %vm998, %v939, 0.0
        %v1061 = vadd.f32 %v1059, %v1060
        %v1062 = vsel %vm998, %v940, 0.0
        %v1063 = vadd.f32 %v1061, %v1062
        %v1064 = vsel %vm998, %v941, 0.0
        %v1065 = vadd.f32 %v1063, %v1064
        %v1066 = vsel %vm998, %v942, 0.0
        %v1067 = vadd.f32 %v1065, %v1066
        %v1068 = vrot.slane %v1067, 4
        %v1069 = vadd.f32 %v1067, %v1068
        %v1070 = vrot.slane %v1069, 2
        %v1071 = vadd.f32 %v1069, %v1070
        %v1072 = vrot.slane %v1071, 1
        %v1073 = vadd.f32 %v1071, %v1072
        %v1074 = vsel %vm998, %v943, 0.0
        %v1075 = vsel %vm998, %v944, 0.0
        %v1076 = vadd.f32 %v1074, %v1075
        %v1077 = vsel %vm998, %v945, 0.0
        %v1078 = vadd.f32 %v1076, %v1077
        %v1079 = vsel %vm998, %v946, 0.0
        %v1080 = vadd.f32 %v1078, %v1079
        %v1081 = vsel %vm998, %v947, 0.0
        %v1082 = vadd.f32 %v1080, %v1081
        %v1083 = vrot.slane %v1082, 4
        %v1084 = vadd.f32 %v1082, %v1083
        %v1085 = vrot.slane %v1084, 2
        %v1086 = vadd.f32 %v1084, %v1085
        %v1087 = vrot.slane %v1086, 1
        %v1088 = vadd.f32 %v1086, %v1087
        %v1089 = vsel %vm998, %v948, 0.0
        %v1090 = vsel %vm998, %v949, 0.0
        %v1091 = vadd.f32 %v1089, %v1090
        %v1092 = vsel %vm998, %v950, 0.0
        %v1093 = vadd.f32 %v1091, %v1092
        %v1094 = vsel %vm998, %v951, 0.0
        %v1095 = vadd.f32 %v1093, %v1094
        %v1096 = vsel %vm998, %v952, 0.0
        %v1097 = vadd.f32 %v1095, %v1096
        %v1098 = vrot.slane %v1097, 4
        %v1099 = vadd.f32 %v1097, %v1098
        %v1100 = vrot.slane %v1099, 2
        %v1101 = vadd.f32 %v1099, %v1100
        %v1102 = vrot.slane %v1101, 1
        %v1103 = vadd.f32 %v1101, %v1102
        %v1104 = vsel %vm998, %v953, 0.0
        %v1105 = vsel %vm998, %v954, 0.0
        %v1106 = vadd.f32 %v1104, %v1105
        %v1107 = vsel %vm998, %v955, 0.0
        %v1108 = vadd.f32 %v1106, %v1107
        %v1109 = vsel %vm998, %v956, 0.0
        %v1110 = vadd.f32 %v1108, %v1109
        %v1111 = vsel %vm998, %v957, 0.0
        %v1112 = vadd.f32 %v1110, %v1111
        %v1113 = vrot.slane %v1112, 4
        %v1114 = vadd.f32 %v1112, %v1113
        %v1115 = vrot.slane %v1114, 2
        %v1116 = vadd.f32 %v1114, %v1115
        %v1117 = vrot.slane %v1116, 1
        %v1118 = vadd.f32 %v1116, %v1117
        %v1119 = vsel %vm998, %v958, 0.0
        %v1120 = vsel %vm998, %v959, 0.0
        %v1121 = vadd.f32 %v1119, %v1120
        %v1122 = vsel %vm998, %v960, 0.0
        %v1123 = vadd.f32 %v1121, %v1122
        %v1124 = vsel %vm998, %v961, 0.0
        %v1125 = vadd.f32 %v1123, %v1124
        %v1126 = vsel %vm998, %v962, 0.0
        %v1127 = vadd.f32 %v1125, %v1126
        %v1128 = vrot.slane %v1127, 4
        %v1129 = vadd.f32 %v1127, %v1128
        %v1130 = vrot.slane %v1129, 2
        %v1131 = vadd.f32 %v1129, %v1130
        %v1132 = vrot.slane %v1131, 1
        %v1133 = vadd.f32 %v1131, %v1132
        %v1134 = vsel %vm998, %v963, 0.0
        %v1135 = vsel %vm998, %v964, 0.0
        %v1136 = vadd.f32 %v1134, %v1135
        %v1137 = vsel %vm998, %v965, 0.0
        %v1138 = vadd.f32 %v1136, %v1137
        %v1139 = vsel %vm998, %v966, 0.0
        %v1140 = vadd.f32 %v1138, %v1139
        %v1141 = vsel %vm998, %v967, 0.0
        %v1142 = vadd.f32 %v1140, %v1141
        %v1143 = vrot.slane %v1142, 4
        %v1144 = vadd.f32 %v1142, %v1143
        %v1145 = vrot.slane %v1144, 2
        %v1146 = vadd.f32 %v1144, %v1145
        %v1147 = vrot.slane %v1146, 1
        %v1148 = vadd.f32 %v1146, %v1147
        %v1149 = vsel %vm998, %v968, 0.0
        %v1150 = vsel %vm998, %v969, 0.0
        %v1151 = vadd.f32 %v1149, %v1150
        %v1152 = vsel %vm998, %v970, 0.0
        %v1153 = vadd.f32 %v1151, %v1152
        %v1154 = vsel %vm998, %v971, 0.0
        %v1155 = vadd.f32 %v1153, %v1154
        %v1156 = vsel %vm998, %v972, 0.0
        %v1157 = vadd.f32 %v1155, %v1156
        %v1158 = vrot.slane %v1157, 4
        %v1159 = vadd.f32 %v1157, %v1158
        %v1160 = vrot.slane %v1159, 2
        %v1161 = vadd.f32 %v1159, %v1160
        %v1162 = vrot.slane %v1161, 1
        %v1163 = vadd.f32 %v1161, %v1162
        %v1164 = vsel %vm998, %v973, 0.0
        %v1165 = vsel %vm998, %v974, 0.0
        %v1166 = vadd.f32 %v1164, %v1165
        %v1167 = vsel %vm998, %v975, 0.0
        %v1168 = vadd.f32 %v1166, %v1167
        %v1169 = vsel %vm998, %v976, 0.0
        %v1170 = vadd.f32 %v1168, %v1169
        %v1171 = vsel %vm998, %v977, 0.0
        %v1172 = vadd.f32 %v1170, %v1171
        %v1173 = vrot.slane %v1172, 4
        %v1174 = vadd.f32 %v1172, %v1173
        %v1175 = vrot.slane %v1174, 2
        %v1176 = vadd.f32 %v1174, %v1175
        %v1177 = vrot.slane %v1176, 1
        %v1178 = vadd.f32 %v1176, %v1177
        %v1179 = vsel %vm998, %v978, 0.0
        %v1180 = vsel %vm998, %v979, 0.0
        %v1181 = vadd.f32 %v1179, %v1180
        %v1182 = vsel %vm998, %v980, 0.0
        %v1183 = vadd.f32 %v1181, %v1182
        %v1184 = vsel %vm998, %v981, 0.0
        %v1185 = vadd.f32 %v1183, %v1184
        %v1186 = vsel %vm998, %v982, 0.0
        %v1187 = vadd.f32 %v1185, %v1186
        %v1188 = vrot.slane %v1187, 4
        %v1189 = vadd.f32 %v1187, %v1188
        %v1190 = vrot.slane %v1189, 2
        %v1191 = vadd.f32 %v1189, %v1190
        %v1192 = vrot.slane %v1191, 1
        %v1193 = vadd.f32 %v1191, %v1192
        %v1194 = vsel %vm998, %v983, 0.0
        %v1195 = vsel %vm998, %v984, 0.0
        %v1196 = vadd.f32 %v1194, %v1195
        %v1197 = vsel %vm998, %v985, 0.0
        %v1198 = vadd.f32 %v1196, %v1197
        %v1199 = vsel %vm998, %v986, 0.0
        %v1200 = vadd.f32 %v1198, %v1199
        %v1201 = vsel %vm998, %v987, 0.0
        %v1202 = vadd.f32 %v1200, %v1201
        %v1203 = vrot.slane %v1202, 4
        %v1204 = vadd.f32 %v1202, %v1203
        %v1205 = vrot.slane %v1204, 2
        %v1206 = vadd.f32 %v1204, %v1205
        %v1207 = vrot.slane %v1206, 1
        %v1208 = vadd.f32 %v1206, %v1207
        %v1209 = vsel %vm998, %v988, 0.0
        %v1210 = vsel %vm998, %v989, 0.0
        %v1211 = vadd.f32 %v1209, %v1210
        %v1212 = vsel %vm998, %v990, 0.0
        %v1213 = vadd.f32 %v1211, %v1212
        %v1214 = vsel %vm998, %v991, 0.0
        %v1215 = vadd.f32 %v1213, %v1214
        %v1216 = vsel %vm998, %v992, 0.0
        %v1217 = vadd.f32 %v1215, %v1216
        %v1218 = vrot.slane %v1217, 4
        %v1219 = vadd.f32 %v1217, %v1218
        %v1220 = vrot.slane %v1219, 2
        %v1221 = vadd.f32 %v1219, %v1220
        %v1222 = vrot.slane %v1221, 1
        %v1223 = vadd.f32 %v1221, %v1222
        %v1224 = vsel %vm998, %v993, 0.0
        %v1225 = vsel %vm998, %v994, 0.0
        %v1226 = vadd.f32 %v1224, %v1225
        %v1227 = vsel %vm998, %v995, 0.0
        %v1228 = vadd.f32 %v1226, %v1227
        %v1229 = vsel %vm998, %v996, 0.0
        %v1230 = vadd.f32 %v1228, %v1229
        %v1231 = vsel %vm998, %v997, 0.0
        %v1232 = vadd.f32 %v1230, %v1231
        %v1233 = vrot.slane %v1232, 4
        %v1234 = vadd.f32 %v1232, %v1233
        %v1235 = vrot.slane %v1234, 2
        %v1236 = vadd.f32 %v1234, %v1235
        %v1237 = vrot.slane %v1236, 1
        %v1238 = vadd.f32 %v1236, %v1237
        %1239 = vset.pattern.permute.xlu0 1
        %1240 = vperm.xlu0 %1239, %v888
        %v1241 = vpop.permute.xlu0 %1240
        %1243 = vset.pattern.permute.xlu0 1
        %1244 = vperm.xlu0 %1243, %v889
        %v1245 = vpop.permute.xlu0 %1244
        %1247 = vset.pattern.permute.xlu0 1
        %1248 = vperm.xlu0 %1247, %v890
        %v1249 = vpop.permute.xlu0 %1248
        %1251 = vset.pattern.permute.xlu0 1
        %1252 = vperm.xlu0 %1251, %v891
        %v1253 = vpop.permute.xlu0 %1252
        %1255 = vset.pattern.permute.xlu0 1
        %1256 = vperm.xlu0 %1255, %v892
        %v1257 = vpop.permute.xlu0 %1256
        %v1259 = vmul.f32 %v490, %v1241
        %v1260 = vmul.f32 %v495, %v1245
        %v1261 = vmul.f32 %v500, %v1249
        %v1262 = vmul.f32 %v505, %v1253
        %v1263 = vmul.f32 %v510, %v1257
        %v1264 = vmul.f32 %v515, %v1241
        %v1265 = vmul.f32 %v520, %v1245
        %v1266 = vmul.f32 %v525, %v1249
        %v1267 = vmul.f32 %v530, %v1253
        %v1268 = vmul.f32 %v535, %v1257
        %v1269 = vmul.f32 %v540, %v1241
        %v1270 = vmul.f32 %v545, %v1245
        %v1271 = vmul.f32 %v550, %v1249
        %v1272 = vmul.f32 %v555, %v1253
        %v1273 = vmul.f32 %v560, %v1257
        %v1274 = vmul.f32 %v565, %v1241
        %v1275 = vmul.f32 %v570, %v1245
        %v1276 = vmul.f32 %v575, %v1249
        %v1277 = vmul.f32 %v580, %v1253
        %v1278 = vmul.f32 %v585, %v1257
        %v1279 = vmul.f32 %v590, %v1241
        %v1280 = vmul.f32 %v595, %v1245
        %v1281 = vmul.f32 %v600, %v1249
        %v1282 = vmul.f32 %v605, %v1253
        %v1283 = vmul.f32 %v610, %v1257
        %v1284 = vmul.f32 %v615, %v1241
        %v1285 = vmul.f32 %v620, %v1245
        %v1286 = vmul.f32 %v625, %v1249
        %v1287 = vmul.f32 %v630, %v1253
        %v1288 = vmul.f32 %v635, %v1257
        %v1289 = vmul.f32 %v640, %v1241
        %v1290 = vmul.f32 %v645, %v1245
        %v1291 = vmul.f32 %v650, %v1249
        %v1292 = vmul.f32 %v655, %v1253
        %v1293 = vmul.f32 %v660, %v1257
        %v1294 = vmul.f32 %v665, %v1241
        %v1295 = vmul.f32 %v670, %v1245
        %v1296 = vmul.f32 %v675, %v1249
        %v1297 = vmul.f32 %v680, %v1253
        %v1298 = vmul.f32 %v685, %v1257
        %v1299 = vmul.f32 %v690, %v1241
        %v1300 = vmul.f32 %v695, %v1245
        %v1301 = vmul.f32 %v700, %v1249
        %v1302 = vmul.f32 %v705, %v1253
        %v1303 = vmul.f32 %v710, %v1257
        %v1304 = vmul.f32 %v715, %v1241
        %v1305 = vmul.f32 %v720, %v1245
        %v1306 = vmul.f32 %v725, %v1249
        %v1307 = vmul.f32 %v730, %v1253
        %v1308 = vmul.f32 %v735, %v1257
        %v1309 = vmul.f32 %v740, %v1241
        %v1310 = vmul.f32 %v745, %v1245
        %v1311 = vmul.f32 %v750, %v1249
        %v1312 = vmul.f32 %v755, %v1253
        %v1313 = vmul.f32 %v760, %v1257
        %v1314 = vmul.f32 %v765, %v1241
        %v1315 = vmul.f32 %v770, %v1245
        %v1316 = vmul.f32 %v775, %v1249
        %v1317 = vmul.f32 %v780, %v1253
        %v1318 = vmul.f32 %v785, %v1257
        %v1319 = vmul.f32 %v790, %v1241
        %v1320 = vmul.f32 %v795, %v1245
        %v1321 = vmul.f32 %v800, %v1249
        %v1322 = vmul.f32 %v805, %v1253
        %v1323 = vmul.f32 %v810, %v1257
        %v1324 = vmul.f32 %v815, %v1241
        %v1325 = vmul.f32 %v820, %v1245
        %v1326 = vmul.f32 %v825, %v1249
        %v1327 = vmul.f32 %v830, %v1253
        %v1328 = vmul.f32 %v835, %v1257
        %v1329 = vmul.f32 %v840, %v1241
        %v1330 = vmul.f32 %v845, %v1245
        %v1331 = vmul.f32 %v850, %v1249
        %v1332 = vmul.f32 %v855, %v1253
        %v1333 = vmul.f32 %v860, %v1257
        %v1334 = vmul.f32 %v865, %v1241
        %v1335 = vmul.f32 %v870, %v1245
        %v1336 = vmul.f32 %v875, %v1249
        %v1337 = vmul.f32 %v880, %v1253
        %v1338 = vmul.f32 %v885, %v1257
        %v1339 = vsel %vm998, %v1259, 0.0
        %v1340 = vsel %vm998, %v1260, 0.0
        %v1341 = vadd.f32 %v1339, %v1340
        %v1342 = vsel %vm998, %v1261, 0.0
        %v1343 = vadd.f32 %v1341, %v1342
        %v1344 = vsel %vm998, %v1262, 0.0
        %v1345 = vadd.f32 %v1343, %v1344
        %v1346 = vsel %vm998, %v1263, 0.0
        %v1347 = vadd.f32 %v1345, %v1346
        %v1348 = vrot.slane %v1347, 4
        %v1349 = vadd.f32 %v1347, %v1348
        %v1350 = vrot.slane %v1349, 2
        %v1351 = vadd.f32 %v1349, %v1350
        %v1352 = vrot.slane %v1351, 1
        %v1353 = vadd.f32 %v1351, %v1352
        %v1354 = vsel %vm998, %v1264, 0.0
        %v1355 = vsel %vm998, %v1265, 0.0
        %v1356 = vadd.f32 %v1354, %v1355
        %v1357 = vsel %vm998, %v1266, 0.0
        %v1358 = vadd.f32 %v1356, %v1357
        %v1359 = vsel %vm998, %v1267, 0.0
        %v1360 = vadd.f32 %v1358, %v1359
        %v1361 = vsel %vm998, %v1268, 0.0
        %v1362 = vadd.f32 %v1360, %v1361
        %v1363 = vrot.slane %v1362, 4
        %v1364 = vadd.f32 %v1362, %v1363
        %v1365 = vrot.slane %v1364, 2
        %v1366 = vadd.f32 %v1364, %v1365
        %v1367 = vrot.slane %v1366, 1
        %v1368 = vadd.f32 %v1366, %v1367
        %v1369 = vsel %vm998, %v1269, 0.0
        %v1370 = vsel %vm998, %v1270, 0.0
        %v1371 = vadd.f32 %v1369, %v1370
        %v1372 = vsel %vm998, %v1271, 0.0
        %v1373 = vadd.f32 %v1371, %v1372
        %v1374 = vsel %vm998, %v1272, 0.0
        %v1375 = vadd.f32 %v1373, %v1374
        %v1376 = vsel %vm998, %v1273, 0.0
        %v1377 = vadd.f32 %v1375, %v1376
        %v1378 = vrot.slane %v1377, 4
        %v1379 = vadd.f32 %v1377, %v1378
        %v1380 = vrot.slane %v1379, 2
        %v1381 = vadd.f32 %v1379, %v1380
        %v1382 = vrot.slane %v1381, 1
        %v1383 = vadd.f32 %v1381, %v1382
        %v1384 = vsel %vm998, %v1274, 0.0
        %v1385 = vsel %vm998, %v1275, 0.0
        %v1386 = vadd.f32 %v1384, %v1385
        %v1387 = vsel %vm998, %v1276, 0.0
        %v1388 = vadd.f32 %v1386, %v1387
        %v1389 = vsel %vm998, %v1277, 0.0
        %v1390 = vadd.f32 %v1388, %v1389
        %v1391 = vsel %vm998, %v1278, 0.0
        %v1392 = vadd.f32 %v1390, %v1391
        %v1393 = vrot.slane %v1392, 4
        %v1394 = vadd.f32 %v1392, %v1393
        %v1395 = vrot.slane %v1394, 2
        %v1396 = vadd.f32 %v1394, %v1395
        %v1397 = vrot.slane %v1396, 1
        %v1398 = vadd.f32 %v1396, %v1397
        %v1399 = vsel %vm998, %v1279, 0.0
        %v1400 = vsel %vm998, %v1280, 0.0
        %v1401 = vadd.f32 %v1399, %v1400
        %v1402 = vsel %vm998, %v1281, 0.0
        %v1403 = vadd.f32 %v1401, %v1402
        %v1404 = vsel %vm998, %v1282, 0.0
        %v1405 = vadd.f32 %v1403, %v1404
        %v1406 = vsel %vm998, %v1283, 0.0
        %v1407 = vadd.f32 %v1405, %v1406
        %v1408 = vrot.slane %v1407, 4
        %v1409 = vadd.f32 %v1407, %v1408
        %v1410 = vrot.slane %v1409, 2
        %v1411 = vadd.f32 %v1409, %v1410
        %v1412 = vrot.slane %v1411, 1
        %v1413 = vadd.f32 %v1411, %v1412
        %v1414 = vsel %vm998, %v1284, 0.0
        %v1415 = vsel %vm998, %v1285, 0.0
        %v1416 = vadd.f32 %v1414, %v1415
        %v1417 = vsel %vm998, %v1286, 0.0
        %v1418 = vadd.f32 %v1416, %v1417
        %v1419 = vsel %vm998, %v1287, 0.0
        %v1420 = vadd.f32 %v1418, %v1419
        %v1421 = vsel %vm998, %v1288, 0.0
        %v1422 = vadd.f32 %v1420, %v1421
        %v1423 = vrot.slane %v1422, 4
        %v1424 = vadd.f32 %v1422, %v1423
        %v1425 = vrot.slane %v1424, 2
        %v1426 = vadd.f32 %v1424, %v1425
        %v1427 = vrot.slane %v1426, 1
        %v1428 = vadd.f32 %v1426, %v1427
        %v1429 = vsel %vm998, %v1289, 0.0
        %v1430 = vsel %vm998, %v1290, 0.0
        %v1431 = vadd.f32 %v1429, %v1430
        %v1432 = vsel %vm998, %v1291, 0.0
        %v1433 = vadd.f32 %v1431, %v1432
        %v1434 = vsel %vm998, %v1292, 0.0
        %v1435 = vadd.f32 %v1433, %v1434
        %v1436 = vsel %vm998, %v1293, 0.0
        %v1437 = vadd.f32 %v1435, %v1436
        %v1438 = vrot.slane %v1437, 4
        %v1439 = vadd.f32 %v1437, %v1438
        %v1440 = vrot.slane %v1439, 2
        %v1441 = vadd.f32 %v1439, %v1440
        %v1442 = vrot.slane %v1441, 1
        %v1443 = vadd.f32 %v1441, %v1442
        %v1444 = vsel %vm998, %v1294, 0.0
        %v1445 = vsel %vm998, %v1295, 0.0
        %v1446 = vadd.f32 %v1444, %v1445
        %v1447 = vsel %vm998, %v1296, 0.0
        %v1448 = vadd.f32 %v1446, %v1447
        %v1449 = vsel %vm998, %v1297, 0.0
        %v1450 = vadd.f32 %v1448, %v1449
        %v1451 = vsel %vm998, %v1298, 0.0
        %v1452 = vadd.f32 %v1450, %v1451
        %v1453 = vrot.slane %v1452, 4
        %v1454 = vadd.f32 %v1452, %v1453
        %v1455 = vrot.slane %v1454, 2
        %v1456 = vadd.f32 %v1454, %v1455
        %v1457 = vrot.slane %v1456, 1
        %v1458 = vadd.f32 %v1456, %v1457
        %v1459 = vsel %vm998, %v1299, 0.0
        %v1460 = vsel %vm998, %v1300, 0.0
        %v1461 = vadd.f32 %v1459, %v1460
        %v1462 = vsel %vm998, %v1301, 0.0
        %v1463 = vadd.f32 %v1461, %v1462
        %v1464 = vsel %vm998, %v1302, 0.0
        %v1465 = vadd.f32 %v1463, %v1464
        %v1466 = vsel %vm998, %v1303, 0.0
        %v1467 = vadd.f32 %v1465, %v1466
        %v1468 = vrot.slane %v1467, 4
        %v1469 = vadd.f32 %v1467, %v1468
        %v1470 = vrot.slane %v1469, 2
        %v1471 = vadd.f32 %v1469, %v1470
        %v1472 = vrot.slane %v1471, 1
        %v1473 = vadd.f32 %v1471, %v1472
        %v1474 = vsel %vm998, %v1304, 0.0
        %v1475 = vsel %vm998, %v1305, 0.0
        %v1476 = vadd.f32 %v1474, %v1475
        %v1477 = vsel %vm998, %v1306, 0.0
        %v1478 = vadd.f32 %v1476, %v1477
        %v1479 = vsel %vm998, %v1307, 0.0
        %v1480 = vadd.f32 %v1478, %v1479
        %v1481 = vsel %vm998, %v1308, 0.0
        %v1482 = vadd.f32 %v1480, %v1481
        %v1483 = vrot.slane %v1482, 4
        %v1484 = vadd.f32 %v1482, %v1483
        %v1485 = vrot.slane %v1484, 2
        %v1486 = vadd.f32 %v1484, %v1485
        %v1487 = vrot.slane %v1486, 1
        %v1488 = vadd.f32 %v1486, %v1487
        %v1489 = vsel %vm998, %v1309, 0.0
        %v1490 = vsel %vm998, %v1310, 0.0
        %v1491 = vadd.f32 %v1489, %v1490
        %v1492 = vsel %vm998, %v1311, 0.0
        %v1493 = vadd.f32 %v1491, %v1492
        %v1494 = vsel %vm998, %v1312, 0.0
        %v1495 = vadd.f32 %v1493, %v1494
        %v1496 = vsel %vm998, %v1313, 0.0
        %v1497 = vadd.f32 %v1495, %v1496
        %v1498 = vrot.slane %v1497, 4
        %v1499 = vadd.f32 %v1497, %v1498
        %v1500 = vrot.slane %v1499, 2
        %v1501 = vadd.f32 %v1499, %v1500
        %v1502 = vrot.slane %v1501, 1
        %v1503 = vadd.f32 %v1501, %v1502
        %v1504 = vsel %vm998, %v1314, 0.0
        %v1505 = vsel %vm998, %v1315, 0.0
        %v1506 = vadd.f32 %v1504, %v1505
        %v1507 = vsel %vm998, %v1316, 0.0
        %v1508 = vadd.f32 %v1506, %v1507
        %v1509 = vsel %vm998, %v1317, 0.0
        %v1510 = vadd.f32 %v1508, %v1509
        %v1511 = vsel %vm998, %v1318, 0.0
        %v1512 = vadd.f32 %v1510, %v1511
        %v1513 = vrot.slane %v1512, 4
        %v1514 = vadd.f32 %v1512, %v1513
        %v1515 = vrot.slane %v1514, 2
        %v1516 = vadd.f32 %v1514, %v1515
        %v1517 = vrot.slane %v1516, 1
        %v1518 = vadd.f32 %v1516, %v1517
        %v1519 = vsel %vm998, %v1319, 0.0
        %v1520 = vsel %vm998, %v1320, 0.0
        %v1521 = vadd.f32 %v1519, %v1520
        %v1522 = vsel %vm998, %v1321, 0.0
        %v1523 = vadd.f32 %v1521, %v1522
        %v1524 = vsel %vm998, %v1322, 0.0
        %v1525 = vadd.f32 %v1523, %v1524
        %v1526 = vsel %vm998, %v1323, 0.0
        %v1527 = vadd.f32 %v1525, %v1526
        %v1528 = vrot.slane %v1527, 4
        %v1529 = vadd.f32 %v1527, %v1528
        %v1530 = vrot.slane %v1529, 2
        %v1531 = vadd.f32 %v1529, %v1530
        %v1532 = vrot.slane %v1531, 1
        %v1533 = vadd.f32 %v1531, %v1532
        %v1534 = vsel %vm998, %v1324, 0.0
        %v1535 = vsel %vm998, %v1325, 0.0
        %v1536 = vadd.f32 %v1534, %v1535
        %v1537 = vsel %vm998, %v1326, 0.0
        %v1538 = vadd.f32 %v1536, %v1537
        %v1539 = vsel %vm998, %v1327, 0.0
        %v1540 = vadd.f32 %v1538, %v1539
        %v1541 = vsel %vm998, %v1328, 0.0
        %v1542 = vadd.f32 %v1540, %v1541
        %v1543 = vrot.slane %v1542, 4
        %v1544 = vadd.f32 %v1542, %v1543
        %v1545 = vrot.slane %v1544, 2
        %v1546 = vadd.f32 %v1544, %v1545
        %v1547 = vrot.slane %v1546, 1
        %v1548 = vadd.f32 %v1546, %v1547
        %v1549 = vsel %vm998, %v1329, 0.0
        %v1550 = vsel %vm998, %v1330, 0.0
        %v1551 = vadd.f32 %v1549, %v1550
        %v1552 = vsel %vm998, %v1331, 0.0
        %v1553 = vadd.f32 %v1551, %v1552
        %v1554 = vsel %vm998, %v1332, 0.0
        %v1555 = vadd.f32 %v1553, %v1554
        %v1556 = vsel %vm998, %v1333, 0.0
        %v1557 = vadd.f32 %v1555, %v1556
        %v1558 = vrot.slane %v1557, 4
        %v1559 = vadd.f32 %v1557, %v1558
        %v1560 = vrot.slane %v1559, 2
        %v1561 = vadd.f32 %v1559, %v1560
        %v1562 = vrot.slane %v1561, 1
        %v1563 = vadd.f32 %v1561, %v1562
        %v1564 = vsel %vm998, %v1334, 0.0
        %v1565 = vsel %vm998, %v1335, 0.0
        %v1566 = vadd.f32 %v1564, %v1565
        %v1567 = vsel %vm998, %v1336, 0.0
        %v1568 = vadd.f32 %v1566, %v1567
        %v1569 = vsel %vm998, %v1337, 0.0
        %v1570 = vadd.f32 %v1568, %v1569
        %v1571 = vsel %vm998, %v1338, 0.0
        %v1572 = vadd.f32 %v1570, %v1571
        %v1573 = vrot.slane %v1572, 4
        %v1574 = vadd.f32 %v1572, %v1573
        %v1575 = vrot.slane %v1574, 2
        %v1576 = vadd.f32 %v1574, %v1575
        %v1577 = vrot.slane %v1576, 1
        %v1578 = vadd.f32 %v1576, %v1577
        %1579 = vset.pattern.permute.xlu0 2
        %1580 = vperm.xlu0 %1579, %v888
        %v1581 = vpop.permute.xlu0 %1580
        %1583 = vset.pattern.permute.xlu0 2
        %1584 = vperm.xlu0 %1583, %v889
        %v1585 = vpop.permute.xlu0 %1584
        %1587 = vset.pattern.permute.xlu0 2
        %1588 = vperm.xlu0 %1587, %v890
        %v1589 = vpop.permute.xlu0 %1588
        %1591 = vset.pattern.permute.xlu0 2
        %1592 = vperm.xlu0 %1591, %v891
        %v1593 = vpop.permute.xlu0 %1592
        %1595 = vset.pattern.permute.xlu0 2
        %1596 = vperm.xlu0 %1595, %v892
        %v1597 = vpop.permute.xlu0 %1596
        %v1599 = vmul.f32 %v490, %v1581
        %v1600 = vmul.f32 %v495, %v1585
        %v1601 = vmul.f32 %v500, %v1589
        %v1602 = vmul.f32 %v505, %v1593
        %v1603 = vmul.f32 %v510, %v1597
        %v1604 = vmul.f32 %v515, %v1581
        %v1605 = vmul.f32 %v520, %v1585
        %v1606 = vmul.f32 %v525, %v1589
        %v1607 = vmul.f32 %v530, %v1593
        %v1608 = vmul.f32 %v535, %v1597
        %v1609 = vmul.f32 %v540, %v1581
        %v1610 = vmul.f32 %v545, %v1585
        %v1611 = vmul.f32 %v550, %v1589
        %v1612 = vmul.f32 %v555, %v1593
        %v1613 = vmul.f32 %v560, %v1597
        %v1614 = vmul.f32 %v565, %v1581
        %v1615 = vmul.f32 %v570, %v1585
        %v1616 = vmul.f32 %v575, %v1589
        %v1617 = vmul.f32 %v580, %v1593
        %v1618 = vmul.f32 %v585, %v1597
        %v1619 = vmul.f32 %v590, %v1581
        %v1620 = vmul.f32 %v595, %v1585
        %v1621 = vmul.f32 %v600, %v1589
        %v1622 = vmul.f32 %v605, %v1593
        %v1623 = vmul.f32 %v610, %v1597
        %v1624 = vmul.f32 %v615, %v1581
        %v1625 = vmul.f32 %v620, %v1585
        %v1626 = vmul.f32 %v625, %v1589
        %v1627 = vmul.f32 %v630, %v1593
        %v1628 = vmul.f32 %v635, %v1597
        %v1629 = vmul.f32 %v640, %v1581
        %v1630 = vmul.f32 %v645, %v1585
        %v1631 = vmul.f32 %v650, %v1589
        %v1632 = vmul.f32 %v655, %v1593
        %v1633 = vmul.f32 %v660, %v1597
        %v1634 = vmul.f32 %v665, %v1581
        %v1635 = vmul.f32 %v670, %v1585
        %v1636 = vmul.f32 %v675, %v1589
        %v1637 = vmul.f32 %v680, %v1593
        %v1638 = vmul.f32 %v685, %v1597
        %v1639 = vmul.f32 %v690, %v1581
        %v1640 = vmul.f32 %v695, %v1585
        %v1641 = vmul.f32 %v700, %v1589
        %v1642 = vmul.f32 %v705, %v1593
        %v1643 = vmul.f32 %v710, %v1597
        %v1644 = vmul.f32 %v715, %v1581
        %v1645 = vmul.f32 %v720, %v1585
        %v1646 = vmul.f32 %v725, %v1589
        %v1647 = vmul.f32 %v730, %v1593
        %v1648 = vmul.f32 %v735, %v1597
        %v1649 = vmul.f32 %v740, %v1581
        %v1650 = vmul.f32 %v745, %v1585
        %v1651 = vmul.f32 %v750, %v1589
        %v1652 = vmul.f32 %v755, %v1593
        %v1653 = vmul.f32 %v760, %v1597
        %v1654 = vmul.f32 %v765, %v1581
        %v1655 = vmul.f32 %v770, %v1585
        %v1656 = vmul.f32 %v775, %v1589
        %v1657 = vmul.f32 %v780, %v1593
        %v1658 = vmul.f32 %v785, %v1597
        %v1659 = vmul.f32 %v790, %v1581
        %v1660 = vmul.f32 %v795, %v1585
        %v1661 = vmul.f32 %v800, %v1589
        %v1662 = vmul.f32 %v805, %v1593
        %v1663 = vmul.f32 %v810, %v1597
        %v1664 = vmul.f32 %v815, %v1581
        %v1665 = vmul.f32 %v820, %v1585
        %v1666 = vmul.f32 %v825, %v1589
        %v1667 = vmul.f32 %v830, %v1593
        %v1668 = vmul.f32 %v835, %v1597
        %v1669 = vmul.f32 %v840, %v1581
        %v1670 = vmul.f32 %v845, %v1585
        %v1671 = vmul.f32 %v850, %v1589
        %v1672 = vmul.f32 %v855, %v1593
        %v1673 = vmul.f32 %v860, %v1597
        %v1674 = vmul.f32 %v865, %v1581
        %v1675 = vmul.f32 %v870, %v1585
        %v1676 = vmul.f32 %v875, %v1589
        %v1677 = vmul.f32 %v880, %v1593
        %v1678 = vmul.f32 %v885, %v1597
        %v1679 = vsel %vm998, %v1599, 0.0
        %v1680 = vsel %vm998, %v1600, 0.0
        %v1681 = vadd.f32 %v1679, %v1680
        %v1682 = vsel %vm998, %v1601, 0.0
        %v1683 = vadd.f32 %v1681, %v1682
        %v1684 = vsel %vm998, %v1602, 0.0
        %v1685 = vadd.f32 %v1683, %v1684
        %v1686 = vsel %vm998, %v1603, 0.0
        %v1687 = vadd.f32 %v1685, %v1686
        %v1688 = vrot.slane %v1687, 4
        %v1689 = vadd.f32 %v1687, %v1688
        %v1690 = vrot.slane %v1689, 2
        %v1691 = vadd.f32 %v1689, %v1690
        %v1692 = vrot.slane %v1691, 1
        %v1693 = vadd.f32 %v1691, %v1692
        %v1694 = vsel %vm998, %v1604, 0.0
        %v1695 = vsel %vm998, %v1605, 0.0
        %v1696 = vadd.f32 %v1694, %v1695
        %v1697 = vsel %vm998, %v1606, 0.0
        %v1698 = vadd.f32 %v1696, %v1697
        %v1699 = vsel %vm998, %v1607, 0.0
        %v1700 = vadd.f32 %v1698, %v1699
        %v1701 = vsel %vm998, %v1608, 0.0
        %v1702 = vadd.f32 %v1700, %v1701
        %v1703 = vrot.slane %v1702, 4
        %v1704 = vadd.f32 %v1702, %v1703
        %v1705 = vrot.slane %v1704, 2
        %v1706 = vadd.f32 %v1704, %v1705
        %v1707 = vrot.slane %v1706, 1
        %v1708 = vadd.f32 %v1706, %v1707
        %v1709 = vsel %vm998, %v1609, 0.0
        %v1710 = vsel %vm998, %v1610, 0.0
        %v1711 = vadd.f32 %v1709, %v1710
        %v1712 = vsel %vm998, %v1611, 0.0
        %v1713 = vadd.f32 %v1711, %v1712
        %v1714 = vsel %vm998, %v1612, 0.0
        %v1715 = vadd.f32 %v1713, %v1714
        %v1716 = vsel %vm998, %v1613, 0.0
        %v1717 = vadd.f32 %v1715, %v1716
        %v1718 = vrot.slane %v1717, 4
        %v1719 = vadd.f32 %v1717, %v1718
        %v1720 = vrot.slane %v1719, 2
        %v1721 = vadd.f32 %v1719, %v1720
        %v1722 = vrot.slane %v1721, 1
        %v1723 = vadd.f32 %v1721, %v1722
        %v1724 = vsel %vm998, %v1614, 0.0
        %v1725 = vsel %vm998, %v1615, 0.0
        %v1726 = vadd.f32 %v1724, %v1725
        %v1727 = vsel %vm998, %v1616, 0.0
        %v1728 = vadd.f32 %v1726, %v1727
        %v1729 = vsel %vm998, %v1617, 0.0
        %v1730 = vadd.f32 %v1728, %v1729
        %v1731 = vsel %vm998, %v1618, 0.0
        %v1732 = vadd.f32 %v1730, %v1731
        %v1733 = vrot.slane %v1732, 4
        %v1734 = vadd.f32 %v1732, %v1733
        %v1735 = vrot.slane %v1734, 2
        %v1736 = vadd.f32 %v1734, %v1735
        %v1737 = vrot.slane %v1736, 1
        %v1738 = vadd.f32 %v1736, %v1737
        %v1739 = vsel %vm998, %v1619, 0.0
        %v1740 = vsel %vm998, %v1620, 0.0
        %v1741 = vadd.f32 %v1739, %v1740
        %v1742 = vsel %vm998, %v1621, 0.0
        %v1743 = vadd.f32 %v1741, %v1742
        %v1744 = vsel %vm998, %v1622, 0.0
        %v1745 = vadd.f32 %v1743, %v1744
        %v1746 = vsel %vm998, %v1623, 0.0
        %v1747 = vadd.f32 %v1745, %v1746
        %v1748 = vrot.slane %v1747, 4
        %v1749 = vadd.f32 %v1747, %v1748
        %v1750 = vrot.slane %v1749, 2
        %v1751 = vadd.f32 %v1749, %v1750
        %v1752 = vrot.slane %v1751, 1
        %v1753 = vadd.f32 %v1751, %v1752
        %v1754 = vsel %vm998, %v1624, 0.0
        %v1755 = vsel %vm998, %v1625, 0.0
        %v1756 = vadd.f32 %v1754, %v1755
        %v1757 = vsel %vm998, %v1626, 0.0
        %v1758 = vadd.f32 %v1756, %v1757
        %v1759 = vsel %vm998, %v1627, 0.0
        %v1760 = vadd.f32 %v1758, %v1759
        %v1761 = vsel %vm998, %v1628, 0.0
        %v1762 = vadd.f32 %v1760, %v1761
        %v1763 = vrot.slane %v1762, 4
        %v1764 = vadd.f32 %v1762, %v1763
        %v1765 = vrot.slane %v1764, 2
        %v1766 = vadd.f32 %v1764, %v1765
        %v1767 = vrot.slane %v1766, 1
        %v1768 = vadd.f32 %v1766, %v1767
        %v1769 = vsel %vm998, %v1629, 0.0
        %v1770 = vsel %vm998, %v1630, 0.0
        %v1771 = vadd.f32 %v1769, %v1770
        %v1772 = vsel %vm998, %v1631, 0.0
        %v1773 = vadd.f32 %v1771, %v1772
        %v1774 = vsel %vm998, %v1632, 0.0
        %v1775 = vadd.f32 %v1773, %v1774
        %v1776 = vsel %vm998, %v1633, 0.0
        %v1777 = vadd.f32 %v1775, %v1776
        %v1778 = vrot.slane %v1777, 4
        %v1779 = vadd.f32 %v1777, %v1778
        %v1780 = vrot.slane %v1779, 2
        %v1781 = vadd.f32 %v1779, %v1780
        %v1782 = vrot.slane %v1781, 1
        %v1783 = vadd.f32 %v1781, %v1782
        %v1784 = vsel %vm998, %v1634, 0.0
        %v1785 = vsel %vm998, %v1635, 0.0
        %v1786 = vadd.f32 %v1784, %v1785
        %v1787 = vsel %vm998, %v1636, 0.0
        %v1788 = vadd.f32 %v1786, %v1787
        %v1789 = vsel %vm998, %v1637, 0.0
        %v1790 = vadd.f32 %v1788, %v1789
        %v1791 = vsel %vm998, %v1638, 0.0
        %v1792 = vadd.f32 %v1790, %v1791
        %v1793 = vrot.slane %v1792, 4
        %v1794 = vadd.f32 %v1792, %v1793
        %v1795 = vrot.slane %v1794, 2
        %v1796 = vadd.f32 %v1794, %v1795
        %v1797 = vrot.slane %v1796, 1
        %v1798 = vadd.f32 %v1796, %v1797
        %v1799 = vsel %vm998, %v1639, 0.0
        %v1800 = vsel %vm998, %v1640, 0.0
        %v1801 = vadd.f32 %v1799, %v1800
        %v1802 = vsel %vm998, %v1641, 0.0
        %v1803 = vadd.f32 %v1801, %v1802
        %v1804 = vsel %vm998, %v1642, 0.0
        %v1805 = vadd.f32 %v1803, %v1804
        %v1806 = vsel %vm998, %v1643, 0.0
        %v1807 = vadd.f32 %v1805, %v1806
        %v1808 = vrot.slane %v1807, 4
        %v1809 = vadd.f32 %v1807, %v1808
        %v1810 = vrot.slane %v1809, 2
        %v1811 = vadd.f32 %v1809, %v1810
        %v1812 = vrot.slane %v1811, 1
        %v1813 = vadd.f32 %v1811, %v1812
        %v1814 = vsel %vm998, %v1644, 0.0
        %v1815 = vsel %vm998, %v1645, 0.0
        %v1816 = vadd.f32 %v1814, %v1815
        %v1817 = vsel %vm998, %v1646, 0.0
        %v1818 = vadd.f32 %v1816, %v1817
        %v1819 = vsel %vm998, %v1647, 0.0
        %v1820 = vadd.f32 %v1818, %v1819
        %v1821 = vsel %vm998, %v1648, 0.0
        %v1822 = vadd.f32 %v1820, %v1821
        %v1823 = vrot.slane %v1822, 4
        %v1824 = vadd.f32 %v1822, %v1823
        %v1825 = vrot.slane %v1824, 2
        %v1826 = vadd.f32 %v1824, %v1825
        %v1827 = vrot.slane %v1826, 1
        %v1828 = vadd.f32 %v1826, %v1827
        %v1829 = vsel %vm998, %v1649, 0.0
        %v1830 = vsel %vm998, %v1650, 0.0
        %v1831 = vadd.f32 %v1829, %v1830
        %v1832 = vsel %vm998, %v1651, 0.0
        %v1833 = vadd.f32 %v1831, %v1832
        %v1834 = vsel %vm998, %v1652, 0.0
        %v1835 = vadd.f32 %v1833, %v1834
        %v1836 = vsel %vm998, %v1653, 0.0
        %v1837 = vadd.f32 %v1835, %v1836
        %v1838 = vrot.slane %v1837, 4
        %v1839 = vadd.f32 %v1837, %v1838
        %v1840 = vrot.slane %v1839, 2
        %v1841 = vadd.f32 %v1839, %v1840
        %v1842 = vrot.slane %v1841, 1
        %v1843 = vadd.f32 %v1841, %v1842
        %v1844 = vsel %vm998, %v1654, 0.0
        %v1845 = vsel %vm998, %v1655, 0.0
        %v1846 = vadd.f32 %v1844, %v1845
        %v1847 = vsel %vm998, %v1656, 0.0
        %v1848 = vadd.f32 %v1846, %v1847
        %v1849 = vsel %vm998, %v1657, 0.0
        %v1850 = vadd.f32 %v1848, %v1849
        %v1851 = vsel %vm998, %v1658, 0.0
        %v1852 = vadd.f32 %v1850, %v1851
        %v1853 = vrot.slane %v1852, 4
        %v1854 = vadd.f32 %v1852, %v1853
        %v1855 = vrot.slane %v1854, 2
        %v1856 = vadd.f32 %v1854, %v1855
        %v1857 = vrot.slane %v1856, 1
        %v1858 = vadd.f32 %v1856, %v1857
        %v1859 = vsel %vm998, %v1659, 0.0
        %v1860 = vsel %vm998, %v1660, 0.0
        %v1861 = vadd.f32 %v1859, %v1860
        %v1862 = vsel %vm998, %v1661, 0.0
        %v1863 = vadd.f32 %v1861, %v1862
        %v1864 = vsel %vm998, %v1662, 0.0
        %v1865 = vadd.f32 %v1863, %v1864
        %v1866 = vsel %vm998, %v1663, 0.0
        %v1867 = vadd.f32 %v1865, %v1866
        %v1868 = vrot.slane %v1867, 4
        %v1869 = vadd.f32 %v1867, %v1868
        %v1870 = vrot.slane %v1869, 2
        %v1871 = vadd.f32 %v1869, %v1870
        %v1872 = vrot.slane %v1871, 1
        %v1873 = vadd.f32 %v1871, %v1872
        %v1874 = vsel %vm998, %v1664, 0.0
        %v1875 = vsel %vm998, %v1665, 0.0
        %v1876 = vadd.f32 %v1874, %v1875
        %v1877 = vsel %vm998, %v1666, 0.0
        %v1878 = vadd.f32 %v1876, %v1877
        %v1879 = vsel %vm998, %v1667, 0.0
        %v1880 = vadd.f32 %v1878, %v1879
        %v1881 = vsel %vm998, %v1668, 0.0
        %v1882 = vadd.f32 %v1880, %v1881
        %v1883 = vrot.slane %v1882, 4
        %v1884 = vadd.f32 %v1882, %v1883
        %v1885 = vrot.slane %v1884, 2
        %v1886 = vadd.f32 %v1884, %v1885
        %v1887 = vrot.slane %v1886, 1
        %v1888 = vadd.f32 %v1886, %v1887
        %v1889 = vsel %vm998, %v1669, 0.0
        %v1890 = vsel %vm998, %v1670, 0.0
        %v1891 = vadd.f32 %v1889, %v1890
        %v1892 = vsel %vm998, %v1671, 0.0
        %v1893 = vadd.f32 %v1891, %v1892
        %v1894 = vsel %vm998, %v1672, 0.0
        %v1895 = vadd.f32 %v1893, %v1894
        %v1896 = vsel %vm998, %v1673, 0.0
        %v1897 = vadd.f32 %v1895, %v1896
        %v1898 = vrot.slane %v1897, 4
        %v1899 = vadd.f32 %v1897, %v1898
        %v1900 = vrot.slane %v1899, 2
        %v1901 = vadd.f32 %v1899, %v1900
        %v1902 = vrot.slane %v1901, 1
        %v1903 = vadd.f32 %v1901, %v1902
        %v1904 = vsel %vm998, %v1674, 0.0
        %v1905 = vsel %vm998, %v1675, 0.0
        %v1906 = vadd.f32 %v1904, %v1905
        %v1907 = vsel %vm998, %v1676, 0.0
        %v1908 = vadd.f32 %v1906, %v1907
        %v1909 = vsel %vm998, %v1677, 0.0
        %v1910 = vadd.f32 %v1908, %v1909
        %v1911 = vsel %vm998, %v1678, 0.0
        %v1912 = vadd.f32 %v1910, %v1911
        %v1913 = vrot.slane %v1912, 4
        %v1914 = vadd.f32 %v1912, %v1913
        %v1915 = vrot.slane %v1914, 2
        %v1916 = vadd.f32 %v1914, %v1915
        %v1917 = vrot.slane %v1916, 1
        %v1918 = vadd.f32 %v1916, %v1917
        %vm1935 = vcmask 1041409
        %v1936 = vsel %vm1935, %v1028, %v1013
        %vm1937 = vcmask 1042434
        %v1938 = vsel %vm1937, %v1043, %v1936
        %vm1939 = vcmask 1043459
        %v1940 = vsel %vm1939, %v1058, %v1938
        %vm1941 = vcmask 1044484
        %v1942 = vsel %vm1941, %v1073, %v1940
        %vm1943 = vcmask 1045509
        %v1944 = vsel %vm1943, %v1088, %v1942
        %vm1945 = vcmask 1046534
        %v1946 = vsel %vm1945, %v1103, %v1944
        %vm1947 = vcmask 1047559
        %v1948 = vsel %vm1947, %v1118, %v1946
        %v1949 = vsel %vm1935, %v1148, %v1133
        %v1950 = vsel %vm1937, %v1163, %v1949
        %v1951 = vsel %vm1939, %v1178, %v1950
        %v1952 = vsel %vm1941, %v1193, %v1951
        %v1953 = vsel %vm1943, %v1208, %v1952
        %v1954 = vsel %vm1945, %v1223, %v1953
        %v1955 = vsel %vm1947, %v1238, %v1954
        %v1974 = vsel %vm1935, %v1368, %v1353
        %v1975 = vsel %vm1937, %v1383, %v1974
        %v1976 = vsel %vm1939, %v1398, %v1975
        %v1977 = vsel %vm1941, %v1413, %v1976
        %v1978 = vsel %vm1943, %v1428, %v1977
        %v1979 = vsel %vm1945, %v1443, %v1978
        %v1980 = vsel %vm1947, %v1458, %v1979
        %v1981 = vsel %vm1935, %v1488, %v1473
        %v1982 = vsel %vm1937, %v1503, %v1981
        %v1983 = vsel %vm1939, %v1518, %v1982
        %v1984 = vsel %vm1941, %v1533, %v1983
        %v1985 = vsel %vm1943, %v1548, %v1984
        %v1986 = vsel %vm1945, %v1563, %v1985
        %v1987 = vsel %vm1947, %v1578, %v1986
        %1988 = vrot.lane.b32.xlu0 %v1980, 8
        %v1989 = vpop.permute.xlu0 %1988
        %1990 = vrot.lane.b32.xlu0 %v1987, 8
        %v1991 = vpop.permute.xlu0 %1990
        %v2010 = vsel %vm1935, %v1708, %v1693
        %v2011 = vsel %vm1937, %v1723, %v2010
        %v2012 = vsel %vm1939, %v1738, %v2011
        %v2013 = vsel %vm1941, %v1753, %v2012
        %v2014 = vsel %vm1943, %v1768, %v2013
        %v2015 = vsel %vm1945, %v1783, %v2014
        %v2016 = vsel %vm1947, %v1798, %v2015
        %v2017 = vsel %vm1935, %v1828, %v1813
        %v2018 = vsel %vm1937, %v1843, %v2017
        %v2019 = vsel %vm1939, %v1858, %v2018
        %v2020 = vsel %vm1941, %v1873, %v2019
        %v2021 = vsel %vm1943, %v1888, %v2020
        %v2022 = vsel %vm1945, %v1903, %v2021
        %v2023 = vsel %vm1947, %v1918, %v2022
        %2024 = vrot.lane.b32.xlu0 %v2016, 16
        %v2025 = vpop.permute.xlu0 %2024
        %2026 = vrot.lane.b32.xlu0 %v2023, 16
        %v2027 = vpop.permute.xlu0 %2026
        %v2030 = vsel %vm998, %v1948, %v1989
        %v2031 = vsel %vm998, %v1955, %v1991
        %vm2032 = vcmask 130048
        %v2033 = vsel %vm2032, %v2030, %v2025
        %v2034 = vsel %vm2032, %v2031, %v2027
        %v2035 = vld [vmem:[%s4] sm:$0xf]
        %v2036 = vld [vmem:[%s5] sm:$0xf]
        %2038 = vset.pattern.permute.xlu0 0
        %2039 = vperm.xlu0 %2038, %v2036
        %v2040 = vpop.permute.xlu0 %2039
        %v2043 = vsel %vm2032, %v2035, 0
        %2045 = vmatprep.subr.mxu0 0.0
        %2046 = vmatpush1.msra.mxu0 %v2033
        %2047 = vmatprep.subr.mxu0 0.0
        %2048 = vmatpush1.msra.mxu0 %v2034
        %2049 = vmatprep.subr.mxu0 0.0
        %2050 = vmatpush1.msra.mxu0 0.0
        %2051 = vmatprep.subr.mxu0 0.0
        %2052 = vmatpush1.msra.mxu0 0.0
        %2053 = vmatprep.subr.mxu0 0.0
        %2054 = vmatpush1.msra.mxu0 0.0
        %2055 = vmatprep.subr.mxu0 0.0
        %2056 = vmatpush1.msra.mxu0 0.0
        %2057 = vmatprep.subr.mxu0 0.0
        %2058 = vmatpush1.msra.mxu0 0.0
        %2059 = vmatprep.subr.mxu0 0.0
        %2060 = vmatpush1.msra.mxu0 0.0
        %2061 = vmatprep.subr.mxu0 0.0
        %2062 = vmatpush1.msra.mxu0 0.0
        %2063 = vmatprep.subr.mxu0 0.0
        %2064 = vmatpush1.msra.mxu0 0.0
        %2065 = vmatprep.subr.mxu0 0.0
        %2066 = vmatpush1.msra.mxu0 0.0
        %2067 = vmatprep.subr.mxu0 0.0
        %2068 = vmatpush1.msra.mxu0 0.0
        %2069 = vmatprep.subr.mxu0 0.0
        %2070 = vmatpush1.msra.mxu0 0.0
        %2071 = vmatprep.subr.mxu0 0.0
        %2072 = vmatpush1.msra.mxu0 0.0
        %2073 = vmatprep.subr.mxu0 0.0
        %2074 = vmatpush1.msra.mxu0 0.0
        %2075 = vmatprep.subr.mxu0 0.0
        %2076 = vmatpush1.msra.mxu0 0.0
        %2077 = vmatprep.subr.mxu0 0.0
        %2078 = vmatpush1.msra.mxu0 0.0
        %2079 = vmatprep.subr.mxu0 0.0
        %2080 = vmatpush1.msra.mxu0 0.0
        %2081 = vmatprep.subr.mxu0 0.0
        %2082 = vmatpush1.msra.mxu0 0.0
        %2083 = vmatprep.subr.mxu0 0.0
        %2084 = vmatpush1.msra.mxu0 0.0
        %2085 = vmatprep.subr.mxu0 0.0
        %2086 = vmatpush1.msra.mxu0 0.0
        %2087 = vmatprep.subr.mxu0 0.0
        %2088 = vmatpush1.msra.mxu0 0.0
        %2089 = vmatprep.subr.mxu0 0.0
        %2090 = vmatpush1.msra.mxu0 0.0
        %2091 = vmatprep.subr.mxu0 0.0
        %2092 = vmatpush1.msra.mxu0 0.0
        %2093 = vmatprep.subr.mxu0 0.0
        %2094 = vmatpush1.msra.mxu0 0.0
        %2095 = vmatprep.subr.mxu0 0.0
        %2096 = vmatpush1.msra.mxu0 0.0
        %2097 = vmatprep.subr.mxu0 0.0
        %2098 = vmatpush1.msra.mxu0 0.0
        %2099 = vmatprep.subr.mxu0 0.0
        %2100 = vmatpush1.msra.mxu0 0.0
        %2101 = vmatprep.subr.mxu0 0.0
        %2102 = vmatpush1.msra.mxu0 0.0
        %2103 = vmatprep.subr.mxu0 0.0
        %2104 = vmatpush1.msra.mxu0 0.0
        %2105 = vmatprep.subr.mxu0 0.0
        %2106 = vmatpush1.msra.mxu0 0.0
        %2107 = vmatprep.subr.mxu0 0.0
        %2108 = vmatpush1.msra.mxu0 0.0
        %2109 = vmatprep.mubr.f32.mxu0 0.0
        %2110 = vmatmul.mubr.f32.gmra.mrb[0].mxu0 %v2043
        %v2111 = vpop.f32.mrb[0].mxu0
        %v2112 = vadd.f32 %v2040, %v2111
        %v2113 = vpop.f32.mrb[0].mxu0
        %2114 = vdwg.mxu0
        %v2115 = vmax.f32 %v2112, 0.0
        %v2116 = vld [vmem:[%s6] sm:$0xff]
        %v2117 = vld [vmem:[%s6 + $0x8] sm:$0xff]
        %v2118 = vld [vmem:[%s7] sm:$0xff]
        %v2119 = vld [vmem:[%s7 + $0x8] sm:$0xff]
        %2121 = vset.pattern.permute.xlu0 0
        %2122 = vperm.xlu0 %2121, %v2118
        %v2123 = vpop.permute.xlu0 %2122
        %2126 = vset.pattern.permute.xlu0 0
        %2127 = vperm.xlu0 %2126, %v2119
        %v2128 = vpop.permute.xlu0 %2127
        %vm2130 = vcmask 31744
        %v2132 = vsel %vm2130, %v2116, 0
        %v2135 = vsel %vm2130, %v2117, 0
        %vm2137 = vcmask 1043456
        %v2139 = vsel %vm2137, %v2115, 0
        %2141 = vmatprep.subr.mxu0 0.0
        %2142 = vmatpush1.msra.mxu0 %v2139
        %2143 = vmatprep.subr.mxu0 0.0
        %2144 = vmatpush1.msra.mxu0 0.0
        %2145 = vmatprep.subr.mxu0 0.0
        %2146 = vmatpush1.msra.mxu0 0.0
        %2147 = vmatprep.subr.mxu0 0.0
        %2148 = vmatpush1.msra.mxu0 0.0
        %2149 = vmatprep.subr.mxu0 0.0
        %2150 = vmatpush1.msra.mxu0 0.0
        %2151 = vmatprep.subr.mxu0 0.0
        %2152 = vmatpush1.msra.mxu0 0.0
        %2153 = vmatprep.subr.mxu0 0.0
        %2154 = vmatpush1.msra.mxu0 0.0
        %2155 = vmatprep.subr.mxu0 0.0
        %2156 = vmatpush1.msra.mxu0 0.0
        %2157 = vmatprep.subr.mxu0 0.0
        %2158 = vmatpush1.msra.mxu0 0.0
        %2159 = vmatprep.subr.mxu0 0.0
        %2160 = vmatpush1.msra.mxu0 0.0
        %2161 = vmatprep.subr.mxu0 0.0
        %2162 = vmatpush1.msra.mxu0 0.0
        %2163 = vmatprep.subr.mxu0 0.0
        %2164 = vmatpush1.msra.mxu0 0.0
        %2165 = vmatprep.subr.mxu0 0.0
        %2166 = vmatpush1.msra.mxu0 0.0
        %2167 = vmatprep.subr.mxu0 0.0
        %2168 = vmatpush1.msra.mxu0 0.0
        %2169 = vmatprep.subr.mxu0 0.0
        %2170 = vmatpush1.msra.mxu0 0.0
        %2171 = vmatprep.subr.mxu0 0.0
        %2172 = vmatpush1.msra.mxu0 0.0
        %2173 = vmatprep.subr.mxu0 0.0
        %2174 = vmatpush1.msra.mxu0 0.0
        %2175 = vmatprep.subr.mxu0 0.0
        %2176 = vmatpush1.msra.mxu0 0.0
        %2177 = vmatprep.subr.mxu0 0.0
        %2178 = vmatpush1.msra.mxu0 0.0
        %2179 = vmatprep.subr.mxu0 0.0
        %2180 = vmatpush1.msra.mxu0 0.0
        %2181 = vmatprep.subr.mxu0 0.0
        %2182 = vmatpush1.msra.mxu0 0.0
        %2183 = vmatprep.subr.mxu0 0.0
        %2184 = vmatpush1.msra.mxu0 0.0
        %2185 = vmatprep.subr.mxu0 0.0
        %2186 = vmatpush1.msra.mxu0 0.0
        %2187 = vmatprep.subr.mxu0 0.0
        %2188 = vmatpush1.msra.mxu0 0.0
        %2189 = vmatprep.subr.mxu0 0.0
        %2190 = vmatpush1.msra.mxu0 0.0
        %2191 = vmatprep.subr.mxu0 0.0
        %2192 = vmatpush1.msra.mxu0 0.0
        %2193 = vmatprep.subr.mxu0 0.0
        %2194 = vmatpush1.msra.mxu0 0.0
        %2195 = vmatprep.subr.mxu0 0.0
        %2196 = vmatpush1.msra.mxu0 0.0
        %2197 = vmatprep.subr.mxu0 0.0
        %2198 = vmatpush1.msra.mxu0 0.0
        %2199 = vmatprep.subr.mxu0 0.0
        %2200 = vmatpush1.msra.mxu0 0.0
        %2201 = vmatprep.subr.mxu0 0.0
        %2202 = vmatpush1.msra.mxu0 0.0
        %2203 = vmatprep.subr.mxu0 0.0
        %2204 = vmatpush1.msra.mxu0 0.0
        %2205 = vmatprep.mubr.f32.mxu0 0.0
        %2206 = vmatmul.mubr.f32.gmra.mrb[0].mxu0 %v2132
        %v2207 = vpop.f32.mrb[0].mxu0
        %v2208 = vadd.f32 %v2123, %v2207
        %v2209 = vpop.f32.mrb[0].mxu0
        %2210 = vmatprep.mubr.f32.mxu0 0.0
        %2211 = vmatmul.mubr.f32.gmra.mrb[0].mxu0 %v2135
        %v2212 = vpop.f32.mrb[0].mxu0
        %v2213 = vadd.f32 %v2128, %v2212
        %v2214 = vpop.f32.mrb[0].mxu0
        %2215 = vdwg.mxu0
        %v2216 = vxor.u32 %v2208, 2147483648
        %v2217 = vxor.u32 %v2213, 2147483648
        %v2218 = vmul.f32 %v2216, 1.442695
        %v2219 = vpow.pop %v2218
        %v2220 = vmul.f32 %v2217, 1.442695
        %v2221 = vpow.pop %v2220
        %v2222 = vadd.f32 %v2219, 1.0
        %v2223 = vadd.f32 %v2221, 1.0
        %v2224 = vrcp.pop %v2222
        %v2225 = vmul.f32 1.0, %v2224
        %v2226 = vrcp.pop %v2223
        %v2227 = vmul.f32 1.0, %v2226
        %v2228 = vld [vmem:[%s3] sm:$0xff]
        %v2230 = vsel %vm998, %v2225, 0
        %v2233 = vsel %vm998, %v2227, 0
        %2235 = vmatprep.subr.mxu0 0.0
        %2236 = vmatpush1.msra.mxu0 %v2228
        %2237 = vmatprep.subr.mxu0 0.0
        %2238 = vmatpush1.msra.mxu0 0.0
        %2239 = vmatprep.subr.mxu0 0.0
        %2240 = vmatpush1.msra.mxu0 0.0
        %2241 = vmatprep.subr.mxu0 0.0
        %2242 = vmatpush1.msra.mxu0 0.0
        %2243 = vmatprep.subr.mxu0 0.0
        %2244 = vmatpush1.msra.mxu0 0.0
        %2245 = vmatprep.subr.mxu0 0.0
        %2246 = vmatpush1.msra.mxu0 0.0
        %2247 = vmatprep.subr.mxu0 0.0
        %2248 = vmatpush1.msra.mxu0 0.0
        %2249 = vmatprep.subr.mxu0 0.0
        %2250 = vmatpush1.msra.mxu0 0.0
        %2251 = vmatprep.subr.mxu0 0.0
        %2252 = vmatpush1.msra.mxu0 0.0
        %2253 = vmatprep.subr.mxu0 0.0
        %2254 = vmatpush1.msra.mxu0 0.0
        %2255 = vmatprep.subr.mxu0 0.0
        %2256 = vmatpush1.msra.mxu0 0.0
        %2257 = vmatprep.subr.mxu0 0.0
        %2258 = vmatpush1.msra.mxu0 0.0
        %2259 = vmatprep.subr.mxu0 0.0
        %2260 = vmatpush1.msra.mxu0 0.0
        %2261 = vmatprep.subr.mxu0 0.0
        %2262 = vmatpush1.msra.mxu0 0.0
        %2263 = vmatprep.subr.mxu0 0.0
        %2264 = vmatpush1.msra.mxu0 0.0
        %2265 = vmatprep.subr.mxu0 0.0
        %2266 = vmatpush1.msra.mxu0 0.0
        %2267 = vmatprep.subr.mxu0 0.0
        %2268 = vmatpush1.msra.mxu0 0.0
        %2269 = vmatprep.subr.mxu0 0.0
        %2270 = vmatpush1.msra.mxu0 0.0
        %2271 = vmatprep.subr.mxu0 0.0
        %2272 = vmatpush1.msra.mxu0 0.0
        %2273 = vmatprep.subr.mxu0 0.0
        %2274 = vmatpush1.msra.mxu0 0.0
        %2275 = vmatprep.subr.mxu0 0.0
        %2276 = vmatpush1.msra.mxu0 0.0
        %2277 = vmatprep.subr.mxu0 0.0
        %2278 = vmatpush1.msra.mxu0 0.0
        %2279 = vmatprep.subr.mxu0 0.0
        %2280 = vmatpush1.msra.mxu0 0.0
        %2281 = vmatprep.subr.mxu0 0.0
        %2282 = vmatpush1.msra.mxu0 0.0
        %2283 = vmatprep.subr.mxu0 0.0
        %2284 = vmatpush1.msra.mxu0 0.0
        %2285 = vmatprep.subr.mxu0 0.0
        %2286 = vmatpush1.msra.mxu0 0.0
        %2287 = vmatprep.subr.mxu0 0.0
        %2288 = vmatpush1.msra.mxu0 0.0
        %2289 = vmatprep.subr.mxu0 0.0
        %2290 = vmatpush1.msra.mxu0 0.0
        %2291 = vmatprep.subr.mxu0 0.0
        %2292 = vmatpush1.msra.mxu0 0.0
        %2293 = vmatprep.subr.mxu0 0.0
        %2294 = vmatpush1.msra.mxu0 0.0
        %2295 = vmatprep.subr.mxu0 0.0
        %2296 = vmatpush1.msra.mxu0 0.0
        %2297 = vmatprep.subr.mxu0 0.0
        %2298 = vmatpush1.msra.mxu0 0.0
        %2299 = vmatprep.mubr.f32.mxu0 0.0
        %2300 = vmatmul.mubr.f32.gmra.mrb[0].mxu0 %v2230
        %v2301 = vpop.f32.mrb[0].mxu0
        %v2302 = vadd.f32 0.0, %v2301
        %v2303 = vpop.f32.mrb[0].mxu0
        %2304 = vmatprep.mubr.f32.mxu0 0.0
        %2305 = vmatmul.mubr.f32.gmra.mrb[0].mxu0 %v2233
        %v2306 = vpop.f32.mrb[0].mxu0
        %v2307 = vadd.f32 0.0, %v2306
        %v2308 = vpop.f32.mrb[0].mxu0
        %2309 = vdwg.mxu0
        %v2312 = vcombine.high %v2302, %v2302
        %v2314 = vunpack.c.l.s4 1966171168
        %v2315 = vunpack.c.0.s8 %v2314
        %v2316 = vlaneseq
        %v2317 = vshrl.u32 %v2316, 7
        %v2318 = vsub.s32 %v2315, %v2317
        %v2319 = vrot.slane %v2302, %v2318
        %v2321 = vunpack.c.l.s4 1966171168
        %v2322 = vunpack.c.0.s8 %v2321
        %v2323 = vlaneseq
        %v2324 = vshrl.u32 %v2323, 7
        %v2325 = vsub.s32 %v2322, %v2324
        %v2326 = vrot.slane %v2312, %v2325
        %v2327 = vcombine.high %v2319, %v2319
        %v2328 = vcombine.high %v2326, %v2326
        %v2330 = vunpack.c.l.s4 1966171168
        %v2331 = vunpack.c.0.s8 %v2330
        %v2332 = vlaneseq
        %v2333 = vshrl.u32 %v2332, 7
        %v2334 = vsub.s32 %v2331, %v2333
        %v2335 = vrot.slane %v2319, %v2334
        %v2337 = vunpack.c.l.s4 1966171168
        %v2338 = vunpack.c.0.s8 %v2337
        %v2339 = vlaneseq
        %v2340 = vshrl.u32 %v2339, 7
        %v2341 = vsub.s32 %v2338, %v2340
        %v2342 = vrot.slane %v2326, %v2341
        %v2344 = vunpack.c.l.s4 1966171168
        %v2345 = vunpack.c.0.s8 %v2344
        %v2346 = vlaneseq
        %v2347 = vshrl.u32 %v2346, 7
        %v2348 = vsub.s32 %v2345, %v2347
        %v2349 = vrot.slane %v2327, %v2348
        %v2351 = vunpack.c.l.s4 1966171168
        %v2352 = vunpack.c.0.s8 %v2351
        %v2353 = vlaneseq
        %v2354 = vshrl.u32 %v2353, 7
        %v2355 = vsub.s32 %v2352, %v2354
        %v2356 = vrot.slane %v2328, %v2355
        %v2357 = vcombine.high %v2335, %v2335
        %v2358 = vcombine.high %v2342, %v2342
        %v2359 = vcombine.high %v2349, %v2349
        %v2360 = vcombine.high %v2356, %v2356
        %v2361 = vcombine.high %v2307, %v2307
        %v2363 = vunpack.c.l.s4 1966171168
        %v2364 = vunpack.c.0.s8 %v2363
        %v2365 = vlaneseq
        %v2366 = vshrl.u32 %v2365, 7
        %v2367 = vsub.s32 %v2364, %v2366
        %v2368 = vrot.slane %v2307, %v2367
        %v2370 = vunpack.c.l.s4 1966171168
        %v2371 = vunpack.c.0.s8 %v2370
        %v2372 = vlaneseq
        %v2373 = vshrl.u32 %v2372, 7
        %v2374 = vsub.s32 %v2371, %v2373
        %v2375 = vrot.slane %v2361, %v2374
        %v2376 = vcombine.high %v2368, %v2368
        %v2377 = vcombine.high %v2375, %v2375
        %v2379 = vunpack.c.l.s4 1966171168
        %v2380 = vunpack.c.0.s8 %v2379
        %v2381 = vlaneseq
        %v2382 = vshrl.u32 %v2381, 7
        %v2383 = vsub.s32 %v2380, %v2382
        %v2384 = vrot.slane %v2368, %v2383
        %v2386 = vunpack.c.l.s4 1966171168
        %v2387 = vunpack.c.0.s8 %v2386
        %v2388 = vlaneseq
        %v2389 = vshrl.u32 %v2388, 7
        %v2390 = vsub.s32 %v2387, %v2389
        %v2391 = vrot.slane %v2375, %v2390
        %v2393 = vunpack.c.l.s4 1966171168
        %v2394 = vunpack.c.0.s8 %v2393
        %v2395 = vlaneseq
        %v2396 = vshrl.u32 %v2395, 7
        %v2397 = vsub.s32 %v2394, %v2396
        %v2398 = vrot.slane %v2376, %v2397
        %v2400 = vunpack.c.l.s4 1966171168
        %v2401 = vunpack.c.0.s8 %v2400
        %v2402 = vlaneseq
        %v2403 = vshrl.u32 %v2402, 7
        %v2404 = vsub.s32 %v2401, %v2403
        %v2405 = vrot.slane %v2377, %v2404
        %v2406 = vcombine.high %v2384, %v2384
        %v2407 = vcombine.high %v2391, %v2391
        %v2408 = vcombine.high %v2398, %v2398
        %v2409 = vcombine.high %v2405, %v2405
        %v2410 = vlaneseq
        %v2411 = vshrl.u32 %v2410, 7
        %v2412 = vsub.s32 0, %v2411
        %v2413 = vrot.slane %v2335, %v2412
        %v2414 = vlaneseq
        %v2415 = vshrl.u32 %v2414, 7
        %v2416 = vsub.s32 0, %v2415
        %v2417 = vrot.slane %v2349, %v2416
        %v2418 = vlaneseq
        %v2419 = vshrl.u32 %v2418, 7
        %v2420 = vsub.s32 0, %v2419
        %v2421 = vrot.slane %v2357, %v2420
        %v2422 = vlaneseq
        %v2423 = vshrl.u32 %v2422, 7
        %v2424 = vsub.s32 0, %v2423
        %v2425 = vrot.slane %v2359, %v2424
        %v2426 = vlaneseq
        %v2427 = vshrl.u32 %v2426, 7
        %v2428 = vsub.s32 0, %v2427
        %v2429 = vrot.slane %v2342, %v2428
        %v2430 = vlaneseq
        %v2431 = vshrl.u32 %v2430, 7
        %v2432 = vsub.s32 0, %v2431
        %v2433 = vrot.slane %v2356, %v2432
        %v2434 = vlaneseq
        %v2435 = vshrl.u32 %v2434, 7
        %v2436 = vsub.s32 0, %v2435
        %v2437 = vrot.slane %v2358, %v2436
        %v2438 = vlaneseq
        %v2439 = vshrl.u32 %v2438, 7
        %v2440 = vsub.s32 0, %v2439
        %v2441 = vrot.slane %v2360, %v2440
        %v2442 = vlaneseq
        %v2443 = vshrl.u32 %v2442, 7
        %v2444 = vsub.s32 0, %v2443
        %v2445 = vrot.slane %v2384, %v2444
        %v2446 = vlaneseq
        %v2447 = vshrl.u32 %v2446, 7
        %v2448 = vsub.s32 0, %v2447
        %v2449 = vrot.slane %v2398, %v2448
        %v2450 = vlaneseq
        %v2451 = vshrl.u32 %v2450, 7
        %v2452 = vsub.s32 0, %v2451
        %v2453 = vrot.slane %v2406, %v2452
        %v2454 = vlaneseq
        %v2455 = vshrl.u32 %v2454, 7
        %v2456 = vsub.s32 0, %v2455
        %v2457 = vrot.slane %v2408, %v2456
        %v2458 = vlaneseq
        %v2459 = vshrl.u32 %v2458, 7
        %v2460 = vsub.s32 0, %v2459
        %v2461 = vrot.slane %v2391, %v2460
        %v2462 = vlaneseq
        %v2463 = vshrl.u32 %v2462, 7
        %v2464 = vsub.s32 0, %v2463
        %v2465 = vrot.slane %v2405, %v2464
        %v2466 = vlaneseq
        %v2467 = vshrl.u32 %v2466, 7
        %v2468 = vsub.s32 0, %v2467
        %v2469 = vrot.slane %v2407, %v2468
        %v2470 = vlaneseq
        %v2471 = vshrl.u32 %v2470, 7
        %v2472 = vsub.s32 0, %v2471
        %v2473 = vrot.slane %v2409, %v2472
        %v2490 = vmul.f32 %v327, %v2413
        %v2491 = vmul.f32 %v328, %v2413
        %v2492 = vmul.f32 %v332, %v2417
        %v2493 = vmul.f32 %v333, %v2417
        %v2494 = vmul.f32 %v337, %v2421
        %v2495 = vmul.f32 %v338, %v2421
        %v2496 = vmul.f32 %v342, %v2425
        %v2497 = vmul.f32 %v343, %v2425
        %v2498 = vmul.f32 %v347, %v2429
        %v2499 = vmul.f32 %v348, %v2429
        %v2500 = vmul.f32 %v352, %v2433
        %v2501 = vmul.f32 %v353, %v2433
        %v2502 = vmul.f32 %v357, %v2437
        %v2503 = vmul.f32 %v358, %v2437
        %v2504 = vmul.f32 %v362, %v2441
        %v2505 = vmul.f32 %v363, %v2441
        %v2506 = vmul.f32 %v367, %v2445
        %v2507 = vmul.f32 %v368, %v2445
        %v2508 = vmul.f32 %v372, %v2449
        %v2509 = vmul.f32 %v373, %v2449
        %v2510 = vmul.f32 %v377, %v2453
        %v2511 = vmul.f32 %v378, %v2453
        %v2512 = vmul.f32 %v382, %v2457
        %v2513 = vmul.f32 %v383, %v2457
        %v2514 = vmul.f32 %v387, %v2461
        %v2515 = vmul.f32 %v388, %v2461
        %v2516 = vmul.f32 %v392, %v2465
        %v2517 = vmul.f32 %v393, %v2465
        %v2518 = vmul.f32 %v397, %v2469
        %v2519 = vmul.f32 %v398, %v2469
        %v2520 = vmul.f32 %v402, %v2473
        %v2521 = vmul.f32 %v403, %v2473
        %2522 = vst [vmem:[%s324] sm:$0xff] %v2490
        %2523 = vst [vmem:[%s324 + $0x8] sm:$0xff] %v2491
        %2524 = vst [vmem:[%s324 + $0x28] sm:$0xff] %v2492
        %2525 = vst [vmem:[%s324 + $0x30] sm:$0xff] %v2493
        %2526 = vst [vmem:[%s324 + $0x50] sm:$0xff] %v2494
        %2527 = vst [vmem:[%s324 + $0x58] sm:$0xff] %v2495
        %2528 = vst [vmem:[%s324 + $0x78] sm:$0xff] %v2496
        %2529 = vst [vmem:[%s324 + $0x80] sm:$0xff] %v2497
        %2530 = vst [vmem:[%s324 + $0xa0] sm:$0xff] %v2498
        %2531 = vst [vmem:[%s324 + $0xa8] sm:$0xff] %v2499
        %2532 = vst [vmem:[%s324 + $0xc8] sm:$0xff] %v2500
        %2533 = vst [vmem:[%s324 + $0xd0] sm:$0xff] %v2501
        %2534 = vst [vmem:[%s324 + $0xf0] sm:$0xff] %v2502
        %2535 = vst [vmem:[%s324 + $0xf8] sm:$0xff] %v2503
        %2536 = vst [vmem:[%s324 + $0x118] sm:$0xff] %v2504
        %2537 = vst [vmem:[%s324 + $0x120] sm:$0xff] %v2505
        %2538 = vst [vmem:[%s324 + $0x140] sm:$0xff] %v2506
        %2539 = vst [vmem:[%s324 + $0x148] sm:$0xff] %v2507
        %2540 = vst [vmem:[%s324 + $0x168] sm:$0xff] %v2508
        %2541 = vst [vmem:[%s324 + $0x170] sm:$0xff] %v2509
        %2542 = vst [vmem:[%s324 + $0x190] sm:$0xff] %v2510
        %2543 = vst [vmem:[%s324 + $0x198] sm:$0xff] %v2511
        %2544 = vst [vmem:[%s324 + $0x1b8] sm:$0xff] %v2512
        %2545 = vst [vmem:[%s324 + $0x1c0] sm:$0xff] %v2513
        %2546 = vst [vmem:[%s324 + $0x1e0] sm:$0xff] %v2514
        %2547 = vst [vmem:[%s324 + $0x1e8] sm:$0xff] %v2515
        %2548 = vst [vmem:[%s324 + $0x208] sm:$0xff] %v2516
        %2549 = vst [vmem:[%s324 + $0x210] sm:$0xff] %v2517
        %2550 = vst [vmem:[%s324 + $0x230] sm:$0xff] %v2518
        %2551 = vst [vmem:[%s324 + $0x238] sm:$0xff] %v2519
        %2552 = vst [vmem:[%s324 + $0x258] sm:$0xff] %v2520
        %2553 = vst [vmem:[%s324 + $0x260] sm:$0xff] %v2521
        %2554 = vrot.lane.b32.xlu0 %v2225, 120
        %v2555 = vpop.permute.xlu0 %2554
        %2556 = vrot.lane.b32.xlu0 %v2227, 120
        %v2557 = vpop.permute.xlu0 %2556
        %v2558 = vsel %vm998, %v2555, 0
        %v2560 = vsel %vm998, %v2557, 0
        %2562 = vmatprep.subr.mxu0 0.0
        %2563 = vmatpush1.msra.mxu0 %v2228
        %2564 = vmatprep.subr.mxu0 0.0
        %2565 = vmatpush1.msra.mxu0 0.0
        %2566 = vmatprep.subr.mxu0 0.0
        %2567 = vmatpush1.msra.mxu0 0.0
        %2568 = vmatprep.subr.mxu0 0.0
        %2569 = vmatpush1.msra.mxu0 0.0
        %2570 = vmatprep.subr.mxu0 0.0
        %2571 = vmatpush1.msra.mxu0 0.0
        %2572 = vmatprep.subr.mxu0 0.0
        %2573 = vmatpush1.msra.mxu0 0.0
        %2574 = vmatprep.subr.mxu0 0.0
        %2575 = vmatpush1.msra.mxu0 0.0
        %2576 = vmatprep.subr.mxu0 0.0
        %2577 = vmatpush1.msra.mxu0 0.0
        %2578 = vmatprep.subr.mxu0 0.0
        %2579 = vmatpush1.msra.mxu0 0.0
        %2580 = vmatprep.subr.mxu0 0.0
        %2581 = vmatpush1.msra.mxu0 0.0
        %2582 = vmatprep.subr.mxu0 0.0
        %2583 = vmatpush1.msra.mxu0 0.0
        %2584 = vmatprep.subr.mxu0 0.0
        %2585 = vmatpush1.msra.mxu0 0.0
        %2586 = vmatprep.subr.mxu0 0.0
        %2587 = vmatpush1.msra.mxu0 0.0
        %2588 = vmatprep.subr.mxu0 0.0
        %2589 = vmatpush1.msra.mxu0 0.0
        %2590 = vmatprep.subr.mxu0 0.0
        %2591 = vmatpush1.msra.mxu0 0.0
        %2592 = vmatprep.subr.mxu0 0.0
        %2593 = vmatpush1.msra.mxu0 0.0
        %2594 = vmatprep.subr.mxu0 0.0
        %2595 = vmatpush1.msra.mxu0 0.0
        %2596 = vmatprep.subr.mxu0 0.0
        %2597 = vmatpush1.msra.mxu0 0.0
        %2598 = vmatprep.subr.mxu0 0.0
        %2599 = vmatpush1.msra.mxu0 0.0
        %2600 = vmatprep.subr.mxu0 0.0
        %2601 = vmatpush1.msra.mxu0 0.0
        %2602 = vmatprep.subr.mxu0 0.0
        %2603 = vmatpush1.msra.mxu0 0.0
        %2604 = vmatprep.subr.mxu0 0.0
        %2605 = vmatpush1.msra.mxu0 0.0
        %2606 = vmatprep.subr.mxu0 0.0
        %2607 = vmatpush1.msra.mxu0 0.0
        %2608 = vmatprep.subr.mxu0 0.0
        %2609 = vmatpush1.msra.mxu0 0.0
        %2610 = vmatprep.subr.mxu0 0.0
        %2611 = vmatpush1.msra.mxu0 0.0
        %2612 = vmatprep.subr.mxu0 0.0
        %2613 = vmatpush1.msra.mxu0 0.0
        %2614 = vmatprep.subr.mxu0 0.0
        %2615 = vmatpush1.msra.mxu0 0.0
        %2616 = vmatprep.subr.mxu0 0.0
        %2617 = vmatpush1.msra.mxu0 0.0
        %2618 = vmatprep.subr.mxu0 0.0
        %2619 = vmatpush1.msra.mxu0 0.0
        %2620 = vmatprep.subr.mxu0 0.0
        %2621 = vmatpush1.msra.mxu0 0.0
        %2622 = vmatprep.subr.mxu0 0.0
        %2623 = vmatpush1.msra.mxu0 0.0
        %2624 = vmatprep.subr.mxu0 0.0
        %2625 = vmatpush1.msra.mxu0 0.0
        %2626 = vmatprep.mubr.f32.mxu0 0.0
        %2627 = vmatmul.mubr.f32.gmra.mrb[0].mxu0 %v2558
        %v2628 = vpop.f32.mrb[0].mxu0
        %v2629 = vadd.f32 0.0, %v2628
        %v2630 = vpop.f32.mrb[0].mxu0
        %2631 = vmatprep.mubr.f32.mxu0 0.0
        %2632 = vmatmul.mubr.f32.gmra.mrb[0].mxu0 %v2560
        %v2633 = vpop.f32.mrb[0].mxu0
        %v2634 = vadd.f32 0.0, %v2633
        %v2635 = vpop.f32.mrb[0].mxu0
        %2636 = vdwg.mxu0
        %v2639 = vcombine.high %v2629, %v2629
        %v2641 = vunpack.c.l.s4 1966171168
        %v2642 = vunpack.c.0.s8 %v2641
        %v2643 = vlaneseq
        %v2644 = vshrl.u32 %v2643, 7
        %v2645 = vsub.s32 %v2642, %v2644
        %v2646 = vrot.slane %v2629, %v2645
        %v2648 = vunpack.c.l.s4 1966171168
        %v2649 = vunpack.c.0.s8 %v2648
        %v2650 = vlaneseq
        %v2651 = vshrl.u32 %v2650, 7
        %v2652 = vsub.s32 %v2649, %v2651
        %v2653 = vrot.slane %v2639, %v2652
        %v2654 = vcombine.high %v2646, %v2646
        %v2655 = vcombine.high %v2653, %v2653
        %v2657 = vunpack.c.l.s4 1966171168
        %v2658 = vunpack.c.0.s8 %v2657
        %v2659 = vlaneseq
        %v2660 = vshrl.u32 %v2659, 7
        %v2661 = vsub.s32 %v2658, %v2660
        %v2662 = vrot.slane %v2646, %v2661
        %v2664 = vunpack.c.l.s4 1966171168
        %v2665 = vunpack.c.0.s8 %v2664
        %v2666 = vlaneseq
        %v2667 = vshrl.u32 %v2666, 7
        %v2668 = vsub.s32 %v2665, %v2667
        %v2669 = vrot.slane %v2653, %v2668
        %v2671 = vunpack.c.l.s4 1966171168
        %v2672 = vunpack.c.0.s8 %v2671
        %v2673 = vlaneseq
        %v2674 = vshrl.u32 %v2673, 7
        %v2675 = vsub.s32 %v2672, %v2674
        %v2676 = vrot.slane %v2654, %v2675
        %v2678 = vunpack.c.l.s4 1966171168
        %v2679 = vunpack.c.0.s8 %v2678
        %v2680 = vlaneseq
        %v2681 = vshrl.u32 %v2680, 7
        %v2682 = vsub.s32 %v2679, %v2681
        %v2683 = vrot.slane %v2655, %v2682
        %v2684 = vcombine.high %v2662, %v2662
        %v2685 = vcombine.high %v2669, %v2669
        %v2686 = vcombine.high %v2676, %v2676
        %v2687 = vcombine.high %v2683, %v2683
        %v2688 = vcombine.high %v2634, %v2634
        %v2690 = vunpack.c.l.s4 1966171168
        %v2691 = vunpack.c.0.s8 %v2690
        %v2692 = vlaneseq
        %v2693 = vshrl.u32 %v2692, 7
        %v2694 = vsub.s32 %v2691, %v2693
        %v2695 = vrot.slane %v2634, %v2694
        %v2697 = vunpack.c.l.s4 1966171168
        %v2698 = vunpack.c.0.s8 %v2697
        %v2699 = vlaneseq
        %v2700 = vshrl.u32 %v2699, 7
        %v2701 = vsub.s32 %v2698, %v2700
        %v2702 = vrot.slane %v2688, %v2701
        %v2703 = vcombine.high %v2695, %v2695
        %v2704 = vcombine.high %v2702, %v2702
        %v2706 = vunpack.c.l.s4 1966171168
        %v2707 = vunpack.c.0.s8 %v2706
        %v2708 = vlaneseq
        %v2709 = vshrl.u32 %v2708, 7
        %v2710 = vsub.s32 %v2707, %v2709
        %v2711 = vrot.slane %v2695, %v2710
        %v2713 = vunpack.c.l.s4 1966171168
        %v2714 = vunpack.c.0.s8 %v2713
        %v2715 = vlaneseq
        %v2716 = vshrl.u32 %v2715, 7
        %v2717 = vsub.s32 %v2714, %v2716
        %v2718 = vrot.slane %v2702, %v2717
        %v2720 = vunpack.c.l.s4 1966171168
        %v2721 = vunpack.c.0.s8 %v2720
        %v2722 = vlaneseq
        %v2723 = vshrl.u32 %v2722, 7
        %v2724 = vsub.s32 %v2721, %v2723
        %v2725 = vrot.slane %v2703, %v2724
        %v2727 = vunpack.c.l.s4 1966171168
        %v2728 = vunpack.c.0.s8 %v2727
        %v2729 = vlaneseq
        %v2730 = vshrl.u32 %v2729, 7
        %v2731 = vsub.s32 %v2728, %v2730
        %v2732 = vrot.slane %v2704, %v2731
        %v2733 = vcombine.high %v2711, %v2711
        %v2734 = vcombine.high %v2718, %v2718
        %v2735 = vcombine.high %v2725, %v2725
        %v2736 = vcombine.high %v2732, %v2732
        %v2737 = vlaneseq
        %v2738 = vshrl.u32 %v2737, 7
        %v2739 = vsub.s32 0, %v2738
        %v2740 = vrot.slane %v2662, %v2739
        %v2741 = vlaneseq
        %v2742 = vshrl.u32 %v2741, 7
        %v2743 = vsub.s32 0, %v2742
        %v2744 = vrot.slane %v2676, %v2743
        %v2745 = vlaneseq
        %v2746 = vshrl.u32 %v2745, 7
        %v2747 = vsub.s32 0, %v2746
        %v2748 = vrot.slane %v2684, %v2747
        %v2749 = vlaneseq
        %v2750 = vshrl.u32 %v2749, 7
        %v2751 = vsub.s32 0, %v2750
        %v2752 = vrot.slane %v2686, %v2751
        %v2753 = vlaneseq
        %v2754 = vshrl.u32 %v2753, 7
        %v2755 = vsub.s32 0, %v2754
        %v2756 = vrot.slane %v2669, %v2755
        %v2757 = vlaneseq
        %v2758 = vshrl.u32 %v2757, 7
        %v2759 = vsub.s32 0, %v2758
        %v2760 = vrot.slane %v2683, %v2759
        %v2761 = vlaneseq
        %v2762 = vshrl.u32 %v2761, 7
        %v2763 = vsub.s32 0, %v2762
        %v2764 = vrot.slane %v2685, %v2763
        %v2765 = vlaneseq
        %v2766 = vshrl.u32 %v2765, 7
        %v2767 = vsub.s32 0, %v2766
        %v2768 = vrot.slane %v2687, %v2767
        %v2769 = vlaneseq
        %v2770 = vshrl.u32 %v2769, 7
        %v2771 = vsub.s32 0, %v2770
        %v2772 = vrot.slane %v2711, %v2771
        %v2773 = vlaneseq
        %v2774 = vshrl.u32 %v2773, 7
        %v2775 = vsub.s32 0, %v2774
        %v2776 = vrot.slane %v2725, %v2775
        %v2777 = vlaneseq
        %v2778 = vshrl.u32 %v2777, 7
        %v2779 = vsub.s32 0, %v2778
        %v2780 = vrot.slane %v2733, %v2779
        %v2781 = vlaneseq
        %v2782 = vshrl.u32 %v2781, 7
        %v2783 = vsub.s32 0, %v2782
        %v2784 = vrot.slane %v2735, %v2783
        %v2785 = vlaneseq
        %v2786 = vshrl.u32 %v2785, 7
        %v2787 = vsub.s32 0, %v2786
        %v2788 = vrot.slane %v2718, %v2787
        %v2789 = vlaneseq
        %v2790 = vshrl.u32 %v2789, 7
        %v2791 = vsub.s32 0, %v2790
        %v2792 = vrot.slane %v2732, %v2791
        %v2793 = vlaneseq
        %v2794 = vshrl.u32 %v2793, 7
        %v2795 = vsub.s32 0, %v2794
        %v2796 = vrot.slane %v2734, %v2795
        %v2797 = vlaneseq
        %v2798 = vshrl.u32 %v2797, 7
        %v2799 = vsub.s32 0, %v2798
        %v2800 = vrot.slane %v2736, %v2799
        %v2817 = vmul.f32 %v329, %v2740
        %v2818 = vmul.f32 %v330, %v2740
        %v2819 = vmul.f32 %v334, %v2744
        %v2820 = vmul.f32 %v335, %v2744
        %v2821 = vmul.f32 %v339, %v2748
        %v2822 = vmul.f32 %v340, %v2748
        %v2823 = vmul.f32 %v344, %v2752
        %v2824 = vmul.f32 %v345, %v2752
        %v2825 = vmul.f32 %v349, %v2756
        %v2826 = vmul.f32 %v350, %v2756
        %v2827 = vmul.f32 %v354, %v2760
        %v2828 = vmul.f32 %v355, %v2760
        %v2829 = vmul.f32 %v359, %v2764
        %v2830 = vmul.f32 %v360, %v2764
        %v2831 = vmul.f32 %v364, %v2768
        %v2832 = vmul.f32 %v365, %v2768
        %v2833 = vmul.f32 %v369, %v2772
        %v2834 = vmul.f32 %v370, %v2772
        %v2835 = vmul.f32 %v374, %v2776
        %v2836 = vmul.f32 %v375, %v2776
        %v2837 = vmul.f32 %v379, %v2780
        %v2838 = vmul.f32 %v380, %v2780
        %v2839 = vmul.f32 %v384, %v2784
        %v2840 = vmul.f32 %v385, %v2784
        %v2841 = vmul.f32 %v389, %v2788
        %v2842 = vmul.f32 %v390, %v2788
        %v2843 = vmul.f32 %v394, %v2792
        %v2844 = vmul.f32 %v395, %v2792
        %v2845 = vmul.f32 %v399, %v2796
        %v2846 = vmul.f32 %v400, %v2796
        %v2847 = vmul.f32 %v404, %v2800
        %v2848 = vmul.f32 %v405, %v2800
        %2849 = vst [vmem:[%s324 + $0x10] sm:$0xff] %v2817
        %2850 = vst [vmem:[%s324 + $0x18] sm:$0xff] %v2818
        %2851 = vst [vmem:[%s324 + $0x38] sm:$0xff] %v2819
        %2852 = vst [vmem:[%s324 + $0x40] sm:$0xff] %v2820
        %2853 = vst [vmem:[%s324 + $0x60] sm:$0xff] %v2821
        %2854 = vst [vmem:[%s324 + $0x68] sm:$0xff] %v2822
        %2855 = vst [vmem:[%s324 + $0x88] sm:$0xff] %v2823
        %2856 = vst [vmem:[%s324 + $0x90] sm:$0xff] %v2824
        %2857 = vst [vmem:[%s324 + $0xb0] sm:$0xff] %v2825
        %2858 = vst [vmem:[%s324 + $0xb8] sm:$0xff] %v2826
        %2859 = vst [vmem:[%s324 + $0xd8] sm:$0xff] %v2827
        %2860 = vst [vmem:[%s324 + $0xe0] sm:$0xff] %v2828
        %2861 = vst [vmem:[%s324 + $0x100] sm:$0xff] %v2829
        %2862 = vst [vmem:[%s324 + $0x108] sm:$0xff] %v2830
        %2863 = vst [vmem:[%s324 + $0x128] sm:$0xff] %v2831
        %2864 = vst [vmem:[%s324 + $0x130] sm:$0xff] %v2832
        %2865 = vst [vmem:[%s324 + $0x150] sm:$0xff] %v2833
        %2866 = vst [vmem:[%s324 + $0x158] sm:$0xff] %v2834
        %2867 = vst [vmem:[%s324 + $0x178] sm:$0xff] %v2835
        %2868 = vst [vmem:[%s324 + $0x180] sm:$0xff] %v2836
        %2869 = vst [vmem:[%s324 + $0x1a0] sm:$0xff] %v2837
        %2870 = vst [vmem:[%s324 + $0x1a8] sm:$0xff] %v2838
        %2871 = vst [vmem:[%s324 + $0x1c8] sm:$0xff] %v2839
        %2872 = vst [vmem:[%s324 + $0x1d0] sm:$0xff] %v2840
        %2873 = vst [vmem:[%s324 + $0x1f0] sm:$0xff] %v2841
        %2874 = vst [vmem:[%s324 + $0x1f8] sm:$0xff] %v2842
        %2875 = vst [vmem:[%s324 + $0x218] sm:$0xff] %v2843
        %2876 = vst [vmem:[%s324 + $0x220] sm:$0xff] %v2844
        %2877 = vst [vmem:[%s324 + $0x240] sm:$0xff] %v2845
        %2878 = vst [vmem:[%s324 + $0x248] sm:$0xff] %v2846
        %2879 = vst [vmem:[%s324 + $0x268] sm:$0xff] %v2847
        %2880 = vst [vmem:[%s324 + $0x270] sm:$0xff] %v2848
        %2881 = vrot.lane.b32.xlu0 %v2225, 112
        %v2882 = vpop.permute.xlu0 %2881
        %2883 = vrot.lane.b32.xlu0 %v2227, 112
        %v2884 = vpop.permute.xlu0 %2883
        %v2885 = vsel %vm998, %v2882, 0
        %v2887 = vsel %vm998, %v2884, 0
        %2889 = vmatprep.subr.mxu0 0.0
        %2890 = vmatpush1.msra.mxu0 %v2228
        %2891 = vmatprep.subr.mxu0 0.0
        %2892 = vmatpush1.msra.mxu0 0.0
        %2893 = vmatprep.subr.mxu0 0.0
        %2894 = vmatpush1.msra.mxu0 0.0
        %2895 = vmatprep.subr.mxu0 0.0
        %2896 = vmatpush1.msra.mxu0 0.0
        %2897 = vmatprep.subr.mxu0 0.0
        %2898 = vmatpush1.msra.mxu0 0.0
        %2899 = vmatprep.subr.mxu0 0.0
        %2900 = vmatpush1.msra.mxu0 0.0
        %2901 = vmatprep.subr.mxu0 0.0
        %2902 = vmatpush1.msra.mxu0 0.0
        %2903 = vmatprep.subr.mxu0 0.0
        %2904 = vmatpush1.msra.mxu0 0.0
        %2905 = vmatprep.subr.mxu0 0.0
        %2906 = vmatpush1.msra.mxu0 0.0
        %2907 = vmatprep.subr.mxu0 0.0
        %2908 = vmatpush1.msra.mxu0 0.0
        %2909 = vmatprep.subr.mxu0 0.0
        %2910 = vmatpush1.msra.mxu0 0.0
        %2911 = vmatprep.subr.mxu0 0.0
        %2912 = vmatpush1.msra.mxu0 0.0
        %2913 = vmatprep.subr.mxu0 0.0
        %2914 = vmatpush1.msra.mxu0 0.0
        %2915 = vmatprep.subr.mxu0 0.0
        %2916 = vmatpush1.msra.mxu0 0.0
        %2917 = vmatprep.subr.mxu0 0.0
        %2918 = vmatpush1.msra.mxu0 0.0
        %2919 = vmatprep.subr.mxu0 0.0
        %2920 = vmatpush1.msra.mxu0 0.0
        %2921 = vmatprep.subr.mxu0 0.0
        %2922 = vmatpush1.msra.mxu0 0.0
        %2923 = vmatprep.subr.mxu0 0.0
        %2924 = vmatpush1.msra.mxu0 0.0
        %2925 = vmatprep.subr.mxu0 0.0
        %2926 = vmatpush1.msra.mxu0 0.0
        %2927 = vmatprep.subr.mxu0 0.0
        %2928 = vmatpush1.msra.mxu0 0.0
        %2929 = vmatprep.subr.mxu0 0.0
        %2930 = vmatpush1.msra.mxu0 0.0
        %2931 = vmatprep.subr.mxu0 0.0
        %2932 = vmatpush1.msra.mxu0 0.0
        %2933 = vmatprep.subr.mxu0 0.0
        %2934 = vmatpush1.msra.mxu0 0.0
        %2935 = vmatprep.subr.mxu0 0.0
        %2936 = vmatpush1.msra.mxu0 0.0
        %2937 = vmatprep.subr.mxu0 0.0
        %2938 = vmatpush1.msra.mxu0 0.0
        %2939 = vmatprep.subr.mxu0 0.0
        %2940 = vmatpush1.msra.mxu0 0.0
        %2941 = vmatprep.subr.mxu0 0.0
        %2942 = vmatpush1.msra.mxu0 0.0
        %2943 = vmatprep.subr.mxu0 0.0
        %2944 = vmatpush1.msra.mxu0 0.0
        %2945 = vmatprep.subr.mxu0 0.0
        %2946 = vmatpush1.msra.mxu0 0.0
        %2947 = vmatprep.subr.mxu0 0.0
        %2948 = vmatpush1.msra.mxu0 0.0
        %2949 = vmatprep.subr.mxu0 0.0
        %2950 = vmatpush1.msra.mxu0 0.0
        %2951 = vmatprep.subr.mxu0 0.0
        %2952 = vmatpush1.msra.mxu0 0.0
        %2953 = vmatprep.mubr.f32.mxu0 0.0
        %2954 = vmatmul.mubr.f32.gmra.mrb[0].mxu0 %v2885
        %v2955 = vpop.f32.mrb[0].mxu0
        %v2956 = vadd.f32 0.0, %v2955
        %v2957 = vpop.f32.mrb[0].mxu0
        %2958 = vmatprep.mubr.f32.mxu0 0.0
        %2959 = vmatmul.mubr.f32.gmra.mrb[0].mxu0 %v2887
        %v2960 = vpop.f32.mrb[0].mxu0
        %v2961 = vadd.f32 0.0, %v2960
        %v2962 = vpop.f32.mrb[0].mxu0
        %2963 = vdwg.mxu0
        %v2966 = vcombine.high %v2956, %v2956
        %v2968 = vunpack.c.l.s4 1966171168
        %v2969 = vunpack.c.0.s8 %v2968
        %v2970 = vlaneseq
        %v2971 = vshrl.u32 %v2970, 7
        %v2972 = vsub.s32 %v2969, %v2971
        %v2973 = vrot.slane %v2956, %v2972
        %v2975 = vunpack.c.l.s4 1966171168
        %v2976 = vunpack.c.0.s8 %v2975
        %v2977 = vlaneseq
        %v2978 = vshrl.u32 %v2977, 7
        %v2979 = vsub.s32 %v2976, %v2978
        %v2980 = vrot.slane %v2966, %v2979
        %v2981 = vcombine.high %v2973, %v2973
        %v2982 = vcombine.high %v2980, %v2980
        %v2984 = vunpack.c.l.s4 1966171168
        %v2985 = vunpack.c.0.s8 %v2984
        %v2986 = vlaneseq
        %v2987 = vshrl.u32 %v2986, 7
        %v2988 = vsub.s32 %v2985, %v2987
        %v2989 = vrot.slane %v2973, %v2988
        %v2991 = vunpack.c.l.s4 1966171168
        %v2992 = vunpack.c.0.s8 %v2991
        %v2993 = vlaneseq
        %v2994 = vshrl.u32 %v2993, 7
        %v2995 = vsub.s32 %v2992, %v2994
        %v2996 = vrot.slane %v2980, %v2995
        %v2998 = vunpack.c.l.s4 1966171168
        %v2999 = vunpack.c.0.s8 %v2998
        %v3000 = vlaneseq
        %v3001 = vshrl.u32 %v3000, 7
        %v3002 = vsub.s32 %v2999, %v3001
        %v3003 = vrot.slane %v2981, %v3002
        %v3005 = vunpack.c.l.s4 1966171168
        %v3006 = vunpack.c.0.s8 %v3005
        %v3007 = vlaneseq
        %v3008 = vshrl.u32 %v3007, 7
        %v3009 = vsub.s32 %v3006, %v3008
        %v3010 = vrot.slane %v2982, %v3009
        %v3011 = vcombine.high %v2989, %v2989
        %v3012 = vcombine.high %v2996, %v2996
        %v3013 = vcombine.high %v3003, %v3003
        %v3014 = vcombine.high %v3010, %v3010
        %v3015 = vcombine.high %v2961, %v2961
        %v3017 = vunpack.c.l.s4 1966171168
        %v3018 = vunpack.c.0.s8 %v3017
        %v3019 = vlaneseq
        %v3020 = vshrl.u32 %v3019, 7
        %v3021 = vsub.s32 %v3018, %v3020
        %v3022 = vrot.slane %v2961, %v3021
        %v3024 = vunpack.c.l.s4 1966171168
        %v3025 = vunpack.c.0.s8 %v3024
        %v3026 = vlaneseq
        %v3027 = vshrl.u32 %v3026, 7
        %v3028 = vsub.s32 %v3025, %v3027
        %v3029 = vrot.slane %v3015, %v3028
        %v3030 = vcombine.high %v3022, %v3022
        %v3031 = vcombine.high %v3029, %v3029
        %v3033 = vunpack.c.l.s4 1966171168
        %v3034 = vunpack.c.0.s8 %v3033
        %v3035 = vlaneseq
        %v3036 = vshrl.u32 %v3035, 7
        %v3037 = vsub.s32 %v3034, %v3036
        %v3038 = vrot.slane %v3022, %v3037
        %v3040 = vunpack.c.l.s4 1966171168
        %v3041 = vunpack.c.0.s8 %v3040
        %v3042 = vlaneseq
        %v3043 = vshrl.u32 %v3042, 7
        %v3044 = vsub.s32 %v3041, %v3043
        %v3045 = vrot.slane %v3029, %v3044
        %v3047 = vunpack.c.l.s4 1966171168
        %v3048 = vunpack.c.0.s8 %v3047
        %v3049 = vlaneseq
        %v3050 = vshrl.u32 %v3049, 7
        %v3051 = vsub.s32 %v3048, %v3050
        %v3052 = vrot.slane %v3030, %v3051
        %v3054 = vunpack.c.l.s4 1966171168
        %v3055 = vunpack.c.0.s8 %v3054
        %v3056 = vlaneseq
        %v3057 = vshrl.u32 %v3056, 7
        %v3058 = vsub.s32 %v3055, %v3057
        %v3059 = vrot.slane %v3031, %v3058
        %v3060 = vcombine.high %v3038, %v3038
        %v3061 = vcombine.high %v3045, %v3045
        %v3062 = vcombine.high %v3052, %v3052
        %v3063 = vcombine.high %v3059, %v3059
        %v3064 = vlaneseq
        %v3065 = vshrl.u32 %v3064, 7
        %v3066 = vsub.s32 0, %v3065
        %v3067 = vrot.slane %v2989, %v3066
        %v3068 = vlaneseq
        %v3069 = vshrl.u32 %v3068, 7
        %v3070 = vsub.s32 0, %v3069
        %v3071 = vrot.slane %v3003, %v3070
        %v3072 = vlaneseq
        %v3073 = vshrl.u32 %v3072, 7
        %v3074 = vsub.s32 0, %v3073
        %v3075 = vrot.slane %v3011, %v3074
        %v3076 = vlaneseq
        %v3077 = vshrl.u32 %v3076, 7
        %v3078 = vsub.s32 0, %v3077
        %v3079 = vrot.slane %v3013, %v3078
        %v3080 = vlaneseq
        %v3081 = vshrl.u32 %v3080, 7
        %v3082 = vsub.s32 0, %v3081
        %v3083 = vrot.slane %v2996, %v3082
        %v3084 = vlaneseq
        %v3085 = vshrl.u32 %v3084, 7
        %v3086 = vsub.s32 0, %v3085
        %v3087 = vrot.slane %v3010, %v3086
        %v3088 = vlaneseq
        %v3089 = vshrl.u32 %v3088, 7
        %v3090 = vsub.s32 0, %v3089
        %v3091 = vrot.slane %v3012, %v3090
        %v3092 = vlaneseq
        %v3093 = vshrl.u32 %v3092, 7
        %v3094 = vsub.s32 0, %v3093
        %v3095 = vrot.slane %v3014, %v3094
        %v3096 = vlaneseq
        %v3097 = vshrl.u32 %v3096, 7
        %v3098 = vsub.s32 0, %v3097
        %v3099 = vrot.slane %v3038, %v3098
        %v3100 = vlaneseq
        %v3101 = vshrl.u32 %v3100, 7
        %v3102 = vsub.s32 0, %v3101
        %v3103 = vrot.slane %v3052, %v3102
        %v3104 = vlaneseq
        %v3105 = vshrl.u32 %v3104, 7
        %v3106 = vsub.s32 0, %v3105
        %v3107 = vrot.slane %v3060, %v3106
        %v3108 = vlaneseq
        %v3109 = vshrl.u32 %v3108, 7
        %v3110 = vsub.s32 0, %v3109
        %v3111 = vrot.slane %v3062, %v3110
        %v3112 = vlaneseq
        %v3113 = vshrl.u32 %v3112, 7
        %v3114 = vsub.s32 0, %v3113
        %v3115 = vrot.slane %v3045, %v3114
        %v3116 = vlaneseq
        %v3117 = vshrl.u32 %v3116, 7
        %v3118 = vsub.s32 0, %v3117
        %v3119 = vrot.slane %v3059, %v3118
        %v3120 = vlaneseq
        %v3121 = vshrl.u32 %v3120, 7
        %v3122 = vsub.s32 0, %v3121
        %v3123 = vrot.slane %v3061, %v3122
        %v3124 = vlaneseq
        %v3125 = vshrl.u32 %v3124, 7
        %v3126 = vsub.s32 0, %v3125
        %v3127 = vrot.slane %v3063, %v3126
        %v3144 = vmul.f32 %v331, %v3067
        %v3145 = vmul.f32 %v336, %v3071
        %v3146 = vmul.f32 %v341, %v3075
        %v3147 = vmul.f32 %v346, %v3079
        %v3148 = vmul.f32 %v351, %v3083
        %v3149 = vmul.f32 %v356, %v3087
        %v3150 = vmul.f32 %v361, %v3091
        %v3151 = vmul.f32 %v366, %v3095
        %v3152 = vmul.f32 %v371, %v3099
        %v3153 = vmul.f32 %v376, %v3103
        %v3154 = vmul.f32 %v381, %v3107
        %v3155 = vmul.f32 %v386, %v3111
        %v3156 = vmul.f32 %v391, %v3115
        %v3157 = vmul.f32 %v396, %v3119
        %v3158 = vmul.f32 %v401, %v3123
        %v3159 = vmul.f32 %v406, %v3127
        %3160 = vst [vmem:[%s324 + $0x20] sm:$0xff] %v3144
        %3161 = vst [vmem:[%s324 + $0x48] sm:$0xff] %v3145
        %3162 = vst [vmem:[%s324 + $0x70] sm:$0xff] %v3146
        %3163 = vst [vmem:[%s324 + $0x98] sm:$0xff] %v3147
        %3164 = vst [vmem:[%s324 + $0xc0] sm:$0xff] %v3148
        %3165 = vst [vmem:[%s324 + $0xe8] sm:$0xff] %v3149
        %3166 = vst [vmem:[%s324 + $0x110] sm:$0xff] %v3150
        %3167 = vst [vmem:[%s324 + $0x138] sm:$0xff] %v3151
        %3168 = vst [vmem:[%s324 + $0x160] sm:$0xff] %v3152
        %3169 = vst [vmem:[%s324 + $0x188] sm:$0xff] %v3153
        %3170 = vst [vmem:[%s324 + $0x1b0] sm:$0xff] %v3154
        %3171 = vst [vmem:[%s324 + $0x1d8] sm:$0xff] %v3155
        %3172 = vst [vmem:[%s324 + $0x200] sm:$0xff] %v3156
        %3173 = vst [vmem:[%s324 + $0x228] sm:$0xff] %v3157
        %3174 = vst [vmem:[%s324 + $0x250] sm:$0xff] %v3158
        %3175 = vst [vmem:[%s324 + $0x278] sm:$0xff] %v3159
        %s3176 = sand.u32 %s206, 1
        %s3177 = scalar_lea.sflag [#allocation4], %s3176
        %s3178 = sand.u32 %s206, 1
        %s3179 = smul.addr %s3178, 640
        %s3180 = scalar_lea.vmem [#allocation5], %s3179
        // Predicated region
        $region57: #{tpu_custom_call.1} parent=51 // pred_check
          %p3181 = pneg %p216
        $region58: #{tpu_custom_call.1} parent=51 // pred_check_branch
          %3183 = sbr.rel (%p3181) target = $region60
        $region59: #{tpu_custom_call.1} parent=51 // pred_region
          %s3184 = smul.u32 16, %s25
          %s3186 = ssub.s32 10240, 10240
          %3187 = vsyncadd %s3177, %s3186
          %s3188 = smul.addr %s3184, 5
          %s3189 = smul.addr %s3188, 128
          %s3190 = scalar_lea.hbm %s8, %s3189
          %s3191 = sshll.u32 %s3180, 4
          %s3192 = int_to_ptr.vmem [resolvable:$true] %s3191
          %3197 = dma.vmem_to_hbm [thread:$0]  %s3192, 10240, %s3190, %s3177, 128, 128, 8
        $region60: #{tpu_custom_call.1} parent=51 // pred_fallthru
          _
      $region52: #{tpu_custom_call.1} parent=5 // pred_fallthru
        _
      %p3198 = scmp.le.s32.totalorder 2, %s20
      // Predicated region
      $region61: #{tpu_custom_call.1} parent=5 // pred_check
        %p3199 = pneg %p3198
      $region62: #{tpu_custom_call.1} parent=5 // pred_check_branch
        %3201 = sbr.rel (%p3199) target = $region64
      $region63: #{tpu_custom_call.1} parent=5 // pred_region
        %s3202 = ssub.s32 %s20, 2
        // Predicated region
        $region65: #{tpu_custom_call.1} parent=63 // pred_check
          %p3203 = pneg %p222
        $region66: #{tpu_custom_call.1} parent=63 // pred_check_branch
          %3205 = sbr.rel (%p3203) target = $region68
        $region67: #{tpu_custom_call.1} parent=63 // pred_region
          %s3206 = sand.u32 %s207, 1
          %s3207 = scalar_lea.sflag [#allocation4], %s3206
          %s3208 = sand.u32 %s207, 1
          %s3209 = smul.addr %s3208, 640
          %s3210 = scalar_lea.vmem [#allocation5], %s3209
          %3211 = dma.done %s3207, 10240
        $region68: #{tpu_custom_call.1} parent=63 // pred_fallthru
          _
      $region64: #{tpu_custom_call.1} parent=5 // pred_fallthru
        _
    $region6: #{tpu_custom_call.1} parent=1 // loop_footer
      %s24 = sadd.s32 1, %s20
    $region7: #{tpu_custom_call.1} parent=1 // loop_footer_branch
      %19 = sbr.rel target = $region3
    $region8: #{tpu_custom_call.1} parent=1 // loop_exit
      _
    %3212 = vsyncpa [#allocation3], 1
    %s3213 = scalar_lea.sflag [#allocation3], 1
    %3214 = vsyncpa %s3213, 1
    %3215 = vsyncpa [#allocation4], 1
    %s3216 = scalar_lea.sflag [#allocation4], 1
    %3217 = vsyncpa %s3216, 1

</llo_original>
